<compile_context>
chip_gen: v5e
topology: v5e:2x2
jax: 0.10.0
libtpu: 0.0.40
codegen_flags: <defaults>
</compile_context>

<pallas_src>
import functools

import jax
import jax.numpy as jnp
from jax import lax
from jax.experimental import pallas as pl
from jax.experimental.pallas import tpu as pltpu


def _round_up(v, m):
    return (v + m - 1) // m * m


def _tile(n, big=256):
    """Returns (tile, padded): one 8-rounded tile if small, else `big`-wide tiles."""
    n8 = _round_up(max(n, 1), 8)
    if n8 <= big:
        return n8, n8
    return big, _round_up(n, big)


# -----------------------------------------------------------------------------
# Fused kernel.  Grid = (num_path_tiles,); the axis is "arbitrary" because the
# pooled [Npad, Hp] accumulator lives in the grid-resident output block.
# -----------------------------------------------------------------------------
def _edge_path_conv_kernel(
    xs_ref,    # [L,   Pt, Hp]  bf16   node features gathered along each path
    es_ref,    # [L-1, Pt, Hp]  bf16   edge features (t=0 zeros pad not needed)
    dest_ref,  # [1,   Pt]      int32  scatter destination node id (-1 = pad row)
    xn_ref,    # [Npad, Hp]     f32    node features (residual input)
    wx_ref,    # [Hp, 4Hp]      bf16   w_ih, node-feature half
    we_ref,    # [Hp, 4Hp]      bf16   w_ih, edge-feature half
    whh_ref,   # [Hp, 4Hp]      bf16
    b_ref,     # [1, 4Hp]       f32    b_ih + b_hh
    w1_ref,    # [Hp, H1p]      bf16
    b1_ref,    # [1, H1p]       f32
    w2_ref,    # [H1p, Hp]      bf16
    b2_ref,    # [1, Hp]        f32
    out_ref,   # [Npad, Hp]     f32    pooled accumulator -> final MLP output
    g_sc,      # [L, Pt, 4Hp]   bf16   hoisted gate pre-activations
    h_sc,      # [Pt, Hp]       bf16
    c_sc,      # [Pt, Hp]       f32
    *,
    nc: int,   # node-row chunk used by the scatter and the finalize MLP
):
    L, Pt, Hp = xs_ref.shape
    Npad = out_ref.shape[0]
    num_nc = Npad // nc
    p = pl.program_id(0)

    # ---- pooled accumulator lives directly in the grid-resident output ------
    @pl.when(p == 0)
    def _init():
        out_ref[...] = jnp.zeros_like(out_ref)

    # ---- input projection hoisted out of the recurrence, one timestep at a
    # time, stored straight to bf16 scratch (bias folded once per tile) -------
    for t in range(L):
        g = jnp.dot(xs_ref[t], wx_ref[...], preferred_element_type=jnp.float32)
        if t > 0:
            g = g + jnp.dot(es_ref[t - 1], we_ref[...],
                            preferred_element_type=jnp.float32)
        g_sc[t] = (g + b_ref[...]).astype(g_sc.dtype)

    # ---- LSTM recurrence: only h @ w_hh remains inside the serial loop ------
    h_sc[...] = jnp.zeros_like(h_sc)
    c_sc[...] = jnp.zeros_like(c_sc)

    # TODO(synk): on v6e/v7x, consider pltpu.matmul_push_rhs/acc_lhs to keep
    # w_hh resident in the MXU weight registers across the L serial steps.
    def step(t, carry):
        g = g_sc[t].astype(jnp.float32) + jnp.dot(
            h_sc[...], whh_ref[...], preferred_element_type=jnp.float32)
        # Hp is a multiple of 128 -> every gate slice is lane-aligned.
        i_g = jax.nn.sigmoid(g[:, 0 * Hp:1 * Hp])
        f_g = jax.nn.sigmoid(g[:, 1 * Hp:2 * Hp])
        g_g = jnp.tanh(g[:, 2 * Hp:3 * Hp])
        o_g = jax.nn.sigmoid(g[:, 3 * Hp:4 * Hp])
        c = f_g * c_sc[...] + i_g * g_g
        c_sc[...] = c
        h_sc[...] = (o_g * jnp.tanh(c)).astype(h_sc.dtype)
        return carry

    lax.fori_loop(0, L, step, 0, unroll=True)

    # ---- scatter_add pooling: bf16 one-hot (exact for {0,1}) x bf16 h,
    # f32 accumulation, chunked over node rows --------------------------------
    h_last = h_sc[...]                       # [Pt, Hp]  bf16
    dest = dest_ref[...]                     # [1,  Pt]  int32 (-1 = padded path)

    def scat(i, carry):
        base = pl.multiple_of(i * nc, nc)
        ids = lax.broadcasted_iota(jnp.int32, (nc, Pt), 0) + base
        onehot = (ids == dest).astype(jnp.bfloat16)           # [nc, Pt]
        out_ref[pl.ds(base, nc), :] += jnp.dot(
            onehot, h_last, preferred_element_type=jnp.float32)
        return carry

    lax.fori_loop(0, num_nc, scat, 0)

    # ---- last path tile: residual (bn = Identity) + MLP, chunked over node
    # rows so the [*, H1p] f32 intermediate stays bounded ----------------------
    @pl.when(p == pl.num_programs(0) - 1)
    def _finalize():
        def mlp(i, carry):
            base = pl.multiple_of(i * nc, nc)
            rows = pl.ds(base, nc)
            h_res = xn_ref[rows, :] + out_ref[rows, :]         # f32 [nc, Hp]
            z = jnp.dot(h_res.astype(jnp.bfloat16), w1_ref[...],
                        preferred_element_type=jnp.float32) + b1_ref[...]
            z = jnp.maximum(z, 0.0)
            out_ref[rows, :] = jnp.dot(
                z.astype(jnp.bfloat16), w2_ref[...],
                preferred_element_type=jnp.float32) + b2_ref[...]
            return carry

        lax.fori_loop(0, num_nc, mlp, 0)


# -----------------------------------------------------------------------------
# Wrapper: gather / pad / cast staging in plain JAX, one pallas_call.
# -----------------------------------------------------------------------------
@jax.jit
def edge_path_conv_forward(x, paths, edge_attr, params):
    N, H = x.shape
    P, L = paths.shape
    assert L >= 2 and edge_attr.shape == (P, L - 1, H)

    Hp = _round_up(H, 128)
    H1 = params["w1"].shape[1]                 # = 2H
    H1p = _round_up(H1, 128)
    NC, Npad = _tile(N)
    # TODO(synk): on v5e/v6e (128 MiB VMEM) Pt=512 amortizes per-step overhead
    # for large P; 256 is kept so the same tiling also fits v7x's 64 MiB.
    Pt, Ppad = _tile(P)
    num_p = Ppad // Pt

    f32, bf16 = jnp.float32, jnp.bfloat16

    # ---- activations: cast to bf16 BEFORE gather/pad/transpose (mem-bound
    # staging ops; f32 would double their HBM traffic) -------------------------
    x_bf = jnp.pad(x.astype(bf16), ((0, Npad - N), (0, Hp - H)))          # [Npad,Hp]
    x_seq = jnp.pad(x_bf[paths], ((0, Ppad - P), (0, 0), (0, 0)))         # [Ppad,L,Hp]
    x_seq = jnp.transpose(x_seq, (1, 0, 2))                               # [L,Ppad,Hp]
    e_seq = jnp.pad(edge_attr.astype(bf16),
                    ((0, Ppad - P), (0, 0), (0, Hp - H)))                 # [Ppad,L-1,Hp]
    e_seq = jnp.transpose(e_seq, (1, 0, 2))                               # [L-1,Ppad,Hp]
    dest = jnp.pad(paths[:, -1].astype(jnp.int32), (0, Ppad - P),
                   constant_values=-1).reshape(1, Ppad)                   # [1,Ppad]
    x_res = jnp.pad(x.astype(f32), ((0, Npad - N), (0, Hp - H)))          # [Npad,Hp]

    # ---- parameters: reposition each gate block to a 128-aligned boundary ----
    def pad_gate_w(w):                              # [H, 4H] -> [Hp, 4Hp] bf16
        w = w.reshape(H, 4, H)
        w = jnp.pad(w, ((0, Hp - H), (0, 0), (0, Hp - H)))
        return w.reshape(Hp, 4 * Hp).astype(bf16)

    w_ih = params["w_ih"]                           # [2H, 4H]
    w_ih_x = pad_gate_w(w_ih[:H])                   # node-feature half
    w_ih_e = pad_gate_w(w_ih[H:])                   # edge-feature half
    w_hh_p = pad_gate_w(params["w_hh"])
    b_lstm = jnp.pad(params["b_lstm"].reshape(1, 4, H),
                     ((0, 0), (0, 0), (0, Hp - H))).reshape(1, 4 * Hp).astype(f32)
    w1 = jnp.pad(params["w1"], ((0, Hp - H), (0, H1p - H1))).astype(bf16)
    b1 = jnp.pad(params["b1"], ((0, 0), (0, H1p - H1))).astype(f32)
    w2 = jnp.pad(params["w2"], ((0, H1p - H1), (0, Hp - H))).astype(bf16)
    b2 = jnp.pad(params["b2"], ((0, 0), (0, Hp - H))).astype(f32)

    # Grid-invariant operands: constant index_map -> single-buffer them instead
    # of the default double buffer (frees weight-set + xn worth of VMEM).
    def inv2(shape):
        return pl.BlockSpec(shape, lambda p: (0, 0),
                            pipeline_mode=pl.Buffered(1))

    grid_spec = pltpu.PrefetchScalarGridSpec(
        num_scalar_prefetch=0,
        grid=(num_p,),
        in_specs=[
            pl.BlockSpec((L, Pt, Hp), lambda p: (0, p, 0)),       # x_seq tile
            pl.BlockSpec((L - 1, Pt, Hp), lambda p: (0, p, 0)),   # e_seq tile
            pl.BlockSpec((1, Pt), lambda p: (0, p)),              # dest ids
            inv2((Npad, Hp)),                                     # residual x (f32)
            inv2((Hp, 4 * Hp)),                                   # w_ih node half
            inv2((Hp, 4 * Hp)),                                   # w_ih edge half
            inv2((Hp, 4 * Hp)),                                   # w_hh
            inv2((1, 4 * Hp)),                                    # lstm bias
            inv2((Hp, H1p)),                                      # mlp w1
            inv2((1, H1p)),                                       # mlp b1
            inv2((H1p, Hp)),                                      # mlp w2
            inv2((1, Hp)),                                        # mlp b2
        ],
        out_specs=pl.BlockSpec((Npad, Hp), lambda p: (0, 0)),
        scratch_shapes=[
            pltpu.VMEM((L, Pt, 4 * Hp), jnp.bfloat16),   # gate pre-acts (bf16)
            pltpu.VMEM((Pt, Hp), jnp.bfloat16),          # h
            pltpu.VMEM((Pt, Hp), jnp.float32),           # c
        ],
    )

    out = pl.pallas_call(
        functools.partial(_edge_path_conv_kernel, nc=NC),
        out_shape=jax.ShapeDtypeStruct((Npad, Hp), jnp.float32),
        grid_spec=grid_spec,
        compiler_params=pltpu.CompilerParams(
            # The P axis is a reduction into the resident output accumulator.
            dimension_semantics=("arbitrary",),
            # 48 MiB: headroom under v7x's 64 MiB, well within v5e/v6e's 128.
            vmem_limit_bytes=48 * 1024 * 1024,
        ),
    )(x_seq, e_seq, dest, x_res,
      w_ih_x, w_ih_e, w_hh_p, b_lstm, w1, b1, w2, b2)

    # TODO(synk): for very large N (or to use the 2nd v7x TensorCore), move the
    # residual+MLP tail into its own pallas_call with a ("parallel",) node-tile
    # grid instead of keeping two node-sized buffers VMEM-resident here.
    return out[:N, :H].astype(x.dtype)


# -----------------------------------------------------------------------------
# Pure-JAX f32 reference (for correctness check).
# -----------------------------------------------------------------------------
def reference_forward(x, paths, edge_attr, params):
    N, H = x.shape
    P, L = paths.shape
    ea = jnp.concatenate([jnp.zeros((P, 1, H), jnp.float32), edge_attr], axis=1)
    xc = jnp.concatenate([x[paths], ea], axis=-1)          # [P, L, 2H]
    h = jnp.zeros((P, H), jnp.float32)
    c = jnp.zeros((P, H), jnp.float32)
    for t in range(L):
        g = xc[:, t] @ params["w_ih"] + h @ params["w_hh"] + params["b_lstm"]
        i_g = jax.nn.sigmoid(g[:, :H])
        f_g = jax.nn.sigmoid(g[:, H:2 * H])
        g_g = jnp.tanh(g[:, 2 * H:3 * H])
        o_g = jax.nn.sigmoid(g[:, 3 * H:])
        c = f_g * c + i_g * g_g
        h = o_g * jnp.tanh(c)
    pooled = jnp.zeros((N, H), jnp.float32).at[paths[:, -1]].add(h)
    hh = x + pooled
    z = jnp.maximum(hh @ params["w1"] + params["b1"], 0.0)
    return z @ params["w2"] + params["b2"]


# -----------------------------------------------------------------------------
# Parameter init (shapes implied by the module:
#   rnn = nn.LSTM(2H, H, batch_first=True); mlp = Linear(H,2H)->ReLU->Linear(2H,H))
# Weights stored pre-transposed as [in, out]; gate order i, f, g, o.
# -----------------------------------------------------------------------------
def init_params(key, hidden_dim):
    H = hidden_dim
    H1 = 2 * H
    ks = jax.random.split(key, 8)
    k_lstm = 1.0 / jnp.sqrt(H)
    k_l1 = 1.0 / jnp.sqrt(H)
    k_l2 = 1.0 / jnp.sqrt(H1)
    u = lambda k, shp, bound: jax.random.uniform(
        k, shp, jnp.float32, minval=-bound, maxval=bound)
    return {
        "w_ih": u(ks[0], (2 * H, 4 * H), k_lstm),
        "w_hh": u(ks[1], (H, 4 * H), k_lstm),
        "b_lstm": u(ks[2], (1, 4 * H), k_lstm) + u(ks[3], (1, 4 * H), k_lstm),
        "w1": u(ks[4], (H, H1), k_l1),
        "b1": u(ks[5], (1, H1), k_l1),
        "w2": u(ks[6], (H1, H), k_l2),
        "b2": u(ks[7], (1, H), k_l2),
    }


if __name__ == "__main__":
    N, H, P, L = 16, 32, 8, 5     # nodes, hidden_dim, num paths, path length

    key = jax.random.PRNGKey(0)
    k_x, k_p, k_e, k_w = jax.random.split(key, 4)

    x = jax.random.normal(k_x, (N, H), jnp.float32)
    paths = jax.random.randint(k_p, (P, L), 0, N, jnp.int32)
    edge_attr = jax.random.normal(k_e, (P, L - 1, H), jnp.float32)
    params = init_params(k_w, H)

    out = edge_path_conv_forward(x, paths, edge_attr, params)
    out = jax.block_until_ready(out)

    ref = reference_forward(x, paths, edge_attr, params)
    assert out.shape == (N, H)
    err = float(jnp.max(jnp.abs(out - ref)))
    # Kernel uses bf16 MXU operands / bf16 gate scratch (f32 accumulation), so
    # it deviates from the pure-f32 reference by ~1e-2; 1e-1 still catches any
    # semantic bug (which would be O(1)).
    assert jnp.allclose(out, ref, atol=1e-1, rtol=1e-1), f"mismatch: {err}"

    print("KERNEL_OK")
</pallas_src>

<mosaic_0001>
module attributes {stable_mosaic.version = 11 : i64} {
  func.func @_edge_path_conv_kernel(%arg0: i32, %arg1: memref<5x8x128xbf16, #tpu.memory_space<vmem>>, %arg2: memref<4x8x128xbf16, #tpu.memory_space<vmem>>, %arg3: memref<1x8xi32, #tpu.memory_space<vmem>>, %arg4: memref<16x128xf32, #tpu.memory_space<vmem>>, %arg5: memref<128x512xbf16, #tpu.memory_space<vmem>>, %arg6: memref<128x512xbf16, #tpu.memory_space<vmem>>, %arg7: memref<128x512xbf16, #tpu.memory_space<vmem>>, %arg8: memref<1x512xf32, #tpu.memory_space<vmem>>, %arg9: memref<128x128xbf16, #tpu.memory_space<vmem>>, %arg10: memref<1x128xf32, #tpu.memory_space<vmem>>, %arg11: memref<128x128xbf16, #tpu.memory_space<vmem>>, %arg12: memref<1x128xf32, #tpu.memory_space<vmem>>, %arg13: memref<16x128xf32, #tpu.memory_space<vmem>>, %arg14: memref<5x8x512xbf16, #tpu.memory_space<vmem>>, %arg15: memref<8x128xbf16, #tpu.memory_space<vmem>>, %arg16: memref<8x128xf32, #tpu.memory_space<vmem>>) attributes {dimension_semantics = [#tpu.dimension_semantics<arbitrary>], iteration_bounds = array<i64: 1>, scalar_prefetch = 0 : i64, scratch_operands = 3 : i64, tpu.core_type = #tpu.core_type<tc>, window_params = [{transform_indices = @transform_0, window_bounds = array<i64: 5, 8, 128>}, {transform_indices = @transform_1, window_bounds = array<i64: 4, 8, 128>}, {transform_indices = @transform_2, window_bounds = array<i64: 1, 8>}, {pipeline_mode = #tpu.pipeline_mode<synchronous>, transform_indices = @transform_3, window_bounds = array<i64: 16, 128>}, {pipeline_mode = #tpu.pipeline_mode<synchronous>, transform_indices = @transform_4, window_bounds = array<i64: 128, 512>}, {pipeline_mode = #tpu.pipeline_mode<synchronous>, transform_indices = @transform_5, window_bounds = array<i64: 128, 512>}, {pipeline_mode = #tpu.pipeline_mode<synchronous>, transform_indices = @transform_6, window_bounds = array<i64: 128, 512>}, {pipeline_mode = #tpu.pipeline_mode<synchronous>, transform_indices = @transform_7, window_bounds = array<i64: 1, 512>}, {pipeline_mode = #tpu.pipeline_mode<synchronous>, transform_indices = @transform_8, window_bounds = array<i64: 128, 128>}, {pipeline_mode = #tpu.pipeline_mode<synchronous>, transform_indices = @transform_9, window_bounds = array<i64: 1, 128>}, {pipeline_mode = #tpu.pipeline_mode<synchronous>, transform_indices = @transform_10, window_bounds = array<i64: 128, 128>}, {pipeline_mode = #tpu.pipeline_mode<synchronous>, transform_indices = @transform_11, window_bounds = array<i64: 1, 128>}, {pipeline_mode = #tpu.pipeline_mode<synchronous>, transform_indices = @transform_12, window_bounds = array<i64: 16, 128>}]} {
    %c0_i32 = arith.constant 0 : i32
    %0 = arith.cmpi eq, %arg0, %c0_i32 : i32
    %1 = arith.extui %0 : i1 to i32
    %c0_i32_0 = arith.constant 0 : i32
    %2 = arith.cmpi ne, %1, %c0_i32_0 : i32
    scf.if %2 {
      %cst_172 = arith.constant 0.000000e+00 : f32
      %288 = vector.broadcast %cst_172 : f32 to vector<16x128xf32>
      %c0_173 = arith.constant 0 : index
      %c0_174 = arith.constant 0 : index
      %289 = vector.load %arg13[%c0_173, %c0_174] : memref<16x128xf32, #tpu.memory_space<vmem>>, vector<16x128xf32>
      tpu.vector_store %arg13[%c0_173, %c0_174], %288 {strides = array<i32>} : memref<16x128xf32, #tpu.memory_space<vmem>>, vector<16x128xf32>,
    } else {
    }
    %c0 = arith.constant 0 : index
    %c0_1 = arith.constant 0 : index
    %c0_2 = arith.constant 0 : index
    %3 = vector.load %arg1[%c0, %c0_1, %c0_2] : memref<5x8x128xbf16, #tpu.memory_space<vmem>>, vector<1x8x128xbf16>
    %4 = vector.shape_cast %3 : vector<1x8x128xbf16> to vector<8x128xbf16>
    %c0_3 = arith.constant 0 : index
    %c0_4 = arith.constant 0 : index
    %5 = vector.load %arg5[%c0_3, %c0_4] : memref<128x512xbf16, #tpu.memory_space<vmem>>, vector<128x512xbf16>
    %cst = arith.constant dense<0.000000e+00> : vector<8x512xf32>
    %6 = tpu.matmul %4, %5, %cst {dimension_numbers = #tpu.dot_dimension_numbers<[1], [0], [0], [1], [0, 0, 1, 1], [], []>} : vector<8x128xbf16>, vector<128x512xbf16>, vector<8x512xf32> -> vector<8x512xf32>
    %c0_5 = arith.constant 0 : index
    %c0_6 = arith.constant 0 : index
    %7 = vector.load %arg8[%c0_5, %c0_6] : memref<1x512xf32, #tpu.memory_space<vmem>>, vector<1x512xf32>
    %8 = vector.broadcast %7 : vector<1x512xf32> to vector<8x512xf32>
    %9 = arith.addf %6, %8 : vector<8x512xf32>
    %10 = arith.truncf %9 : vector<8x512xf32> to vector<8x512xbf16>
    %c0_7 = arith.constant 0 : index
    %c0_8 = arith.constant 0 : index
    %c0_9 = arith.constant 0 : index
    %11 = vector.load %arg14[%c0_7, %c0_8, %c0_9] : memref<5x8x512xbf16, #tpu.memory_space<vmem>>, vector<1x8x512xbf16>
    %12 = vector.shape_cast %11 : vector<1x8x512xbf16> to vector<8x512xbf16>
    %13 = vector.shape_cast %10 : vector<8x512xbf16> to vector<1x8x512xbf16>
    tpu.vector_store %arg14[%c0_7, %c0_8, %c0_9], %13 {strides = array<i32>} : memref<5x8x512xbf16, #tpu.memory_space<vmem>>, vector<1x8x512xbf16>,
    %c1 = arith.constant 1 : index
    %c0_10 = arith.constant 0 : index
    %c0_11 = arith.constant 0 : index
    %14 = vector.load %arg1[%c1, %c0_10, %c0_11] : memref<5x8x128xbf16, #tpu.memory_space<vmem>>, vector<1x8x128xbf16>
    %15 = vector.shape_cast %14 : vector<1x8x128xbf16> to vector<8x128xbf16>
    %c0_12 = arith.constant 0 : index
    %c0_13 = arith.constant 0 : index
    %16 = vector.load %arg5[%c0_12, %c0_13] : memref<128x512xbf16, #tpu.memory_space<vmem>>, vector<128x512xbf16>
    %cst_14 = arith.constant dense<0.000000e+00> : vector<8x512xf32>
    %17 = tpu.matmul %15, %16, %cst_14 {dimension_numbers = #tpu.dot_dimension_numbers<[1], [0], [0], [1], [0, 0, 1, 1], [], []>} : vector<8x128xbf16>, vector<128x512xbf16>, vector<8x512xf32> -> vector<8x512xf32>
    %c0_15 = arith.constant 0 : index
    %c0_16 = arith.constant 0 : index
    %c0_17 = arith.constant 0 : index
    %18 = vector.load %arg2[%c0_15, %c0_16, %c0_17] : memref<4x8x128xbf16, #tpu.memory_space<vmem>>, vector<1x8x128xbf16>
    %19 = vector.shape_cast %18 : vector<1x8x128xbf16> to vector<8x128xbf16>
    %c0_18 = arith.constant 0 : index
    %c0_19 = arith.constant 0 : index
    %20 = vector.load %arg6[%c0_18, %c0_19] : memref<128x512xbf16, #tpu.memory_space<vmem>>, vector<128x512xbf16>
    %cst_20 = arith.constant dense<0.000000e+00> : vector<8x512xf32>
    %21 = tpu.matmul %19, %20, %cst_20 {dimension_numbers = #tpu.dot_dimension_numbers<[1], [0], [0], [1], [0, 0, 1, 1], [], []>} : vector<8x128xbf16>, vector<128x512xbf16>, vector<8x512xf32> -> vector<8x512xf32>
    %22 = arith.addf %17, %21 : vector<8x512xf32>
    %c0_21 = arith.constant 0 : index
    %c0_22 = arith.constant 0 : index
    %23 = vector.load %arg8[%c0_21, %c0_22] : memref<1x512xf32, #tpu.memory_space<vmem>>, vector<1x512xf32>
    %24 = vector.broadcast %23 : vector<1x512xf32> to vector<8x512xf32>
    %25 = arith.addf %22, %24 : vector<8x512xf32>
    %26 = arith.truncf %25 : vector<8x512xf32> to vector<8x512xbf16>
    %c1_23 = arith.constant 1 : index
    %c0_24 = arith.constant 0 : index
    %c0_25 = arith.constant 0 : index
    %27 = vector.load %arg14[%c1_23, %c0_24, %c0_25] : memref<5x8x512xbf16, #tpu.memory_space<vmem>>, vector<1x8x512xbf16>
    %28 = vector.shape_cast %27 : vector<1x8x512xbf16> to vector<8x512xbf16>
    %29 = vector.shape_cast %26 : vector<8x512xbf16> to vector<1x8x512xbf16>
    tpu.vector_store %arg14[%c1_23, %c0_24, %c0_25], %29 {strides = array<i32>} : memref<5x8x512xbf16, #tpu.memory_space<vmem>>, vector<1x8x512xbf16>,
    %c2 = arith.constant 2 : index
    %c0_26 = arith.constant 0 : index
    %c0_27 = arith.constant 0 : index
    %30 = vector.load %arg1[%c2, %c0_26, %c0_27] : memref<5x8x128xbf16, #tpu.memory_space<vmem>>, vector<1x8x128xbf16>
    %31 = vector.shape_cast %30 : vector<1x8x128xbf16> to vector<8x128xbf16>
    %c0_28 = arith.constant 0 : index
    %c0_29 = arith.constant 0 : index
    %32 = vector.load %arg5[%c0_28, %c0_29] : memref<128x512xbf16, #tpu.memory_space<vmem>>, vector<128x512xbf16>
    %cst_30 = arith.constant dense<0.000000e+00> : vector<8x512xf32>
    %33 = tpu.matmul %31, %32, %cst_30 {dimension_numbers = #tpu.dot_dimension_numbers<[1], [0], [0], [1], [0, 0, 1, 1], [], []>} : vector<8x128xbf16>, vector<128x512xbf16>, vector<8x512xf32> -> vector<8x512xf32>
    %c1_31 = arith.constant 1 : index
    %c0_32 = arith.constant 0 : index
    %c0_33 = arith.constant 0 : index
    %34 = vector.load %arg2[%c1_31, %c0_32, %c0_33] : memref<4x8x128xbf16, #tpu.memory_space<vmem>>, vector<1x8x128xbf16>
    %35 = vector.shape_cast %34 : vector<1x8x128xbf16> to vector<8x128xbf16>
    %c0_34 = arith.constant 0 : index
    %c0_35 = arith.constant 0 : index
    %36 = vector.load %arg6[%c0_34, %c0_35] : memref<128x512xbf16, #tpu.memory_space<vmem>>, vector<128x512xbf16>
    %cst_36 = arith.constant dense<0.000000e+00> : vector<8x512xf32>
    %37 = tpu.matmul %35, %36, %cst_36 {dimension_numbers = #tpu.dot_dimension_numbers<[1], [0], [0], [1], [0, 0, 1, 1], [], []>} : vector<8x128xbf16>, vector<128x512xbf16>, vector<8x512xf32> -> vector<8x512xf32>
    %38 = arith.addf %33, %37 : vector<8x512xf32>
    %c0_37 = arith.constant 0 : index
    %c0_38 = arith.constant 0 : index
    %39 = vector.load %arg8[%c0_37, %c0_38] : memref<1x512xf32, #tpu.memory_space<vmem>>, vector<1x512xf32>
    %40 = vector.broadcast %39 : vector<1x512xf32> to vector<8x512xf32>
    %41 = arith.addf %38, %40 : vector<8x512xf32>
    %42 = arith.truncf %41 : vector<8x512xf32> to vector<8x512xbf16>
    %c2_39 = arith.constant 2 : index
    %c0_40 = arith.constant 0 : index
    %c0_41 = arith.constant 0 : index
    %43 = vector.load %arg14[%c2_39, %c0_40, %c0_41] : memref<5x8x512xbf16, #tpu.memory_space<vmem>>, vector<1x8x512xbf16>
    %44 = vector.shape_cast %43 : vector<1x8x512xbf16> to vector<8x512xbf16>
    %45 = vector.shape_cast %42 : vector<8x512xbf16> to vector<1x8x512xbf16>
    tpu.vector_store %arg14[%c2_39, %c0_40, %c0_41], %45 {strides = array<i32>} : memref<5x8x512xbf16, #tpu.memory_space<vmem>>, vector<1x8x512xbf16>,
    %c3 = arith.constant 3 : index
    %c0_42 = arith.constant 0 : index
    %c0_43 = arith.constant 0 : index
    %46 = vector.load %arg1[%c3, %c0_42, %c0_43] : memref<5x8x128xbf16, #tpu.memory_space<vmem>>, vector<1x8x128xbf16>
    %47 = vector.shape_cast %46 : vector<1x8x128xbf16> to vector<8x128xbf16>
    %c0_44 = arith.constant 0 : index
    %c0_45 = arith.constant 0 : index
    %48 = vector.load %arg5[%c0_44, %c0_45] : memref<128x512xbf16, #tpu.memory_space<vmem>>, vector<128x512xbf16>
    %cst_46 = arith.constant dense<0.000000e+00> : vector<8x512xf32>
    %49 = tpu.matmul %47, %48, %cst_46 {dimension_numbers = #tpu.dot_dimension_numbers<[1], [0], [0], [1], [0, 0, 1, 1], [], []>} : vector<8x128xbf16>, vector<128x512xbf16>, vector<8x512xf32> -> vector<8x512xf32>
    %c2_47 = arith.constant 2 : index
    %c0_48 = arith.constant 0 : index
    %c0_49 = arith.constant 0 : index
    %50 = vector.load %arg2[%c2_47, %c0_48, %c0_49] : memref<4x8x128xbf16, #tpu.memory_space<vmem>>, vector<1x8x128xbf16>
    %51 = vector.shape_cast %50 : vector<1x8x128xbf16> to vector<8x128xbf16>
    %c0_50 = arith.constant 0 : index
    %c0_51 = arith.constant 0 : index
    %52 = vector.load %arg6[%c0_50, %c0_51] : memref<128x512xbf16, #tpu.memory_space<vmem>>, vector<128x512xbf16>
    %cst_52 = arith.constant dense<0.000000e+00> : vector<8x512xf32>
    %53 = tpu.matmul %51, %52, %cst_52 {dimension_numbers = #tpu.dot_dimension_numbers<[1], [0], [0], [1], [0, 0, 1, 1], [], []>} : vector<8x128xbf16>, vector<128x512xbf16>, vector<8x512xf32> -> vector<8x512xf32>
    %54 = arith.addf %49, %53 : vector<8x512xf32>
    %c0_53 = arith.constant 0 : index
    %c0_54 = arith.constant 0 : index
    %55 = vector.load %arg8[%c0_53, %c0_54] : memref<1x512xf32, #tpu.memory_space<vmem>>, vector<1x512xf32>
    %56 = vector.broadcast %55 : vector<1x512xf32> to vector<8x512xf32>
    %57 = arith.addf %54, %56 : vector<8x512xf32>
    %58 = arith.truncf %57 : vector<8x512xf32> to vector<8x512xbf16>
    %c3_55 = arith.constant 3 : index
    %c0_56 = arith.constant 0 : index
    %c0_57 = arith.constant 0 : index
    %59 = vector.load %arg14[%c3_55, %c0_56, %c0_57] : memref<5x8x512xbf16, #tpu.memory_space<vmem>>, vector<1x8x512xbf16>
    %60 = vector.shape_cast %59 : vector<1x8x512xbf16> to vector<8x512xbf16>
    %61 = vector.shape_cast %58 : vector<8x512xbf16> to vector<1x8x512xbf16>
    tpu.vector_store %arg14[%c3_55, %c0_56, %c0_57], %61 {strides = array<i32>} : memref<5x8x512xbf16, #tpu.memory_space<vmem>>, vector<1x8x512xbf16>,
    %c4 = arith.constant 4 : index
    %c0_58 = arith.constant 0 : index
    %c0_59 = arith.constant 0 : index
    %62 = vector.load %arg1[%c4, %c0_58, %c0_59] : memref<5x8x128xbf16, #tpu.memory_space<vmem>>, vector<1x8x128xbf16>
    %63 = vector.shape_cast %62 : vector<1x8x128xbf16> to vector<8x128xbf16>
    %c0_60 = arith.constant 0 : index
    %c0_61 = arith.constant 0 : index
    %64 = vector.load %arg5[%c0_60, %c0_61] : memref<128x512xbf16, #tpu.memory_space<vmem>>, vector<128x512xbf16>
    %cst_62 = arith.constant dense<0.000000e+00> : vector<8x512xf32>
    %65 = tpu.matmul %63, %64, %cst_62 {dimension_numbers = #tpu.dot_dimension_numbers<[1], [0], [0], [1], [0, 0, 1, 1], [], []>} : vector<8x128xbf16>, vector<128x512xbf16>, vector<8x512xf32> -> vector<8x512xf32>
    %c3_63 = arith.constant 3 : index
    %c0_64 = arith.constant 0 : index
    %c0_65 = arith.constant 0 : index
    %66 = vector.load %arg2[%c3_63, %c0_64, %c0_65] : memref<4x8x128xbf16, #tpu.memory_space<vmem>>, vector<1x8x128xbf16>
    %67 = vector.shape_cast %66 : vector<1x8x128xbf16> to vector<8x128xbf16>
    %c0_66 = arith.constant 0 : index
    %c0_67 = arith.constant 0 : index
    %68 = vector.load %arg6[%c0_66, %c0_67] : memref<128x512xbf16, #tpu.memory_space<vmem>>, vector<128x512xbf16>
    %cst_68 = arith.constant dense<0.000000e+00> : vector<8x512xf32>
    %69 = tpu.matmul %67, %68, %cst_68 {dimension_numbers = #tpu.dot_dimension_numbers<[1], [0], [0], [1], [0, 0, 1, 1], [], []>} : vector<8x128xbf16>, vector<128x512xbf16>, vector<8x512xf32> -> vector<8x512xf32>
    %70 = arith.addf %65, %69 : vector<8x512xf32>
    %c0_69 = arith.constant 0 : index
    %c0_70 = arith.constant 0 : index
    %71 = vector.load %arg8[%c0_69, %c0_70] : memref<1x512xf32, #tpu.memory_space<vmem>>, vector<1x512xf32>
    %72 = vector.broadcast %71 : vector<1x512xf32> to vector<8x512xf32>
    %73 = arith.addf %70, %72 : vector<8x512xf32>
    %74 = arith.truncf %73 : vector<8x512xf32> to vector<8x512xbf16>
    %c4_71 = arith.constant 4 : index
    %c0_72 = arith.constant 0 : index
    %c0_73 = arith.constant 0 : index
    %75 = vector.load %arg14[%c4_71, %c0_72, %c0_73] : memref<5x8x512xbf16, #tpu.memory_space<vmem>>, vector<1x8x512xbf16>
    %76 = vector.shape_cast %75 : vector<1x8x512xbf16> to vector<8x512xbf16>
    %77 = vector.shape_cast %74 : vector<8x512xbf16> to vector<1x8x512xbf16>
    tpu.vector_store %arg14[%c4_71, %c0_72, %c0_73], %77 {strides = array<i32>} : memref<5x8x512xbf16, #tpu.memory_space<vmem>>, vector<1x8x512xbf16>,
    %cst_74 = arith.constant 0.000000e+00 : bf16
    %78 = vector.broadcast %cst_74 : bf16 to vector<8x128xbf16>
    %c0_75 = arith.constant 0 : index
    %c0_76 = arith.constant 0 : index
    %79 = vector.load %arg15[%c0_75, %c0_76] : memref<8x128xbf16, #tpu.memory_space<vmem>>, vector<8x128xbf16>
    tpu.vector_store %arg15[%c0_75, %c0_76], %78 {strides = array<i32>} : memref<8x128xbf16, #tpu.memory_space<vmem>>, vector<8x128xbf16>,
    %cst_77 = arith.constant 0.000000e+00 : f32
    %80 = vector.broadcast %cst_77 : f32 to vector<8x128xf32>
    %c0_78 = arith.constant 0 : index
    %c0_79 = arith.constant 0 : index
    %81 = vector.load %arg16[%c0_78, %c0_79] : memref<8x128xf32, #tpu.memory_space<vmem>>, vector<8x128xf32>
    tpu.vector_store %arg16[%c0_78, %c0_79], %80 {strides = array<i32>} : memref<8x128xf32, #tpu.memory_space<vmem>>, vector<8x128xf32>,
    %c0_i32_80 = arith.constant 0 : i32
    %82 = arith.index_cast %c0_i32_80 : i32 to index
    %c0_81 = arith.constant 0 : index
    %c0_82 = arith.constant 0 : index
    %83 = vector.load %arg14[%82, %c0_81, %c0_82] : memref<5x8x512xbf16, #tpu.memory_space<vmem>>, vector<1x8x512xbf16>
    %84 = vector.shape_cast %83 : vector<1x8x512xbf16> to vector<8x512xbf16>
    %85 = arith.extf %84 : vector<8x512xbf16> to vector<8x512xf32>
    %c0_83 = arith.constant 0 : index
    %c0_84 = arith.constant 0 : index
    %86 = vector.load %arg15[%c0_83, %c0_84] : memref<8x128xbf16, #tpu.memory_space<vmem>>, vector<8x128xbf16>
    %c0_85 = arith.constant 0 : index
    %c0_86 = arith.constant 0 : index
    %87 = vector.load %arg7[%c0_85, %c0_86] : memref<128x512xbf16, #tpu.memory_space<vmem>>, vector<128x512xbf16>
    %cst_87 = arith.constant dense<0.000000e+00> : vector<8x512xf32>
    %88 = tpu.matmul %86, %87, %cst_87 {dimension_numbers = #tpu.dot_dimension_numbers<[1], [0], [0], [1], [0, 0, 1, 1], [], []>} : vector<8x128xbf16>, vector<128x512xbf16>, vector<8x512xf32> -> vector<8x512xf32>
    %89 = arith.addf %85, %88 : vector<8x512xf32>
    %90 = vector.extract_strided_slice %89 {offsets = [0, 0], sizes = [8, 128], strides = [1, 1]} : vector<8x512xf32> to vector<8x128xf32>
    %91 = arith.negf %90 : vector<8x128xf32>
    %92 = math.exp %91 : vector<8x128xf32>
    %cst_88 = arith.constant 1.000000e+00 : f32
    %93 = vector.broadcast %cst_88 : f32 to vector<8x128xf32>
    %94 = arith.addf %93, %92 : vector<8x128xf32>
    %95 = arith.divf %93, %94 : vector<8x128xf32>
    %96 = vector.extract_strided_slice %89 {offsets = [0, 128], sizes = [8, 128], strides = [1, 1]} : vector<8x512xf32> to vector<8x128xf32>
    %97 = arith.negf %96 : vector<8x128xf32>
    %98 = math.exp %97 : vector<8x128xf32>
    %cst_89 = arith.constant 1.000000e+00 : f32
    %99 = vector.broadcast %cst_89 : f32 to vector<8x128xf32>
    %100 = arith.addf %99, %98 : vector<8x128xf32>
    %101 = arith.divf %99, %100 : vector<8x128xf32>
    %102 = vector.extract_strided_slice %89 {offsets = [0, 256], sizes = [8, 128], strides = [1, 1]} : vector<8x512xf32> to vector<8x128xf32>
    %103 = math.tanh %102 : vector<8x128xf32>
    %104 = vector.extract_strided_slice %89 {offsets = [0, 384], sizes = [8, 128], strides = [1, 1]} : vector<8x512xf32> to vector<8x128xf32>
    %105 = arith.negf %104 : vector<8x128xf32>
    %106 = math.exp %105 : vector<8x128xf32>
    %cst_90 = arith.constant 1.000000e+00 : f32
    %107 = vector.broadcast %cst_90 : f32 to vector<8x128xf32>
    %108 = arith.addf %107, %106 : vector<8x128xf32>
    %109 = arith.divf %107, %108 : vector<8x128xf32>
    %c0_91 = arith.constant 0 : index
    %c0_92 = arith.constant 0 : index
    %110 = vector.load %arg16[%c0_91, %c0_92] : memref<8x128xf32, #tpu.memory_space<vmem>>, vector<8x128xf32>
    %111 = arith.mulf %101, %110 : vector<8x128xf32>
    %112 = arith.mulf %95, %103 : vector<8x128xf32>
    %113 = arith.addf %111, %112 : vector<8x128xf32>
    %c0_93 = arith.constant 0 : index
    %c0_94 = arith.constant 0 : index
    %114 = vector.load %arg16[%c0_93, %c0_94] : memref<8x128xf32, #tpu.memory_space<vmem>>, vector<8x128xf32>
    tpu.vector_store %arg16[%c0_93, %c0_94], %113 {strides = array<i32>} : memref<8x128xf32, #tpu.memory_space<vmem>>, vector<8x128xf32>,
    %115 = math.tanh %113 : vector<8x128xf32>
    %116 = arith.mulf %109, %115 : vector<8x128xf32>
    %117 = arith.truncf %116 : vector<8x128xf32> to vector<8x128xbf16>
    %c0_95 = arith.constant 0 : index
    %c0_96 = arith.constant 0 : index
    %118 = vector.load %arg15[%c0_95, %c0_96] : memref<8x128xbf16, #tpu.memory_space<vmem>>, vector<8x128xbf16>
    tpu.vector_store %arg15[%c0_95, %c0_96], %117 {strides = array<i32>} : memref<8x128xbf16, #tpu.memory_space<vmem>>, vector<8x128xbf16>,
    %c1_i32 = arith.constant 1 : i32
    %119 = arith.index_cast %c1_i32 : i32 to index
    %c0_97 = arith.constant 0 : index
    %c0_98 = arith.constant 0 : index
    %120 = vector.load %arg14[%119, %c0_97, %c0_98] : memref<5x8x512xbf16, #tpu.memory_space<vmem>>, vector<1x8x512xbf16>
    %121 = vector.shape_cast %120 : vector<1x8x512xbf16> to vector<8x512xbf16>
    %122 = arith.extf %121 : vector<8x512xbf16> to vector<8x512xf32>
    %c0_99 = arith.constant 0 : index
    %c0_100 = arith.constant 0 : index
    %123 = vector.load %arg15[%c0_99, %c0_100] : memref<8x128xbf16, #tpu.memory_space<vmem>>, vector<8x128xbf16>
    %c0_101 = arith.constant 0 : index
    %c0_102 = arith.constant 0 : index
    %124 = vector.load %arg7[%c0_101, %c0_102] : memref<128x512xbf16, #tpu.memory_space<vmem>>, vector<128x512xbf16>
    %cst_103 = arith.constant dense<0.000000e+00> : vector<8x512xf32>
    %125 = tpu.matmul %123, %124, %cst_103 {dimension_numbers = #tpu.dot_dimension_numbers<[1], [0], [0], [1], [0, 0, 1, 1], [], []>} : vector<8x128xbf16>, vector<128x512xbf16>, vector<8x512xf32> -> vector<8x512xf32>
    %126 = arith.addf %122, %125 : vector<8x512xf32>
    %127 = vector.extract_strided_slice %126 {offsets = [0, 0], sizes = [8, 128], strides = [1, 1]} : vector<8x512xf32> to vector<8x128xf32>
    %128 = arith.negf %127 : vector<8x128xf32>
    %129 = math.exp %128 : vector<8x128xf32>
    %cst_104 = arith.constant 1.000000e+00 : f32
    %130 = vector.broadcast %cst_104 : f32 to vector<8x128xf32>
    %131 = arith.addf %130, %129 : vector<8x128xf32>
    %132 = arith.divf %130, %131 : vector<8x128xf32>
    %133 = vector.extract_strided_slice %126 {offsets = [0, 128], sizes = [8, 128], strides = [1, 1]} : vector<8x512xf32> to vector<8x128xf32>
    %134 = arith.negf %133 : vector<8x128xf32>
    %135 = math.exp %134 : vector<8x128xf32>
    %cst_105 = arith.constant 1.000000e+00 : f32
    %136 = vector.broadcast %cst_105 : f32 to vector<8x128xf32>
    %137 = arith.addf %136, %135 : vector<8x128xf32>
    %138 = arith.divf %136, %137 : vector<8x128xf32>
    %139 = vector.extract_strided_slice %126 {offsets = [0, 256], sizes = [8, 128], strides = [1, 1]} : vector<8x512xf32> to vector<8x128xf32>
    %140 = math.tanh %139 : vector<8x128xf32>
    %141 = vector.extract_strided_slice %126 {offsets = [0, 384], sizes = [8, 128], strides = [1, 1]} : vector<8x512xf32> to vector<8x128xf32>
    %142 = arith.negf %141 : vector<8x128xf32>
    %143 = math.exp %142 : vector<8x128xf32>
    %cst_106 = arith.constant 1.000000e+00 : f32
    %144 = vector.broadcast %cst_106 : f32 to vector<8x128xf32>
    %145 = arith.addf %144, %143 : vector<8x128xf32>
    %146 = arith.divf %144, %145 : vector<8x128xf32>
    %c0_107 = arith.constant 0 : index
    %c0_108 = arith.constant 0 : index
    %147 = vector.load %arg16[%c0_107, %c0_108] : memref<8x128xf32, #tpu.memory_space<vmem>>, vector<8x128xf32>
    %148 = arith.mulf %138, %147 : vector<8x128xf32>
    %149 = arith.mulf %132, %140 : vector<8x128xf32>
    %150 = arith.addf %148, %149 : vector<8x128xf32>
    %c0_109 = arith.constant 0 : index
    %c0_110 = arith.constant 0 : index
    %151 = vector.load %arg16[%c0_109, %c0_110] : memref<8x128xf32, #tpu.memory_space<vmem>>, vector<8x128xf32>
    tpu.vector_store %arg16[%c0_109, %c0_110], %150 {strides = array<i32>} : memref<8x128xf32, #tpu.memory_space<vmem>>, vector<8x128xf32>,
    %152 = math.tanh %150 : vector<8x128xf32>
    %153 = arith.mulf %146, %152 : vector<8x128xf32>
    %154 = arith.truncf %153 : vector<8x128xf32> to vector<8x128xbf16>
    %c0_111 = arith.constant 0 : index
    %c0_112 = arith.constant 0 : index
    %155 = vector.load %arg15[%c0_111, %c0_112] : memref<8x128xbf16, #tpu.memory_space<vmem>>, vector<8x128xbf16>
    tpu.vector_store %arg15[%c0_111, %c0_112], %154 {strides = array<i32>} : memref<8x128xbf16, #tpu.memory_space<vmem>>, vector<8x128xbf16>,
    %c2_i32 = arith.constant 2 : i32
    %156 = arith.index_cast %c2_i32 : i32 to index
    %c0_113 = arith.constant 0 : index
    %c0_114 = arith.constant 0 : index
    %157 = vector.load %arg14[%156, %c0_113, %c0_114] : memref<5x8x512xbf16, #tpu.memory_space<vmem>>, vector<1x8x512xbf16>
    %158 = vector.shape_cast %157 : vector<1x8x512xbf16> to vector<8x512xbf16>
    %159 = arith.extf %158 : vector<8x512xbf16> to vector<8x512xf32>
    %c0_115 = arith.constant 0 : index
    %c0_116 = arith.constant 0 : index
    %160 = vector.load %arg15[%c0_115, %c0_116] : memref<8x128xbf16, #tpu.memory_space<vmem>>, vector<8x128xbf16>
    %c0_117 = arith.constant 0 : index
    %c0_118 = arith.constant 0 : index
    %161 = vector.load %arg7[%c0_117, %c0_118] : memref<128x512xbf16, #tpu.memory_space<vmem>>, vector<128x512xbf16>
    %cst_119 = arith.constant dense<0.000000e+00> : vector<8x512xf32>
    %162 = tpu.matmul %160, %161, %cst_119 {dimension_numbers = #tpu.dot_dimension_numbers<[1], [0], [0], [1], [0, 0, 1, 1], [], []>} : vector<8x128xbf16>, vector<128x512xbf16>, vector<8x512xf32> -> vector<8x512xf32>
    %163 = arith.addf %159, %162 : vector<8x512xf32>
    %164 = vector.extract_strided_slice %163 {offsets = [0, 0], sizes = [8, 128], strides = [1, 1]} : vector<8x512xf32> to vector<8x128xf32>
    %165 = arith.negf %164 : vector<8x128xf32>
    %166 = math.exp %165 : vector<8x128xf32>
    %cst_120 = arith.constant 1.000000e+00 : f32
    %167 = vector.broadcast %cst_120 : f32 to vector<8x128xf32>
    %168 = arith.addf %167, %166 : vector<8x128xf32>
    %169 = arith.divf %167, %168 : vector<8x128xf32>
    %170 = vector.extract_strided_slice %163 {offsets = [0, 128], sizes = [8, 128], strides = [1, 1]} : vector<8x512xf32> to vector<8x128xf32>
    %171 = arith.negf %170 : vector<8x128xf32>
    %172 = math.exp %171 : vector<8x128xf32>
    %cst_121 = arith.constant 1.000000e+00 : f32
    %173 = vector.broadcast %cst_121 : f32 to vector<8x128xf32>
    %174 = arith.addf %173, %172 : vector<8x128xf32>
    %175 = arith.divf %173, %174 : vector<8x128xf32>
    %176 = vector.extract_strided_slice %163 {offsets = [0, 256], sizes = [8, 128], strides = [1, 1]} : vector<8x512xf32> to vector<8x128xf32>
    %177 = math.tanh %176 : vector<8x128xf32>
    %178 = vector.extract_strided_slice %163 {offsets = [0, 384], sizes = [8, 128], strides = [1, 1]} : vector<8x512xf32> to vector<8x128xf32>
    %179 = arith.negf %178 : vector<8x128xf32>
    %180 = math.exp %179 : vector<8x128xf32>
    %cst_122 = arith.constant 1.000000e+00 : f32
    %181 = vector.broadcast %cst_122 : f32 to vector<8x128xf32>
    %182 = arith.addf %181, %180 : vector<8x128xf32>
    %183 = arith.divf %181, %182 : vector<8x128xf32>
    %c0_123 = arith.constant 0 : index
    %c0_124 = arith.constant 0 : index
    %184 = vector.load %arg16[%c0_123, %c0_124] : memref<8x128xf32, #tpu.memory_space<vmem>>, vector<8x128xf32>
    %185 = arith.mulf %175, %184 : vector<8x128xf32>
    %186 = arith.mulf %169, %177 : vector<8x128xf32>
    %187 = arith.addf %185, %186 : vector<8x128xf32>
    %c0_125 = arith.constant 0 : index
    %c0_126 = arith.constant 0 : index
    %188 = vector.load %arg16[%c0_125, %c0_126] : memref<8x128xf32, #tpu.memory_space<vmem>>, vector<8x128xf32>
    tpu.vector_store %arg16[%c0_125, %c0_126], %187 {strides = array<i32>} : memref<8x128xf32, #tpu.memory_space<vmem>>, vector<8x128xf32>,
    %189 = math.tanh %187 : vector<8x128xf32>
    %190 = arith.mulf %183, %189 : vector<8x128xf32>
    %191 = arith.truncf %190 : vector<8x128xf32> to vector<8x128xbf16>
    %c0_127 = arith.constant 0 : index
    %c0_128 = arith.constant 0 : index
    %192 = vector.load %arg15[%c0_127, %c0_128] : memref<8x128xbf16, #tpu.memory_space<vmem>>, vector<8x128xbf16>
    tpu.vector_store %arg15[%c0_127, %c0_128], %191 {strides = array<i32>} : memref<8x128xbf16, #tpu.memory_space<vmem>>, vector<8x128xbf16>,
    %c3_i32 = arith.constant 3 : i32
    %193 = arith.index_cast %c3_i32 : i32 to index
    %c0_129 = arith.constant 0 : index
    %c0_130 = arith.constant 0 : index
    %194 = vector.load %arg14[%193, %c0_129, %c0_130] : memref<5x8x512xbf16, #tpu.memory_space<vmem>>, vector<1x8x512xbf16>
    %195 = vector.shape_cast %194 : vector<1x8x512xbf16> to vector<8x512xbf16>
    %196 = arith.extf %195 : vector<8x512xbf16> to vector<8x512xf32>
    %c0_131 = arith.constant 0 : index
    %c0_132 = arith.constant 0 : index
    %197 = vector.load %arg15[%c0_131, %c0_132] : memref<8x128xbf16, #tpu.memory_space<vmem>>, vector<8x128xbf16>
    %c0_133 = arith.constant 0 : index
    %c0_134 = arith.constant 0 : index
    %198 = vector.load %arg7[%c0_133, %c0_134] : memref<128x512xbf16, #tpu.memory_space<vmem>>, vector<128x512xbf16>
    %cst_135 = arith.constant dense<0.000000e+00> : vector<8x512xf32>
    %199 = tpu.matmul %197, %198, %cst_135 {dimension_numbers = #tpu.dot_dimension_numbers<[1], [0], [0], [1], [0, 0, 1, 1], [], []>} : vector<8x128xbf16>, vector<128x512xbf16>, vector<8x512xf32> -> vector<8x512xf32>
    %200 = arith.addf %196, %199 : vector<8x512xf32>
    %201 = vector.extract_strided_slice %200 {offsets = [0, 0], sizes = [8, 128], strides = [1, 1]} : vector<8x512xf32> to vector<8x128xf32>
    %202 = arith.negf %201 : vector<8x128xf32>
    %203 = math.exp %202 : vector<8x128xf32>
    %cst_136 = arith.constant 1.000000e+00 : f32
    %204 = vector.broadcast %cst_136 : f32 to vector<8x128xf32>
    %205 = arith.addf %204, %203 : vector<8x128xf32>
    %206 = arith.divf %204, %205 : vector<8x128xf32>
    %207 = vector.extract_strided_slice %200 {offsets = [0, 128], sizes = [8, 128], strides = [1, 1]} : vector<8x512xf32> to vector<8x128xf32>
    %208 = arith.negf %207 : vector<8x128xf32>
    %209 = math.exp %208 : vector<8x128xf32>
    %cst_137 = arith.constant 1.000000e+00 : f32
    %210 = vector.broadcast %cst_137 : f32 to vector<8x128xf32>
    %211 = arith.addf %210, %209 : vector<8x128xf32>
    %212 = arith.divf %210, %211 : vector<8x128xf32>
    %213 = vector.extract_strided_slice %200 {offsets = [0, 256], sizes = [8, 128], strides = [1, 1]} : vector<8x512xf32> to vector<8x128xf32>
    %214 = math.tanh %213 : vector<8x128xf32>
    %215 = vector.extract_strided_slice %200 {offsets = [0, 384], sizes = [8, 128], strides = [1, 1]} : vector<8x512xf32> to vector<8x128xf32>
    %216 = arith.negf %215 : vector<8x128xf32>
    %217 = math.exp %216 : vector<8x128xf32>
    %cst_138 = arith.constant 1.000000e+00 : f32
    %218 = vector.broadcast %cst_138 : f32 to vector<8x128xf32>
    %219 = arith.addf %218, %217 : vector<8x128xf32>
    %220 = arith.divf %218, %219 : vector<8x128xf32>
    %c0_139 = arith.constant 0 : index
    %c0_140 = arith.constant 0 : index
    %221 = vector.load %arg16[%c0_139, %c0_140] : memref<8x128xf32, #tpu.memory_space<vmem>>, vector<8x128xf32>
    %222 = arith.mulf %212, %221 : vector<8x128xf32>
    %223 = arith.mulf %206, %214 : vector<8x128xf32>
    %224 = arith.addf %222, %223 : vector<8x128xf32>
    %c0_141 = arith.constant 0 : index
    %c0_142 = arith.constant 0 : index
    %225 = vector.load %arg16[%c0_141, %c0_142] : memref<8x128xf32, #tpu.memory_space<vmem>>, vector<8x128xf32>
    tpu.vector_store %arg16[%c0_141, %c0_142], %224 {strides = array<i32>} : memref<8x128xf32, #tpu.memory_space<vmem>>, vector<8x128xf32>,
    %226 = math.tanh %224 : vector<8x128xf32>
    %227 = arith.mulf %220, %226 : vector<8x128xf32>
    %228 = arith.truncf %227 : vector<8x128xf32> to vector<8x128xbf16>
    %c0_143 = arith.constant 0 : index
    %c0_144 = arith.constant 0 : index
    %229 = vector.load %arg15[%c0_143, %c0_144] : memref<8x128xbf16, #tpu.memory_space<vmem>>, vector<8x128xbf16>
    tpu.vector_store %arg15[%c0_143, %c0_144], %228 {strides = array<i32>} : memref<8x128xbf16, #tpu.memory_space<vmem>>, vector<8x128xbf16>,
    %c4_i32 = arith.constant 4 : i32
    %230 = arith.index_cast %c4_i32 : i32 to index
    %c0_145 = arith.constant 0 : index
    %c0_146 = arith.constant 0 : index
    %231 = vector.load %arg14[%230, %c0_145, %c0_146] : memref<5x8x512xbf16, #tpu.memory_space<vmem>>, vector<1x8x512xbf16>
    %232 = vector.shape_cast %231 : vector<1x8x512xbf16> to vector<8x512xbf16>
    %233 = arith.extf %232 : vector<8x512xbf16> to vector<8x512xf32>
    %c0_147 = arith.constant 0 : index
    %c0_148 = arith.constant 0 : index
    %234 = vector.load %arg15[%c0_147, %c0_148] : memref<8x128xbf16, #tpu.memory_space<vmem>>, vector<8x128xbf16>
    %c0_149 = arith.constant 0 : index
    %c0_150 = arith.constant 0 : index
    %235 = vector.load %arg7[%c0_149, %c0_150] : memref<128x512xbf16, #tpu.memory_space<vmem>>, vector<128x512xbf16>
    %cst_151 = arith.constant dense<0.000000e+00> : vector<8x512xf32>
    %236 = tpu.matmul %234, %235, %cst_151 {dimension_numbers = #tpu.dot_dimension_numbers<[1], [0], [0], [1], [0, 0, 1, 1], [], []>} : vector<8x128xbf16>, vector<128x512xbf16>, vector<8x512xf32> -> vector<8x512xf32>
    %237 = arith.addf %233, %236 : vector<8x512xf32>
    %238 = vector.extract_strided_slice %237 {offsets = [0, 0], sizes = [8, 128], strides = [1, 1]} : vector<8x512xf32> to vector<8x128xf32>
    %239 = arith.negf %238 : vector<8x128xf32>
    %240 = math.exp %239 : vector<8x128xf32>
    %cst_152 = arith.constant 1.000000e+00 : f32
    %241 = vector.broadcast %cst_152 : f32 to vector<8x128xf32>
    %242 = arith.addf %241, %240 : vector<8x128xf32>
    %243 = arith.divf %241, %242 : vector<8x128xf32>
    %244 = vector.extract_strided_slice %237 {offsets = [0, 128], sizes = [8, 128], strides = [1, 1]} : vector<8x512xf32> to vector<8x128xf32>
    %245 = arith.negf %244 : vector<8x128xf32>
    %246 = math.exp %245 : vector<8x128xf32>
    %cst_153 = arith.constant 1.000000e+00 : f32
    %247 = vector.broadcast %cst_153 : f32 to vector<8x128xf32>
    %248 = arith.addf %247, %246 : vector<8x128xf32>
    %249 = arith.divf %247, %248 : vector<8x128xf32>
    %250 = vector.extract_strided_slice %237 {offsets = [0, 256], sizes = [8, 128], strides = [1, 1]} : vector<8x512xf32> to vector<8x128xf32>
    %251 = math.tanh %250 : vector<8x128xf32>
    %252 = vector.extract_strided_slice %237 {offsets = [0, 384], sizes = [8, 128], strides = [1, 1]} : vector<8x512xf32> to vector<8x128xf32>
    %253 = arith.negf %252 : vector<8x128xf32>
    %254 = math.exp %253 : vector<8x128xf32>
    %cst_154 = arith.constant 1.000000e+00 : f32
    %255 = vector.broadcast %cst_154 : f32 to vector<8x128xf32>
    %256 = arith.addf %255, %254 : vector<8x128xf32>
    %257 = arith.divf %255, %256 : vector<8x128xf32>
    %c0_155 = arith.constant 0 : index
    %c0_156 = arith.constant 0 : index
    %258 = vector.load %arg16[%c0_155, %c0_156] : memref<8x128xf32, #tpu.memory_space<vmem>>, vector<8x128xf32>
    %259 = arith.mulf %249, %258 : vector<8x128xf32>
    %260 = arith.mulf %243, %251 : vector<8x128xf32>
    %261 = arith.addf %259, %260 : vector<8x128xf32>
    %c0_157 = arith.constant 0 : index
    %c0_158 = arith.constant 0 : index
    %262 = vector.load %arg16[%c0_157, %c0_158] : memref<8x128xf32, #tpu.memory_space<vmem>>, vector<8x128xf32>
    tpu.vector_store %arg16[%c0_157, %c0_158], %261 {strides = array<i32>} : memref<8x128xf32, #tpu.memory_space<vmem>>, vector<8x128xf32>,
    %263 = math.tanh %261 : vector<8x128xf32>
    %264 = arith.mulf %257, %263 : vector<8x128xf32>
    %265 = arith.truncf %264 : vector<8x128xf32> to vector<8x128xbf16>
    %c0_159 = arith.constant 0 : index
    %c0_160 = arith.constant 0 : index
    %266 = vector.load %arg15[%c0_159, %c0_160] : memref<8x128xbf16, #tpu.memory_space<vmem>>, vector<8x128xbf16>
    tpu.vector_store %arg15[%c0_159, %c0_160], %265 {strides = array<i32>} : memref<8x128xbf16, #tpu.memory_space<vmem>>, vector<8x128xbf16>,
    %c5_i32 = arith.constant 5 : i32
    %c0_161 = arith.constant 0 : index
    %c0_162 = arith.constant 0 : index
    %267 = vector.load %arg15[%c0_161, %c0_162] : memref<8x128xbf16, #tpu.memory_space<vmem>>, vector<8x128xbf16>
    %c0_163 = arith.constant 0 : index
    %c0_164 = arith.constant 0 : index
    %268 = vector.load %arg3[%c0_163, %c0_164] : memref<1x8xi32, #tpu.memory_space<vmem>>, vector<1x8xi32>
    %c0_i32_165 = arith.constant 0 : i32
    %c16_i32 = arith.constant 16 : i32
    %269 = arith.muli %c0_i32_165, %c16_i32 : i32
    %270 = tpu.assume_multiple %269, 16 : i32
    %271 = tpu.iota {dimensions = array<i32: 0>} : vector<16x8xi32>
    %272 = vector.broadcast %270 : i32 to vector<16x8xi32>
    %273 = arith.addi %271, %272 : vector<16x8xi32>
    %274 = vector.broadcast %268 : vector<1x8xi32> to vector<16x8xi32>
    %275 = arith.cmpi eq, %273, %274 : vector<16x8xi32>
    %276 = arith.extui %275 : vector<16x8xi1> to vector<16x8xi32>
    %277 = arith.sitofp %276 : vector<16x8xi32> to vector<16x8xf32>
    %278 = arith.truncf %277 : vector<16x8xf32> to vector<16x8xbf16>
    %279 = arith.index_cast %270 : i32 to index
    %c0_166 = arith.constant 0 : index
    %280 = vector.load %arg13[%279, %c0_166] : memref<16x128xf32, #tpu.memory_space<vmem>>, vector<16x128xf32>
    %cst_167 = arith.constant dense<0.000000e+00> : vector<16x128xf32>
    %281 = tpu.matmul %278, %267, %cst_167 {dimension_numbers = #tpu.dot_dimension_numbers<[1], [0], [0], [1], [0, 0, 1, 1], [], []>} : vector<16x8xbf16>, vector<8x128xbf16>, vector<16x128xf32> -> vector<16x128xf32>
    %282 = arith.addf %280, %281 : vector<16x128xf32>
    %283 = arith.index_cast %270 : i32 to index
    %c0_168 = arith.constant 0 : index
    %284 = vector.load %arg13[%283, %c0_168] : memref<16x128xf32, #tpu.memory_space<vmem>>, vector<16x128xf32>
    tpu.vector_store %arg13[%283, %c0_168], %282 {strides = array<i32>} : memref<16x128xf32, #tpu.memory_space<vmem>>, vector<16x128xf32>,
    %c1_i32_169 = arith.constant 1 : i32
    %c0_i32_170 = arith.constant 0 : i32
    %285 = arith.cmpi eq, %arg0, %c0_i32_170 : i32
    %286 = arith.extui %285 : i1 to i32
    %c0_i32_171 = arith.constant 0 : i32
    %287 = arith.cmpi ne, %286, %c0_i32_171 : i32
    scf.if %287 {
      %c0_i32_172 = arith.constant 0 : i32
      %c16_i32_173 = arith.constant 16 : i32
      %288 = arith.muli %c0_i32_172, %c16_i32_173 : i32
      %289 = tpu.assume_multiple %288, 16 : i32
      %290 = arith.index_cast %289 : i32 to index
      %c0_174 = arith.constant 0 : index
      %291 = vector.load %arg4[%290, %c0_174] : memref<16x128xf32, #tpu.memory_space<vmem>>, vector<16x128xf32>
      %292 = arith.index_cast %289 : i32 to index
      %c0_175 = arith.constant 0 : index
      %293 = vector.load %arg13[%292, %c0_175] : memref<16x128xf32, #tpu.memory_space<vmem>>, vector<16x128xf32>
      %294 = arith.addf %291, %293 : vector<16x128xf32>
      %295 = arith.truncf %294 : vector<16x128xf32> to vector<16x128xbf16>
      %c0_176 = arith.constant 0 : index
      %c0_177 = arith.constant 0 : index
      %296 = vector.load %arg9[%c0_176, %c0_177] : memref<128x128xbf16, #tpu.memory_space<vmem>>, vector<128x128xbf16>
      %cst_178 = arith.constant dense<0.000000e+00> : vector<16x128xf32>
      %297 = tpu.matmul %295, %296, %cst_178 {dimension_numbers = #tpu.dot_dimension_numbers<[1], [0], [0], [1], [0, 0, 1, 1], [], []>} : vector<16x128xbf16>, vector<128x128xbf16>, vector<16x128xf32> -> vector<16x128xf32>
      %c0_179 = arith.constant 0 : index
      %c0_180 = arith.constant 0 : index
      %298 = vector.load %arg10[%c0_179, %c0_180] : memref<1x128xf32, #tpu.memory_space<vmem>>, vector<1x128xf32>
      %299 = vector.broadcast %298 : vector<1x128xf32> to vector<16x128xf32>
      %300 = arith.addf %297, %299 : vector<16x128xf32>
      %cst_181 = arith.constant 0.000000e+00 : f32
      %301 = vector.broadcast %cst_181 : f32 to vector<16x128xf32>
      %302 = arith.maximumf %300, %301 : vector<16x128xf32>
      %303 = arith.truncf %302 : vector<16x128xf32> to vector<16x128xbf16>
      %c0_182 = arith.constant 0 : index
      %c0_183 = arith.constant 0 : index
      %304 = vector.load %arg11[%c0_182, %c0_183] : memref<128x128xbf16, #tpu.memory_space<vmem>>, vector<128x128xbf16>
      %cst_184 = arith.constant dense<0.000000e+00> : vector<16x128xf32>
      %305 = tpu.matmul %303, %304, %cst_184 {dimension_numbers = #tpu.dot_dimension_numbers<[1], [0], [0], [1], [0, 0, 1, 1], [], []>} : vector<16x128xbf16>, vector<128x128xbf16>, vector<16x128xf32> -> vector<16x128xf32>
      %c0_185 = arith.constant 0 : index
      %c0_186 = arith.constant 0 : index
      %306 = vector.load %arg12[%c0_185, %c0_186] : memref<1x128xf32, #tpu.memory_space<vmem>>, vector<1x128xf32>
      %307 = vector.broadcast %306 : vector<1x128xf32> to vector<16x128xf32>
      %308 = arith.addf %305, %307 : vector<16x128xf32>
      %309 = arith.index_cast %289 : i32 to index
      %c0_187 = arith.constant 0 : index
      %310 = vector.load %arg13[%309, %c0_187] : memref<16x128xf32, #tpu.memory_space<vmem>>, vector<16x128xf32>
      tpu.vector_store %arg13[%309, %c0_187], %308 {strides = array<i32>} : memref<16x128xf32, #tpu.memory_space<vmem>>, vector<16x128xf32>,
      %c1_i32_188 = arith.constant 1 : i32
    } else {
    }
    return
  }
  func.func @transform_0(%arg0: i32) -> (i32, i32, i32) {
    %c0_i32 = arith.constant 0 : i32
    %c0_i32_0 = arith.constant 0 : i32
    %c0_i32_1 = arith.constant 0 : i32
    return %c0_i32, %arg0, %c0_i32_0 : i32, i32, i32
  }
  func.func @transform_1(%arg0: i32) -> (i32, i32, i32) {
    %c0_i32 = arith.constant 0 : i32
    %c0_i32_0 = arith.constant 0 : i32
    %c0_i32_1 = arith.constant 0 : i32
    return %c0_i32, %arg0, %c0_i32_0 : i32, i32, i32
  }
  func.func @transform_2(%arg0: i32) -> (i32, i32) {
    %c0_i32 = arith.constant 0 : i32
    %c0_i32_0 = arith.constant 0 : i32
    return %c0_i32, %arg0 : i32, i32
  }
  func.func @transform_3(%arg0: i32) -> (i32, i32) {
    %c0_i32 = arith.constant 0 : i32
    %c0_i32_0 = arith.constant 0 : i32
    %c0_i32_1 = arith.constant 0 : i32
    return %c0_i32, %c0_i32_0 : i32, i32
  }
  func.func @transform_4(%arg0: i32) -> (i32, i32) {
    %c0_i32 = arith.constant 0 : i32
    %c0_i32_0 = arith.constant 0 : i32
    %c0_i32_1 = arith.constant 0 : i32
    return %c0_i32, %c0_i32_0 : i32, i32
  }
  func.func @transform_5(%arg0: i32) -> (i32, i32) {
    %c0_i32 = arith.constant 0 : i32
    %c0_i32_0 = arith.constant 0 : i32
    %c0_i32_1 = arith.constant 0 : i32
    return %c0_i32, %c0_i32_0 : i32, i32
  }
  func.func @transform_6(%arg0: i32) -> (i32, i32) {
    %c0_i32 = arith.constant 0 : i32
    %c0_i32_0 = arith.constant 0 : i32
    %c0_i32_1 = arith.constant 0 : i32
    return %c0_i32, %c0_i32_0 : i32, i32
  }
  func.func @transform_7(%arg0: i32) -> (i32, i32) {
    %c0_i32 = arith.constant 0 : i32
    %c0_i32_0 = arith.constant 0 : i32
    %c0_i32_1 = arith.constant 0 : i32
    return %c0_i32, %c0_i32_0 : i32, i32
  }
  func.func @transform_8(%arg0: i32) -> (i32, i32) {
    %c0_i32 = arith.constant 0 : i32
    %c0_i32_0 = arith.constant 0 : i32
    %c0_i32_1 = arith.constant 0 : i32
    return %c0_i32, %c0_i32_0 : i32, i32
  }
  func.func @transform_9(%arg0: i32) -> (i32, i32) {
    %c0_i32 = arith.constant 0 : i32
    %c0_i32_0 = arith.constant 0 : i32
    %c0_i32_1 = arith.constant 0 : i32
    return %c0_i32, %c0_i32_0 : i32, i32
  }
  func.func @transform_10(%arg0: i32) -> (i32, i32) {
    %c0_i32 = arith.constant 0 : i32
    %c0_i32_0 = arith.constant 0 : i32
    %c0_i32_1 = arith.constant 0 : i32
    return %c0_i32, %c0_i32_0 : i32, i32
  }
  func.func @transform_11(%arg0: i32) -> (i32, i32) {
    %c0_i32 = arith.constant 0 : i32
    %c0_i32_0 = arith.constant 0 : i32
    %c0_i32_1 = arith.constant 0 : i32
    return %c0_i32, %c0_i32_0 : i32, i32
  }
  func.func @transform_12(%arg0: i32) -> (i32, i32) {
    %c0_i32 = arith.constant 0 : i32
    %c0_i32_0 = arith.constant 0 : i32
    %c0_i32_1 = arith.constant 0 : i32
    return %c0_i32, %c0_i32_0 : i32, i32
  }
}

</mosaic_0001>

<llo_original>
// kernel: edge_path_conv_forward.1
$region0: #{edge_path_conv_forward.1}
  #allocation0 [shape = 'u32[]', space=smem, size = 0x4, offset = 0x4, fixed_abs, tag = 'smem constant byte address 0x4 - core index']
  #allocation1 [shape = 'u32[72,128]{1,0:T(1,128)}', space=vmem, size = 0x9000, scoped, tag = 'internal scratch']
  #allocation2 [shape = 'bf16[5,8,512]{2,1,0:T(8,128)(2,1)}', space=vmem, size = 0xa000, scoped, tag = 'scratch operand']
  #allocation3 [shape = 'bf16[8,128]{1,0:T(8,128)(2,1)}', space=vmem, size = 0x800, scoped, tag = 'scratch operand']
  #allocation4 [shape = 'f32[8,128]{1,0:T(8,128)}', space=vmem, size = 0x1000, scoped, tag = 'scratch operand']
  %s0 = inlined_call_operand.vmem [shape: bf16[5,8,128], index: 0, kind: input, shape index: {}]
  %s1 = inlined_call_operand.vmem [shape: bf16[4,8,128], index: 1, kind: input, shape index: {}]
  %s2 = inlined_call_operand.vmem [shape: s32[1,8], index: 2, kind: input, shape index: {}]
  %s3 = inlined_call_operand.vmem [shape: f32[16,128], index: 3, kind: input, shape index: {}]
  %s4 = inlined_call_operand.vmem [shape: bf16[128,512], index: 4, kind: input, shape index: {}]
  %s5 = inlined_call_operand.vmem [shape: bf16[128,512], index: 5, kind: input, shape index: {}]
  %s6 = inlined_call_operand.vmem [shape: bf16[128,512], index: 6, kind: input, shape index: {}]
  %s7 = inlined_call_operand.vmem [shape: f32[1,512], index: 7, kind: input, shape index: {}]
  %s8 = inlined_call_operand.vmem [shape: bf16[128,128], index: 8, kind: input, shape index: {}]
  %s9 = inlined_call_operand.vmem [shape: f32[1,128], index: 9, kind: input, shape index: {}]
  %s10 = inlined_call_operand.vmem [shape: bf16[128,128], index: 10, kind: input, shape index: {}]
  %s11 = inlined_call_operand.vmem [shape: f32[1,128], index: 11, kind: input, shape index: {}]
  %s12 = inlined_call_operand.hbm [shape: f32[16,128], index: 12, kind: output, shape index: {}]
  %s13 = sld [smem:[#allocation0]]
  $region66: #{edge_path_conv_forward.1} parent=0
    _
  %s15 = ssub.s32 1, %s13
  %s16 = scalar_select 0, %s15, %s13
  $region1: #{edge_path_conv_forward.1} parent=0
    #allocation5 [shape = 'u8[8192]{0}', space=vmem, size = 0x2000, scoped, tag = 'output window, operand 0, single buffered']
    #allocation6 [shape = 's32[1]{0}', space=sflag, size = 0x4, scoped, tag = 'scoped memory for edge_path_conv_forward.1']
    %17 = vsyncpa [#allocation6], 0
    // Predicated region
    $region2: #{edge_path_conv_forward.1} parent=1 // pred_check
      _
    $region3: #{edge_path_conv_forward.1} parent=1 // pred_check_branch
      %19 = sbr.rel (0) target = $region5
    $region4: #{edge_path_conv_forward.1} parent=1 // pred_region
      _
    $region5: #{edge_path_conv_forward.1} parent=1 // pred_fallthru
      _
    // Predicated region
    $region6: #{edge_path_conv_forward.1} parent=1 // pred_check
      _
    $region7: #{edge_path_conv_forward.1} parent=1 // pred_check_branch
      %21 = sbr.rel (0) target = $region9
    $region8: #{edge_path_conv_forward.1} parent=1 // pred_region
      _
    $region9: #{edge_path_conv_forward.1} parent=1 // pred_fallthru
      _
    // Predicated region
    $region10: #{edge_path_conv_forward.1} parent=1 // pred_check
      _
    $region11: #{edge_path_conv_forward.1} parent=1 // pred_check_branch
      %23 = sbr.rel (0) target = $region13
    $region12: #{edge_path_conv_forward.1} parent=1 // pred_region
      _
    $region13: #{edge_path_conv_forward.1} parent=1 // pred_fallthru
      _
    // Predicated region
    $region14: #{edge_path_conv_forward.1} parent=1 // pred_check
      _
    $region15: #{edge_path_conv_forward.1} parent=1 // pred_check_branch
      %25 = sbr.rel (0) target = $region17
    $region16: #{edge_path_conv_forward.1} parent=1 // pred_region
      _
    $region17: #{edge_path_conv_forward.1} parent=1 // pred_fallthru
      _
    // Predicated region
    $region18: #{edge_path_conv_forward.1} parent=1 // pred_check
      _
    $region19: #{edge_path_conv_forward.1} parent=1 // pred_check_branch
      %27 = sbr.rel (0) target = $region21
    $region20: #{edge_path_conv_forward.1} parent=1 // pred_region
      _
    $region21: #{edge_path_conv_forward.1} parent=1 // pred_fallthru
      _
    // Predicated region
    $region22: #{edge_path_conv_forward.1} parent=1 // pred_check
      _
    $region23: #{edge_path_conv_forward.1} parent=1 // pred_check_branch
      %29 = sbr.rel (0) target = $region25
    $region24: #{edge_path_conv_forward.1} parent=1 // pred_region
      _
    $region25: #{edge_path_conv_forward.1} parent=1 // pred_fallthru
      _
    // Predicated region
    $region26: #{edge_path_conv_forward.1} parent=1 // pred_check
      _
    $region27: #{edge_path_conv_forward.1} parent=1 // pred_check_branch
      %31 = sbr.rel (0) target = $region29
    $region28: #{edge_path_conv_forward.1} parent=1 // pred_region
      _
    $region29: #{edge_path_conv_forward.1} parent=1 // pred_fallthru
      _
    // Predicated region
    $region30: #{edge_path_conv_forward.1} parent=1 // pred_check
      _
    $region31: #{edge_path_conv_forward.1} parent=1 // pred_check_branch
      %33 = sbr.rel (0) target = $region33
    $region32: #{edge_path_conv_forward.1} parent=1 // pred_region
      _
    $region33: #{edge_path_conv_forward.1} parent=1 // pred_fallthru
      _
    // Predicated region
    $region34: #{edge_path_conv_forward.1} parent=1 // pred_check
      _
    $region35: #{edge_path_conv_forward.1} parent=1 // pred_check_branch
      %35 = sbr.rel (0) target = $region37
    $region36: #{edge_path_conv_forward.1} parent=1 // pred_region
      _
    $region37: #{edge_path_conv_forward.1} parent=1 // pred_fallthru
      _
    // Predicated region
    $region38: #{edge_path_conv_forward.1} parent=1 // pred_check
      _
    $region39: #{edge_path_conv_forward.1} parent=1 // pred_check_branch
      %37 = sbr.rel (0) target = $region41
    $region40: #{edge_path_conv_forward.1} parent=1 // pred_region
      _
    $region41: #{edge_path_conv_forward.1} parent=1 // pred_fallthru
      _
    // Predicated region
    $region42: #{edge_path_conv_forward.1} parent=1 // pred_check
      _
    $region43: #{edge_path_conv_forward.1} parent=1 // pred_check_branch
      %39 = sbr.rel (0) target = $region45
    $region44: #{edge_path_conv_forward.1} parent=1 // pred_region
      _
    $region45: #{edge_path_conv_forward.1} parent=1 // pred_fallthru
      _
    // Predicated region
    $region46: #{edge_path_conv_forward.1} parent=1 // pred_check
      _
    $region47: #{edge_path_conv_forward.1} parent=1 // pred_check_branch
      %41 = sbr.rel (0) target = $region49
    $region48: #{edge_path_conv_forward.1} parent=1 // pred_region
      _
    $region49: #{edge_path_conv_forward.1} parent=1 // pred_fallthru
      _
    %p43 = scmp.eq.s32.totalorder 0, 0
    // Predicated region
    $region50: #{edge_path_conv_forward.1} parent=1 // pred_check
      %p44 = pneg %p43
    $region51: #{edge_path_conv_forward.1} parent=1 // pred_check_branch
      %46 = sbr.rel (%p44) target = $region53
    $region52: #{edge_path_conv_forward.1} parent=1 // pred_region
      %47 = vst [vmem:[#allocation5] sm:$0xff] 0.0
      %48 = vst [vmem:[#allocation5 + $0x8] sm:$0xff] 0.0
    $region53: #{edge_path_conv_forward.1} parent=1 // pred_fallthru
      _
    %v49 = vld [vmem:[%s0] sm:$0xf]
    %v50 = vld [vmem:[%s4] sm:$0xff]
    %v51 = vld [vmem:[%s4 + $0x8] sm:$0xff]
    %v52 = vld [vmem:[%s4 + $0x10] sm:$0xff]
    %v53 = vld [vmem:[%s4 + $0x18] sm:$0xff]
    %v54 = vld [vmem:[%s4 + $0x20] sm:$0xff]
    %v55 = vld [vmem:[%s4 + $0x28] sm:$0xff]
    %v56 = vld [vmem:[%s4 + $0x30] sm:$0xff]
    %v57 = vld [vmem:[%s4 + $0x38] sm:$0xff]
    %v58 = vld [vmem:[%s4 + $0x40] sm:$0xff]
    %v59 = vld [vmem:[%s4 + $0x48] sm:$0xff]
    %v60 = vld [vmem:[%s4 + $0x50] sm:$0xff]
    %v61 = vld [vmem:[%s4 + $0x58] sm:$0xff]
    %v62 = vld [vmem:[%s4 + $0x60] sm:$0xff]
    %v63 = vld [vmem:[%s4 + $0x68] sm:$0xff]
    %v64 = vld [vmem:[%s4 + $0x70] sm:$0xff]
    %v65 = vld [vmem:[%s4 + $0x78] sm:$0xff]
    %v66 = vld [vmem:[%s4 + $0x80] sm:$0xff]
    %v67 = vld [vmem:[%s4 + $0x88] sm:$0xff]
    %v68 = vld [vmem:[%s4 + $0x90] sm:$0xff]
    %v69 = vld [vmem:[%s4 + $0x98] sm:$0xff]
    %v70 = vld [vmem:[%s4 + $0xa0] sm:$0xff]
    %v71 = vld [vmem:[%s4 + $0xa8] sm:$0xff]
    %v72 = vld [vmem:[%s4 + $0xb0] sm:$0xff]
    %v73 = vld [vmem:[%s4 + $0xb8] sm:$0xff]
    %v74 = vld [vmem:[%s4 + $0xc0] sm:$0xff]
    %v75 = vld [vmem:[%s4 + $0xc8] sm:$0xff]
    %v76 = vld [vmem:[%s4 + $0xd0] sm:$0xff]
    %v77 = vld [vmem:[%s4 + $0xd8] sm:$0xff]
    %v78 = vld [vmem:[%s4 + $0xe0] sm:$0xff]
    %v79 = vld [vmem:[%s4 + $0xe8] sm:$0xff]
    %v80 = vld [vmem:[%s4 + $0xf0] sm:$0xff]
    %v81 = vld [vmem:[%s4 + $0xf8] sm:$0xff]
    %v82 = vld [vmem:[%s7] sm:$0xf]
    %v84 = vperm.slane %v82, 0
    %v85 = vperm.slane %v82, 1
    %v86 = vperm.slane %v82, 2
    %v87 = vperm.slane %v82, 3
    %v124 = vunpack.c.l.b16 %v50
    %v125 = vunpack.c.h.b16 %v50
    %v126 = vunpack.c.l.b16 %v51
    %v127 = vunpack.c.h.b16 %v51
    %v128 = vunpack.c.l.b16 %v52
    %v129 = vunpack.c.h.b16 %v52
    %v130 = vunpack.c.l.b16 %v53
    %v131 = vunpack.c.h.b16 %v53
    %v132 = vunpack.c.l.b16 %v54
    %v133 = vunpack.c.h.b16 %v54
    %v134 = vunpack.c.l.b16 %v55
    %v135 = vunpack.c.h.b16 %v55
    %v136 = vunpack.c.l.b16 %v56
    %v137 = vunpack.c.h.b16 %v56
    %v138 = vunpack.c.l.b16 %v57
    %v139 = vunpack.c.h.b16 %v57
    %v140 = vunpack.c.l.b16 %v58
    %v141 = vunpack.c.h.b16 %v58
    %v142 = vunpack.c.l.b16 %v59
    %v143 = vunpack.c.h.b16 %v59
    %v144 = vunpack.c.l.b16 %v60
    %v145 = vunpack.c.h.b16 %v60
    %v146 = vunpack.c.l.b16 %v61
    %v147 = vunpack.c.h.b16 %v61
    %v148 = vunpack.c.l.b16 %v62
    %v149 = vunpack.c.h.b16 %v62
    %v150 = vunpack.c.l.b16 %v63
    %v151 = vunpack.c.h.b16 %v63
    %v152 = vunpack.c.l.b16 %v64
    %v153 = vunpack.c.h.b16 %v64
    %v154 = vunpack.c.l.b16 %v65
    %v155 = vunpack.c.h.b16 %v65
    %v156 = vunpack.c.l.b16 %v66
    %v157 = vunpack.c.h.b16 %v66
    %v158 = vunpack.c.l.b16 %v67
    %v159 = vunpack.c.h.b16 %v67
    %v160 = vunpack.c.l.b16 %v68
    %v161 = vunpack.c.h.b16 %v68
    %v162 = vunpack.c.l.b16 %v69
    %v163 = vunpack.c.h.b16 %v69
    %v164 = vunpack.c.l.b16 %v70
    %v165 = vunpack.c.h.b16 %v70
    %v166 = vunpack.c.l.b16 %v71
    %v167 = vunpack.c.h.b16 %v71
    %v168 = vunpack.c.l.b16 %v72
    %v169 = vunpack.c.h.b16 %v72
    %v170 = vunpack.c.l.b16 %v73
    %v171 = vunpack.c.h.b16 %v73
    %v172 = vunpack.c.l.b16 %v74
    %v173 = vunpack.c.h.b16 %v74
    %v174 = vunpack.c.l.b16 %v75
    %v175 = vunpack.c.h.b16 %v75
    %v176 = vunpack.c.l.b16 %v76
    %v177 = vunpack.c.h.b16 %v76
    %v178 = vunpack.c.l.b16 %v77
    %v179 = vunpack.c.h.b16 %v77
    %v180 = vunpack.c.l.b16 %v78
    %v181 = vunpack.c.h.b16 %v78
    %v182 = vunpack.c.l.b16 %v79
    %v183 = vunpack.c.h.b16 %v79
    %v184 = vunpack.c.l.b16 %v80
    %v185 = vunpack.c.h.b16 %v80
    %v186 = vunpack.c.l.b16 %v81
    %v187 = vunpack.c.h.b16 %v81
    %v188 = vpack.c.b16 %v128, %v124
    %v189 = vpack.c.b16 %v129, %v125
    %v190 = vpack.c.b16 %v130, %v126
    %v191 = vpack.c.b16 %v131, %v127
    %v192 = vpack.c.b16 %v136, %v132
    %v193 = vpack.c.b16 %v137, %v133
    %v194 = vpack.c.b16 %v138, %v134
    %v195 = vpack.c.b16 %v139, %v135
    %v196 = vpack.c.b16 %v144, %v140
    %v197 = vpack.c.b16 %v145, %v141
    %v198 = vpack.c.b16 %v146, %v142
    %v199 = vpack.c.b16 %v147, %v143
    %v200 = vpack.c.b16 %v152, %v148
    %v201 = vpack.c.b16 %v153, %v149
    %v202 = vpack.c.b16 %v154, %v150
    %v203 = vpack.c.b16 %v155, %v151
    %v204 = vpack.c.b16 %v160, %v156
    %v205 = vpack.c.b16 %v161, %v157
    %v206 = vpack.c.b16 %v162, %v158
    %v207 = vpack.c.b16 %v163, %v159
    %v208 = vpack.c.b16 %v168, %v164
    %v209 = vpack.c.b16 %v169, %v165
    %v210 = vpack.c.b16 %v170, %v166
    %v211 = vpack.c.b16 %v171, %v167
    %v212 = vpack.c.b16 %v176, %v172
    %v213 = vpack.c.b16 %v177, %v173
    %v214 = vpack.c.b16 %v178, %v174
    %v215 = vpack.c.b16 %v179, %v175
    %v216 = vpack.c.b16 %v184, %v180
    %v217 = vpack.c.b16 %v185, %v181
    %v218 = vpack.c.b16 %v186, %v182
    %v219 = vpack.c.b16 %v187, %v183
    %252 = vmatpush.bf16.msra.mxu0 %v216
    %253 = vmatpush.bf16.msra.mxu0 %v212
    %254 = vmatpush.bf16.msra.mxu0 %v208
    %255 = vmatpush.bf16.msra.mxu0 %v204
    %256 = vmatpush.bf16.msra.mxu0 %v200
    %257 = vmatpush.bf16.msra.mxu0 %v196
    %258 = vmatpush.bf16.msra.mxu0 %v192
    %259 = vmatpush.bf16.msra.mxu0 %v188
    %260 = vmatmul.bf16.gmra.mxu0 %v49
    %v261 = vpop.f32.mrf.mxu0
    %v262 = vadd.f32 %v84, %v261
    %v263 = vpop.f32.mrf.mxu0
    %264 = vdwg.mxu0
    %265 = vmatpush.bf16.msra.mxu0 %v217
    %266 = vmatpush.bf16.msra.mxu0 %v213
    %267 = vmatpush.bf16.msra.mxu0 %v209
    %268 = vmatpush.bf16.msra.mxu0 %v205
    %269 = vmatpush.bf16.msra.mxu0 %v201
    %270 = vmatpush.bf16.msra.mxu0 %v197
    %271 = vmatpush.bf16.msra.mxu0 %v193
    %272 = vmatpush.bf16.msra.mxu0 %v189
    %273 = vmatmul.bf16.gmra.mxu0 %v49
    %v274 = vpop.f32.mrf.mxu0
    %v275 = vadd.f32 %v85, %v274
    %v276 = vpop.f32.mrf.mxu0
    %277 = vdwg.mxu0
    %278 = vmatpush.bf16.msra.mxu0 %v218
    %279 = vmatpush.bf16.msra.mxu0 %v214
    %280 = vmatpush.bf16.msra.mxu0 %v210
    %281 = vmatpush.bf16.msra.mxu0 %v206
    %282 = vmatpush.bf16.msra.mxu0 %v202
    %283 = vmatpush.bf16.msra.mxu0 %v198
    %284 = vmatpush.bf16.msra.mxu0 %v194
    %285 = vmatpush.bf16.msra.mxu0 %v190
    %286 = vmatmul.bf16.gmra.mxu0 %v49
    %v287 = vpop.f32.mrf.mxu0
    %v288 = vadd.f32 %v86, %v287
    %v289 = vpop.f32.mrf.mxu0
    %290 = vdwg.mxu0
    %291 = vmatpush.bf16.msra.mxu0 %v219
    %292 = vmatpush.bf16.msra.mxu0 %v215
    %293 = vmatpush.bf16.msra.mxu0 %v211
    %294 = vmatpush.bf16.msra.mxu0 %v207
    %295 = vmatpush.bf16.msra.mxu0 %v203
    %296 = vmatpush.bf16.msra.mxu0 %v199
    %297 = vmatpush.bf16.msra.mxu0 %v195
    %298 = vmatpush.bf16.msra.mxu0 %v191
    %299 = vmatmul.bf16.gmra.mxu0 %v49
    %v300 = vpop.f32.mrf.mxu0
    %v301 = vadd.f32 %v87, %v300
    %v302 = vpop.f32.mrf.mxu0
    %303 = vdwg.mxu0
    %v304 = vpack.c.bf16 %v275, %v262
    %v305 = vpack.c.bf16 %v301, %v288
    %306 = vst [vmem:[#allocation2] sm:$0xff] %v304
    %307 = vst [vmem:[#allocation2 + $0x8] sm:$0xff] %v305
    %s308 = scalar_lea.vmem %s0, 4
    %v309 = vld [vmem:[%s308] sm:$0xf]
    %v310 = vld [vmem:[%s4] sm:$0xff]
    %v311 = vld [vmem:[%s4 + $0x8] sm:$0xff]
    %v312 = vld [vmem:[%s4 + $0x10] sm:$0xff]
    %v313 = vld [vmem:[%s4 + $0x18] sm:$0xff]
    %v314 = vld [vmem:[%s4 + $0x20] sm:$0xff]
    %v315 = vld [vmem:[%s4 + $0x28] sm:$0xff]
    %v316 = vld [vmem:[%s4 + $0x30] sm:$0xff]
    %v317 = vld [vmem:[%s4 + $0x38] sm:$0xff]
    %v318 = vld [vmem:[%s4 + $0x40] sm:$0xff]
    %v319 = vld [vmem:[%s4 + $0x48] sm:$0xff]
    %v320 = vld [vmem:[%s4 + $0x50] sm:$0xff]
    %v321 = vld [vmem:[%s4 + $0x58] sm:$0xff]
    %v322 = vld [vmem:[%s4 + $0x60] sm:$0xff]
    %v323 = vld [vmem:[%s4 + $0x68] sm:$0xff]
    %v324 = vld [vmem:[%s4 + $0x70] sm:$0xff]
    %v325 = vld [vmem:[%s4 + $0x78] sm:$0xff]
    %v326 = vld [vmem:[%s4 + $0x80] sm:$0xff]
    %v327 = vld [vmem:[%s4 + $0x88] sm:$0xff]
    %v328 = vld [vmem:[%s4 + $0x90] sm:$0xff]
    %v329 = vld [vmem:[%s4 + $0x98] sm:$0xff]
    %v330 = vld [vmem:[%s4 + $0xa0] sm:$0xff]
    %v331 = vld [vmem:[%s4 + $0xa8] sm:$0xff]
    %v332 = vld [vmem:[%s4 + $0xb0] sm:$0xff]
    %v333 = vld [vmem:[%s4 + $0xb8] sm:$0xff]
    %v334 = vld [vmem:[%s4 + $0xc0] sm:$0xff]
    %v335 = vld [vmem:[%s4 + $0xc8] sm:$0xff]
    %v336 = vld [vmem:[%s4 + $0xd0] sm:$0xff]
    %v337 = vld [vmem:[%s4 + $0xd8] sm:$0xff]
    %v338 = vld [vmem:[%s4 + $0xe0] sm:$0xff]
    %v339 = vld [vmem:[%s4 + $0xe8] sm:$0xff]
    %v340 = vld [vmem:[%s4 + $0xf0] sm:$0xff]
    %v341 = vld [vmem:[%s4 + $0xf8] sm:$0xff]
    %v342 = vld [vmem:[%s1] sm:$0xf]
    %v343 = vld [vmem:[%s5] sm:$0xff]
    %v344 = vld [vmem:[%s5 + $0x8] sm:$0xff]
    %v345 = vld [vmem:[%s5 + $0x10] sm:$0xff]
    %v346 = vld [vmem:[%s5 + $0x18] sm:$0xff]
    %v347 = vld [vmem:[%s5 + $0x20] sm:$0xff]
    %v348 = vld [vmem:[%s5 + $0x28] sm:$0xff]
    %v349 = vld [vmem:[%s5 + $0x30] sm:$0xff]
    %v350 = vld [vmem:[%s5 + $0x38] sm:$0xff]
    %v351 = vld [vmem:[%s5 + $0x40] sm:$0xff]
    %v352 = vld [vmem:[%s5 + $0x48] sm:$0xff]
    %v353 = vld [vmem:[%s5 + $0x50] sm:$0xff]
    %v354 = vld [vmem:[%s5 + $0x58] sm:$0xff]
    %v355 = vld [vmem:[%s5 + $0x60] sm:$0xff]
    %v356 = vld [vmem:[%s5 + $0x68] sm:$0xff]
    %v357 = vld [vmem:[%s5 + $0x70] sm:$0xff]
    %v358 = vld [vmem:[%s5 + $0x78] sm:$0xff]
    %v359 = vld [vmem:[%s5 + $0x80] sm:$0xff]
    %v360 = vld [vmem:[%s5 + $0x88] sm:$0xff]
    %v361 = vld [vmem:[%s5 + $0x90] sm:$0xff]
    %v362 = vld [vmem:[%s5 + $0x98] sm:$0xff]
    %v363 = vld [vmem:[%s5 + $0xa0] sm:$0xff]
    %v364 = vld [vmem:[%s5 + $0xa8] sm:$0xff]
    %v365 = vld [vmem:[%s5 + $0xb0] sm:$0xff]
    %v366 = vld [vmem:[%s5 + $0xb8] sm:$0xff]
    %v367 = vld [vmem:[%s5 + $0xc0] sm:$0xff]
    %v368 = vld [vmem:[%s5 + $0xc8] sm:$0xff]
    %v369 = vld [vmem:[%s5 + $0xd0] sm:$0xff]
    %v370 = vld [vmem:[%s5 + $0xd8] sm:$0xff]
    %v371 = vld [vmem:[%s5 + $0xe0] sm:$0xff]
    %v372 = vld [vmem:[%s5 + $0xe8] sm:$0xff]
    %v373 = vld [vmem:[%s5 + $0xf0] sm:$0xff]
    %v374 = vld [vmem:[%s5 + $0xf8] sm:$0xff]
    %v407 = vunpack.c.l.b16 %v343
    %v408 = vunpack.c.h.b16 %v343
    %v409 = vunpack.c.l.b16 %v344
    %v410 = vunpack.c.h.b16 %v344
    %v411 = vunpack.c.l.b16 %v345
    %v412 = vunpack.c.h.b16 %v345
    %v413 = vunpack.c.l.b16 %v346
    %v414 = vunpack.c.h.b16 %v346
    %v415 = vunpack.c.l.b16 %v347
    %v416 = vunpack.c.h.b16 %v347
    %v417 = vunpack.c.l.b16 %v348
    %v418 = vunpack.c.h.b16 %v348
    %v419 = vunpack.c.l.b16 %v349
    %v420 = vunpack.c.h.b16 %v349
    %v421 = vunpack.c.l.b16 %v350
    %v422 = vunpack.c.h.b16 %v350
    %v423 = vunpack.c.l.b16 %v351
    %v424 = vunpack.c.h.b16 %v351
    %v425 = vunpack.c.l.b16 %v352
    %v426 = vunpack.c.h.b16 %v352
    %v427 = vunpack.c.l.b16 %v353
    %v428 = vunpack.c.h.b16 %v353
    %v429 = vunpack.c.l.b16 %v354
    %v430 = vunpack.c.h.b16 %v354
    %v431 = vunpack.c.l.b16 %v355
    %v432 = vunpack.c.h.b16 %v355
    %v433 = vunpack.c.l.b16 %v356
    %v434 = vunpack.c.h.b16 %v356
    %v435 = vunpack.c.l.b16 %v357
    %v436 = vunpack.c.h.b16 %v357
    %v437 = vunpack.c.l.b16 %v358
    %v438 = vunpack.c.h.b16 %v358
    %v439 = vunpack.c.l.b16 %v359
    %v440 = vunpack.c.h.b16 %v359
    %v441 = vunpack.c.l.b16 %v360
    %v442 = vunpack.c.h.b16 %v360
    %v443 = vunpack.c.l.b16 %v361
    %v444 = vunpack.c.h.b16 %v361
    %v445 = vunpack.c.l.b16 %v362
    %v446 = vunpack.c.h.b16 %v362
    %v447 = vunpack.c.l.b16 %v363
    %v448 = vunpack.c.h.b16 %v363
    %v449 = vunpack.c.l.b16 %v364
    %v450 = vunpack.c.h.b16 %v364
    %v451 = vunpack.c.l.b16 %v365
    %v452 = vunpack.c.h.b16 %v365
    %v453 = vunpack.c.l.b16 %v366
    %v454 = vunpack.c.h.b16 %v366
    %v455 = vunpack.c.l.b16 %v367
    %v456 = vunpack.c.h.b16 %v367
    %v457 = vunpack.c.l.b16 %v368
    %v458 = vunpack.c.h.b16 %v368
    %v459 = vunpack.c.l.b16 %v369
    %v460 = vunpack.c.h.b16 %v369
    %v461 = vunpack.c.l.b16 %v370
    %v462 = vunpack.c.h.b16 %v370
    %v463 = vunpack.c.l.b16 %v371
    %v464 = vunpack.c.h.b16 %v371
    %v465 = vunpack.c.l.b16 %v372
    %v466 = vunpack.c.h.b16 %v372
    %v467 = vunpack.c.l.b16 %v373
    %v468 = vunpack.c.h.b16 %v373
    %v469 = vunpack.c.l.b16 %v374
    %v470 = vunpack.c.h.b16 %v374
    %v471 = vpack.c.b16 %v411, %v407
    %v472 = vpack.c.b16 %v412, %v408
    %v473 = vpack.c.b16 %v413, %v409
    %v474 = vpack.c.b16 %v414, %v410
    %v475 = vpack.c.b16 %v419, %v415
    %v476 = vpack.c.b16 %v420, %v416
    %v477 = vpack.c.b16 %v421, %v417
    %v478 = vpack.c.b16 %v422, %v418
    %v479 = vpack.c.b16 %v427, %v423
    %v480 = vpack.c.b16 %v428, %v424
    %v481 = vpack.c.b16 %v429, %v425
    %v482 = vpack.c.b16 %v430, %v426
    %v483 = vpack.c.b16 %v435, %v431
    %v484 = vpack.c.b16 %v436, %v432
    %v485 = vpack.c.b16 %v437, %v433
    %v486 = vpack.c.b16 %v438, %v434
    %v487 = vpack.c.b16 %v443, %v439
    %v488 = vpack.c.b16 %v444, %v440
    %v489 = vpack.c.b16 %v445, %v441
    %v490 = vpack.c.b16 %v446, %v442
    %v491 = vpack.c.b16 %v451, %v447
    %v492 = vpack.c.b16 %v452, %v448
    %v493 = vpack.c.b16 %v453, %v449
    %v494 = vpack.c.b16 %v454, %v450
    %v495 = vpack.c.b16 %v459, %v455
    %v496 = vpack.c.b16 %v460, %v456
    %v497 = vpack.c.b16 %v461, %v457
    %v498 = vpack.c.b16 %v462, %v458
    %v499 = vpack.c.b16 %v467, %v463
    %v500 = vpack.c.b16 %v468, %v464
    %v501 = vpack.c.b16 %v469, %v465
    %v502 = vpack.c.b16 %v470, %v466
    %535 = vmatpush.bf16.msra.mxu0 %v499
    %536 = vmatpush.bf16.msra.mxu0 %v495
    %537 = vmatpush.bf16.msra.mxu0 %v491
    %538 = vmatpush.bf16.msra.mxu0 %v487
    %539 = vmatpush.bf16.msra.mxu0 %v483
    %540 = vmatpush.bf16.msra.mxu0 %v479
    %541 = vmatpush.bf16.msra.mxu0 %v475
    %542 = vmatpush.bf16.msra.mxu0 %v471
    %543 = vmatmul.bf16.gmra.mxu0 %v342
    %v544 = vpop.f32.mrf.mxu0
    %v545 = vadd.f32 0.0, %v544
    %v546 = vpop.f32.mrf.mxu0
    %547 = vdwg.mxu0
    %548 = vmatpush.bf16.msra.mxu0 %v500
    %549 = vmatpush.bf16.msra.mxu0 %v496
    %550 = vmatpush.bf16.msra.mxu0 %v492
    %551 = vmatpush.bf16.msra.mxu0 %v488
    %552 = vmatpush.bf16.msra.mxu0 %v484
    %553 = vmatpush.bf16.msra.mxu0 %v480
    %554 = vmatpush.bf16.msra.mxu0 %v476
    %555 = vmatpush.bf16.msra.mxu0 %v472
    %556 = vmatmul.bf16.gmra.mxu0 %v342
    %v557 = vpop.f32.mrf.mxu0
    %v558 = vadd.f32 0.0, %v557
    %v559 = vpop.f32.mrf.mxu0
    %560 = vdwg.mxu0
    %561 = vmatpush.bf16.msra.mxu0 %v501
    %562 = vmatpush.bf16.msra.mxu0 %v497
    %563 = vmatpush.bf16.msra.mxu0 %v493
    %564 = vmatpush.bf16.msra.mxu0 %v489
    %565 = vmatpush.bf16.msra.mxu0 %v485
    %566 = vmatpush.bf16.msra.mxu0 %v481
    %567 = vmatpush.bf16.msra.mxu0 %v477
    %568 = vmatpush.bf16.msra.mxu0 %v473
    %569 = vmatmul.bf16.gmra.mxu0 %v342
    %v570 = vpop.f32.mrf.mxu0
    %v571 = vadd.f32 0.0, %v570
    %v572 = vpop.f32.mrf.mxu0
    %573 = vdwg.mxu0
    %574 = vmatpush.bf16.msra.mxu0 %v502
    %575 = vmatpush.bf16.msra.mxu0 %v498
    %576 = vmatpush.bf16.msra.mxu0 %v494
    %577 = vmatpush.bf16.msra.mxu0 %v490
    %578 = vmatpush.bf16.msra.mxu0 %v486
    %579 = vmatpush.bf16.msra.mxu0 %v482
    %580 = vmatpush.bf16.msra.mxu0 %v478
    %581 = vmatpush.bf16.msra.mxu0 %v474
    %582 = vmatmul.bf16.gmra.mxu0 %v342
    %v583 = vpop.f32.mrf.mxu0
    %v584 = vadd.f32 0.0, %v583
    %v585 = vpop.f32.mrf.mxu0
    %586 = vdwg.mxu0
    %v619 = vunpack.c.l.b16 %v310
    %v620 = vunpack.c.h.b16 %v310
    %v621 = vunpack.c.l.b16 %v311
    %v622 = vunpack.c.h.b16 %v311
    %v623 = vunpack.c.l.b16 %v312
    %v624 = vunpack.c.h.b16 %v312
    %v625 = vunpack.c.l.b16 %v313
    %v626 = vunpack.c.h.b16 %v313
    %v627 = vunpack.c.l.b16 %v314
    %v628 = vunpack.c.h.b16 %v314
    %v629 = vunpack.c.l.b16 %v315
    %v630 = vunpack.c.h.b16 %v315
    %v631 = vunpack.c.l.b16 %v316
    %v632 = vunpack.c.h.b16 %v316
    %v633 = vunpack.c.l.b16 %v317
    %v634 = vunpack.c.h.b16 %v317
    %v635 = vunpack.c.l.b16 %v318
    %v636 = vunpack.c.h.b16 %v318
    %v637 = vunpack.c.l.b16 %v319
    %v638 = vunpack.c.h.b16 %v319
    %v639 = vunpack.c.l.b16 %v320
    %v640 = vunpack.c.h.b16 %v320
    %v641 = vunpack.c.l.b16 %v321
    %v642 = vunpack.c.h.b16 %v321
    %v643 = vunpack.c.l.b16 %v322
    %v644 = vunpack.c.h.b16 %v322
    %v645 = vunpack.c.l.b16 %v323
    %v646 = vunpack.c.h.b16 %v323
    %v647 = vunpack.c.l.b16 %v324
    %v648 = vunpack.c.h.b16 %v324
    %v649 = vunpack.c.l.b16 %v325
    %v650 = vunpack.c.h.b16 %v325
    %v651 = vunpack.c.l.b16 %v326
    %v652 = vunpack.c.h.b16 %v326
    %v653 = vunpack.c.l.b16 %v327
    %v654 = vunpack.c.h.b16 %v327
    %v655 = vunpack.c.l.b16 %v328
    %v656 = vunpack.c.h.b16 %v328
    %v657 = vunpack.c.l.b16 %v329
    %v658 = vunpack.c.h.b16 %v329
    %v659 = vunpack.c.l.b16 %v330
    %v660 = vunpack.c.h.b16 %v330
    %v661 = vunpack.c.l.b16 %v331
    %v662 = vunpack.c.h.b16 %v331
    %v663 = vunpack.c.l.b16 %v332
    %v664 = vunpack.c.h.b16 %v332
    %v665 = vunpack.c.l.b16 %v333
    %v666 = vunpack.c.h.b16 %v333
    %v667 = vunpack.c.l.b16 %v334
    %v668 = vunpack.c.h.b16 %v334
    %v669 = vunpack.c.l.b16 %v335
    %v670 = vunpack.c.h.b16 %v335
    %v671 = vunpack.c.l.b16 %v336
    %v672 = vunpack.c.h.b16 %v336
    %v673 = vunpack.c.l.b16 %v337
    %v674 = vunpack.c.h.b16 %v337
    %v675 = vunpack.c.l.b16 %v338
    %v676 = vunpack.c.h.b16 %v338
    %v677 = vunpack.c.l.b16 %v339
    %v678 = vunpack.c.h.b16 %v339
    %v679 = vunpack.c.l.b16 %v340
    %v680 = vunpack.c.h.b16 %v340
    %v681 = vunpack.c.l.b16 %v341
    %v682 = vunpack.c.h.b16 %v341
    %v683 = vpack.c.b16 %v623, %v619
    %v684 = vpack.c.b16 %v624, %v620
    %v685 = vpack.c.b16 %v625, %v621
    %v686 = vpack.c.b16 %v626, %v622
    %v687 = vpack.c.b16 %v631, %v627
    %v688 = vpack.c.b16 %v632, %v628
    %v689 = vpack.c.b16 %v633, %v629
    %v690 = vpack.c.b16 %v634, %v630
    %v691 = vpack.c.b16 %v639, %v635
    %v692 = vpack.c.b16 %v640, %v636
    %v693 = vpack.c.b16 %v641, %v637
    %v694 = vpack.c.b16 %v642, %v638
    %v695 = vpack.c.b16 %v647, %v643
    %v696 = vpack.c.b16 %v648, %v644
    %v697 = vpack.c.b16 %v649, %v645
    %v698 = vpack.c.b16 %v650, %v646
    %v699 = vpack.c.b16 %v655, %v651
    %v700 = vpack.c.b16 %v656, %v652
    %v701 = vpack.c.b16 %v657, %v653
    %v702 = vpack.c.b16 %v658, %v654
    %v703 = vpack.c.b16 %v663, %v659
    %v704 = vpack.c.b16 %v664, %v660
    %v705 = vpack.c.b16 %v665, %v661
    %v706 = vpack.c.b16 %v666, %v662
    %v707 = vpack.c.b16 %v671, %v667
    %v708 = vpack.c.b16 %v672, %v668
    %v709 = vpack.c.b16 %v673, %v669
    %v710 = vpack.c.b16 %v674, %v670
    %v711 = vpack.c.b16 %v679, %v675
    %v712 = vpack.c.b16 %v680, %v676
    %v713 = vpack.c.b16 %v681, %v677
    %v714 = vpack.c.b16 %v682, %v678
    %747 = vmatpush.bf16.msra.mxu0 %v711
    %748 = vmatpush.bf16.msra.mxu0 %v707
    %749 = vmatpush.bf16.msra.mxu0 %v703
    %750 = vmatpush.bf16.msra.mxu0 %v699
    %751 = vmatpush.bf16.msra.mxu0 %v695
    %752 = vmatpush.bf16.msra.mxu0 %v691
    %753 = vmatpush.bf16.msra.mxu0 %v687
    %754 = vmatpush.bf16.msra.mxu0 %v683
    %755 = vmatmul.bf16.gmra.mxu0 %v309
    %v756 = vpop.f32.mrf.mxu0
    %v757 = vadd.f32 %v545, %v756
    %v758 = vpop.f32.mrf.mxu0
    %759 = vdwg.mxu0
    %760 = vmatpush.bf16.msra.mxu0 %v712
    %761 = vmatpush.bf16.msra.mxu0 %v708
    %762 = vmatpush.bf16.msra.mxu0 %v704
    %763 = vmatpush.bf16.msra.mxu0 %v700
    %764 = vmatpush.bf16.msra.mxu0 %v696
    %765 = vmatpush.bf16.msra.mxu0 %v692
    %766 = vmatpush.bf16.msra.mxu0 %v688
    %767 = vmatpush.bf16.msra.mxu0 %v684
    %768 = vmatmul.bf16.gmra.mxu0 %v309
    %v769 = vpop.f32.mrf.mxu0
    %v770 = vadd.f32 %v558, %v769
    %v771 = vpop.f32.mrf.mxu0
    %772 = vdwg.mxu0
    %773 = vmatpush.bf16.msra.mxu0 %v713
    %774 = vmatpush.bf16.msra.mxu0 %v709
    %775 = vmatpush.bf16.msra.mxu0 %v705
    %776 = vmatpush.bf16.msra.mxu0 %v701
    %777 = vmatpush.bf16.msra.mxu0 %v697
    %778 = vmatpush.bf16.msra.mxu0 %v693
    %779 = vmatpush.bf16.msra.mxu0 %v689
    %780 = vmatpush.bf16.msra.mxu0 %v685
    %781 = vmatmul.bf16.gmra.mxu0 %v309
    %v782 = vpop.f32.mrf.mxu0
    %v783 = vadd.f32 %v571, %v782
    %v784 = vpop.f32.mrf.mxu0
    %785 = vdwg.mxu0
    %786 = vmatpush.bf16.msra.mxu0 %v714
    %787 = vmatpush.bf16.msra.mxu0 %v710
    %788 = vmatpush.bf16.msra.mxu0 %v706
    %789 = vmatpush.bf16.msra.mxu0 %v702
    %790 = vmatpush.bf16.msra.mxu0 %v698
    %791 = vmatpush.bf16.msra.mxu0 %v694
    %792 = vmatpush.bf16.msra.mxu0 %v690
    %793 = vmatpush.bf16.msra.mxu0 %v686
    %794 = vmatmul.bf16.gmra.mxu0 %v309
    %v795 = vpop.f32.mrf.mxu0
    %v796 = vadd.f32 %v584, %v795
    %v797 = vpop.f32.mrf.mxu0
    %798 = vdwg.mxu0
    %v799 = vld [vmem:[%s7] sm:$0xf]
    %v801 = vperm.slane %v799, 0
    %v802 = vperm.slane %v799, 1
    %v803 = vperm.slane %v799, 2
    %v804 = vperm.slane %v799, 3
    %v809 = vadd.f32 %v757, %v801
    %v810 = vadd.f32 %v770, %v802
    %v811 = vadd.f32 %v783, %v803
    %v812 = vadd.f32 %v796, %v804
    %v813 = vpack.c.bf16 %v810, %v809
    %v814 = vpack.c.bf16 %v812, %v811
    %s815 = scalar_lea.vmem [#allocation2], 16
    %816 = vst [vmem:[%s815] sm:$0xff] %v813
    %817 = vst [vmem:[%s815 + $0x8] sm:$0xff] %v814
    %s818 = scalar_lea.vmem %s0, 8
    %v819 = vld [vmem:[%s818] sm:$0xf]
    %v820 = vld [vmem:[%s4] sm:$0xff]
    %v821 = vld [vmem:[%s4 + $0x8] sm:$0xff]
    %v822 = vld [vmem:[%s4 + $0x10] sm:$0xff]
    %v823 = vld [vmem:[%s4 + $0x18] sm:$0xff]
    %v824 = vld [vmem:[%s4 + $0x20] sm:$0xff]
    %v825 = vld [vmem:[%s4 + $0x28] sm:$0xff]
    %v826 = vld [vmem:[%s4 + $0x30] sm:$0xff]
    %v827 = vld [vmem:[%s4 + $0x38] sm:$0xff]
    %v828 = vld [vmem:[%s4 + $0x40] sm:$0xff]
    %v829 = vld [vmem:[%s4 + $0x48] sm:$0xff]
    %v830 = vld [vmem:[%s4 + $0x50] sm:$0xff]
    %v831 = vld [vmem:[%s4 + $0x58] sm:$0xff]
    %v832 = vld [vmem:[%s4 + $0x60] sm:$0xff]
    %v833 = vld [vmem:[%s4 + $0x68] sm:$0xff]
    %v834 = vld [vmem:[%s4 + $0x70] sm:$0xff]
    %v835 = vld [vmem:[%s4 + $0x78] sm:$0xff]
    %v836 = vld [vmem:[%s4 + $0x80] sm:$0xff]
    %v837 = vld [vmem:[%s4 + $0x88] sm:$0xff]
    %v838 = vld [vmem:[%s4 + $0x90] sm:$0xff]
    %v839 = vld [vmem:[%s4 + $0x98] sm:$0xff]
    %v840 = vld [vmem:[%s4 + $0xa0] sm:$0xff]
    %v841 = vld [vmem:[%s4 + $0xa8] sm:$0xff]
    %v842 = vld [vmem:[%s4 + $0xb0] sm:$0xff]
    %v843 = vld [vmem:[%s4 + $0xb8] sm:$0xff]
    %v844 = vld [vmem:[%s4 + $0xc0] sm:$0xff]
    %v845 = vld [vmem:[%s4 + $0xc8] sm:$0xff]
    %v846 = vld [vmem:[%s4 + $0xd0] sm:$0xff]
    %v847 = vld [vmem:[%s4 + $0xd8] sm:$0xff]
    %v848 = vld [vmem:[%s4 + $0xe0] sm:$0xff]
    %v849 = vld [vmem:[%s4 + $0xe8] sm:$0xff]
    %v850 = vld [vmem:[%s4 + $0xf0] sm:$0xff]
    %v851 = vld [vmem:[%s4 + $0xf8] sm:$0xff]
    %s852 = scalar_lea.vmem %s1, 4
    %v853 = vld [vmem:[%s852] sm:$0xf]
    %v854 = vld [vmem:[%s5] sm:$0xff]
    %v855 = vld [vmem:[%s5 + $0x8] sm:$0xff]
    %v856 = vld [vmem:[%s5 + $0x10] sm:$0xff]
    %v857 = vld [vmem:[%s5 + $0x18] sm:$0xff]
    %v858 = vld [vmem:[%s5 + $0x20] sm:$0xff]
    %v859 = vld [vmem:[%s5 + $0x28] sm:$0xff]
    %v860 = vld [vmem:[%s5 + $0x30] sm:$0xff]
    %v861 = vld [vmem:[%s5 + $0x38] sm:$0xff]
    %v862 = vld [vmem:[%s5 + $0x40] sm:$0xff]
    %v863 = vld [vmem:[%s5 + $0x48] sm:$0xff]
    %v864 = vld [vmem:[%s5 + $0x50] sm:$0xff]
    %v865 = vld [vmem:[%s5 + $0x58] sm:$0xff]
    %v866 = vld [vmem:[%s5 + $0x60] sm:$0xff]
    %v867 = vld [vmem:[%s5 + $0x68] sm:$0xff]
    %v868 = vld [vmem:[%s5 + $0x70] sm:$0xff]
    %v869 = vld [vmem:[%s5 + $0x78] sm:$0xff]
    %v870 = vld [vmem:[%s5 + $0x80] sm:$0xff]
    %v871 = vld [vmem:[%s5 + $0x88] sm:$0xff]
    %v872 = vld [vmem:[%s5 + $0x90] sm:$0xff]
    %v873 = vld [vmem:[%s5 + $0x98] sm:$0xff]
    %v874 = vld [vmem:[%s5 + $0xa0] sm:$0xff]
    %v875 = vld [vmem:[%s5 + $0xa8] sm:$0xff]
    %v876 = vld [vmem:[%s5 + $0xb0] sm:$0xff]
    %v877 = vld [vmem:[%s5 + $0xb8] sm:$0xff]
    %v878 = vld [vmem:[%s5 + $0xc0] sm:$0xff]
    %v879 = vld [vmem:[%s5 + $0xc8] sm:$0xff]
    %v880 = vld [vmem:[%s5 + $0xd0] sm:$0xff]
    %v881 = vld [vmem:[%s5 + $0xd8] sm:$0xff]
    %v882 = vld [vmem:[%s5 + $0xe0] sm:$0xff]
    %v883 = vld [vmem:[%s5 + $0xe8] sm:$0xff]
    %v884 = vld [vmem:[%s5 + $0xf0] sm:$0xff]
    %v885 = vld [vmem:[%s5 + $0xf8] sm:$0xff]
    %v918 = vunpack.c.l.b16 %v854
    %v919 = vunpack.c.h.b16 %v854
    %v920 = vunpack.c.l.b16 %v855
    %v921 = vunpack.c.h.b16 %v855
    %v922 = vunpack.c.l.b16 %v856
    %v923 = vunpack.c.h.b16 %v856
    %v924 = vunpack.c.l.b16 %v857
    %v925 = vunpack.c.h.b16 %v857
    %v926 = vunpack.c.l.b16 %v858
    %v927 = vunpack.c.h.b16 %v858
    %v928 = vunpack.c.l.b16 %v859
    %v929 = vunpack.c.h.b16 %v859
    %v930 = vunpack.c.l.b16 %v860
    %v931 = vunpack.c.h.b16 %v860
    %v932 = vunpack.c.l.b16 %v861
    %v933 = vunpack.c.h.b16 %v861
    %v934 = vunpack.c.l.b16 %v862
    %v935 = vunpack.c.h.b16 %v862
    %v936 = vunpack.c.l.b16 %v863
    %v937 = vunpack.c.h.b16 %v863
    %v938 = vunpack.c.l.b16 %v864
    %v939 = vunpack.c.h.b16 %v864
    %v940 = vunpack.c.l.b16 %v865
    %v941 = vunpack.c.h.b16 %v865
    %v942 = vunpack.c.l.b16 %v866
    %v943 = vunpack.c.h.b16 %v866
    %v944 = vunpack.c.l.b16 %v867
    %v945 = vunpack.c.h.b16 %v867
    %v946 = vunpack.c.l.b16 %v868
    %v947 = vunpack.c.h.b16 %v868
    %v948 = vunpack.c.l.b16 %v869
    %v949 = vunpack.c.h.b16 %v869
    %v950 = vunpack.c.l.b16 %v870
    %v951 = vunpack.c.h.b16 %v870
    %v952 = vunpack.c.l.b16 %v871
    %v953 = vunpack.c.h.b16 %v871
    %v954 = vunpack.c.l.b16 %v872
    %v955 = vunpack.c.h.b16 %v872
    %v956 = vunpack.c.l.b16 %v873
    %v957 = vunpack.c.h.b16 %v873
    %v958 = vunpack.c.l.b16 %v874
    %v959 = vunpack.c.h.b16 %v874
    %v960 = vunpack.c.l.b16 %v875
    %v961 = vunpack.c.h.b16 %v875
    %v962 = vunpack.c.l.b16 %v876
    %v963 = vunpack.c.h.b16 %v876
    %v964 = vunpack.c.l.b16 %v877
    %v965 = vunpack.c.h.b16 %v877
    %v966 = vunpack.c.l.b16 %v878
    %v967 = vunpack.c.h.b16 %v878
    %v968 = vunpack.c.l.b16 %v879
    %v969 = vunpack.c.h.b16 %v879
    %v970 = vunpack.c.l.b16 %v880
    %v971 = vunpack.c.h.b16 %v880
    %v972 = vunpack.c.l.b16 %v881
    %v973 = vunpack.c.h.b16 %v881
    %v974 = vunpack.c.l.b16 %v882
    %v975 = vunpack.c.h.b16 %v882
    %v976 = vunpack.c.l.b16 %v883
    %v977 = vunpack.c.h.b16 %v883
    %v978 = vunpack.c.l.b16 %v884
    %v979 = vunpack.c.h.b16 %v884
    %v980 = vunpack.c.l.b16 %v885
    %v981 = vunpack.c.h.b16 %v885
    %v982 = vpack.c.b16 %v922, %v918
    %v983 = vpack.c.b16 %v923, %v919
    %v984 = vpack.c.b16 %v924, %v920
    %v985 = vpack.c.b16 %v925, %v921
    %v986 = vpack.c.b16 %v930, %v926
    %v987 = vpack.c.b16 %v931, %v927
    %v988 = vpack.c.b16 %v932, %v928
    %v989 = vpack.c.b16 %v933, %v929
    %v990 = vpack.c.b16 %v938, %v934
    %v991 = vpack.c.b16 %v939, %v935
    %v992 = vpack.c.b16 %v940, %v936
    %v993 = vpack.c.b16 %v941, %v937
    %v994 = vpack.c.b16 %v946, %v942
    %v995 = vpack.c.b16 %v947, %v943
    %v996 = vpack.c.b16 %v948, %v944
    %v997 = vpack.c.b16 %v949, %v945
    %v998 = vpack.c.b16 %v954, %v950
    %v999 = vpack.c.b16 %v955, %v951
    %v1000 = vpack.c.b16 %v956, %v952
    %v1001 = vpack.c.b16 %v957, %v953
    %v1002 = vpack.c.b16 %v962, %v958
    %v1003 = vpack.c.b16 %v963, %v959
    %v1004 = vpack.c.b16 %v964, %v960
    %v1005 = vpack.c.b16 %v965, %v961
    %v1006 = vpack.c.b16 %v970, %v966
    %v1007 = vpack.c.b16 %v971, %v967
    %v1008 = vpack.c.b16 %v972, %v968
    %v1009 = vpack.c.b16 %v973, %v969
    %v1010 = vpack.c.b16 %v978, %v974
    %v1011 = vpack.c.b16 %v979, %v975
    %v1012 = vpack.c.b16 %v980, %v976
    %v1013 = vpack.c.b16 %v981, %v977
    %1046 = vmatpush.bf16.msra.mxu0 %v1010
    %1047 = vmatpush.bf16.msra.mxu0 %v1006
    %1048 = vmatpush.bf16.msra.mxu0 %v1002
    %1049 = vmatpush.bf16.msra.mxu0 %v998
    %1050 = vmatpush.bf16.msra.mxu0 %v994
    %1051 = vmatpush.bf16.msra.mxu0 %v990
    %1052 = vmatpush.bf16.msra.mxu0 %v986
    %1053 = vmatpush.bf16.msra.mxu0 %v982
    %1054 = vmatmul.bf16.gmra.mxu0 %v853
    %v1055 = vpop.f32.mrf.mxu0
    %v1056 = vadd.f32 0.0, %v1055
    %v1057 = vpop.f32.mrf.mxu0
    %1058 = vdwg.mxu0
    %1059 = vmatpush.bf16.msra.mxu0 %v1011
    %1060 = vmatpush.bf16.msra.mxu0 %v1007
    %1061 = vmatpush.bf16.msra.mxu0 %v1003
    %1062 = vmatpush.bf16.msra.mxu0 %v999
    %1063 = vmatpush.bf16.msra.mxu0 %v995
    %1064 = vmatpush.bf16.msra.mxu0 %v991
    %1065 = vmatpush.bf16.msra.mxu0 %v987
    %1066 = vmatpush.bf16.msra.mxu0 %v983
    %1067 = vmatmul.bf16.gmra.mxu0 %v853
    %v1068 = vpop.f32.mrf.mxu0
    %v1069 = vadd.f32 0.0, %v1068
    %v1070 = vpop.f32.mrf.mxu0
    %1071 = vdwg.mxu0
    %1072 = vmatpush.bf16.msra.mxu0 %v1012
    %1073 = vmatpush.bf16.msra.mxu0 %v1008
    %1074 = vmatpush.bf16.msra.mxu0 %v1004
    %1075 = vmatpush.bf16.msra.mxu0 %v1000
    %1076 = vmatpush.bf16.msra.mxu0 %v996
    %1077 = vmatpush.bf16.msra.mxu0 %v992
    %1078 = vmatpush.bf16.msra.mxu0 %v988
    %1079 = vmatpush.bf16.msra.mxu0 %v984
    %1080 = vmatmul.bf16.gmra.mxu0 %v853
    %v1081 = vpop.f32.mrf.mxu0
    %v1082 = vadd.f32 0.0, %v1081
    %v1083 = vpop.f32.mrf.mxu0
    %1084 = vdwg.mxu0
    %1085 = vmatpush.bf16.msra.mxu0 %v1013
    %1086 = vmatpush.bf16.msra.mxu0 %v1009
    %1087 = vmatpush.bf16.msra.mxu0 %v1005
    %1088 = vmatpush.bf16.msra.mxu0 %v1001
    %1089 = vmatpush.bf16.msra.mxu0 %v997
    %1090 = vmatpush.bf16.msra.mxu0 %v993
    %1091 = vmatpush.bf16.msra.mxu0 %v989
    %1092 = vmatpush.bf16.msra.mxu0 %v985
    %1093 = vmatmul.bf16.gmra.mxu0 %v853
    %v1094 = vpop.f32.mrf.mxu0
    %v1095 = vadd.f32 0.0, %v1094
    %v1096 = vpop.f32.mrf.mxu0
    %1097 = vdwg.mxu0
    %v1130 = vunpack.c.l.b16 %v820
    %v1131 = vunpack.c.h.b16 %v820
    %v1132 = vunpack.c.l.b16 %v821
    %v1133 = vunpack.c.h.b16 %v821
    %v1134 = vunpack.c.l.b16 %v822
    %v1135 = vunpack.c.h.b16 %v822
    %v1136 = vunpack.c.l.b16 %v823
    %v1137 = vunpack.c.h.b16 %v823
    %v1138 = vunpack.c.l.b16 %v824
    %v1139 = vunpack.c.h.b16 %v824
    %v1140 = vunpack.c.l.b16 %v825
    %v1141 = vunpack.c.h.b16 %v825
    %v1142 = vunpack.c.l.b16 %v826
    %v1143 = vunpack.c.h.b16 %v826
    %v1144 = vunpack.c.l.b16 %v827
    %v1145 = vunpack.c.h.b16 %v827
    %v1146 = vunpack.c.l.b16 %v828
    %v1147 = vunpack.c.h.b16 %v828
    %v1148 = vunpack.c.l.b16 %v829
    %v1149 = vunpack.c.h.b16 %v829
    %v1150 = vunpack.c.l.b16 %v830
    %v1151 = vunpack.c.h.b16 %v830
    %v1152 = vunpack.c.l.b16 %v831
    %v1153 = vunpack.c.h.b16 %v831
    %v1154 = vunpack.c.l.b16 %v832
    %v1155 = vunpack.c.h.b16 %v832
    %v1156 = vunpack.c.l.b16 %v833
    %v1157 = vunpack.c.h.b16 %v833
    %v1158 = vunpack.c.l.b16 %v834
    %v1159 = vunpack.c.h.b16 %v834
    %v1160 = vunpack.c.l.b16 %v835
    %v1161 = vunpack.c.h.b16 %v835
    %v1162 = vunpack.c.l.b16 %v836
    %v1163 = vunpack.c.h.b16 %v836
    %v1164 = vunpack.c.l.b16 %v837
    %v1165 = vunpack.c.h.b16 %v837
    %v1166 = vunpack.c.l.b16 %v838
    %v1167 = vunpack.c.h.b16 %v838
    %v1168 = vunpack.c.l.b16 %v839
    %v1169 = vunpack.c.h.b16 %v839
    %v1170 = vunpack.c.l.b16 %v840
    %v1171 = vunpack.c.h.b16 %v840
    %v1172 = vunpack.c.l.b16 %v841
    %v1173 = vunpack.c.h.b16 %v841
    %v1174 = vunpack.c.l.b16 %v842
    %v1175 = vunpack.c.h.b16 %v842
    %v1176 = vunpack.c.l.b16 %v843
    %v1177 = vunpack.c.h.b16 %v843
    %v1178 = vunpack.c.l.b16 %v844
    %v1179 = vunpack.c.h.b16 %v844
    %v1180 = vunpack.c.l.b16 %v845
    %v1181 = vunpack.c.h.b16 %v845
    %v1182 = vunpack.c.l.b16 %v846
    %v1183 = vunpack.c.h.b16 %v846
    %v1184 = vunpack.c.l.b16 %v847
    %v1185 = vunpack.c.h.b16 %v847
    %v1186 = vunpack.c.l.b16 %v848
    %v1187 = vunpack.c.h.b16 %v848
    %v1188 = vunpack.c.l.b16 %v849
    %v1189 = vunpack.c.h.b16 %v849
    %v1190 = vunpack.c.l.b16 %v850
    %v1191 = vunpack.c.h.b16 %v850
    %v1192 = vunpack.c.l.b16 %v851
    %v1193 = vunpack.c.h.b16 %v851
    %v1194 = vpack.c.b16 %v1134, %v1130
    %v1195 = vpack.c.b16 %v1135, %v1131
    %v1196 = vpack.c.b16 %v1136, %v1132
    %v1197 = vpack.c.b16 %v1137, %v1133
    %v1198 = vpack.c.b16 %v1142, %v1138
    %v1199 = vpack.c.b16 %v1143, %v1139
    %v1200 = vpack.c.b16 %v1144, %v1140
    %v1201 = vpack.c.b16 %v1145, %v1141
    %v1202 = vpack.c.b16 %v1150, %v1146
    %v1203 = vpack.c.b16 %v1151, %v1147
    %v1204 = vpack.c.b16 %v1152, %v1148
    %v1205 = vpack.c.b16 %v1153, %v1149
    %v1206 = vpack.c.b16 %v1158, %v1154
    %v1207 = vpack.c.b16 %v1159, %v1155
    %v1208 = vpack.c.b16 %v1160, %v1156
    %v1209 = vpack.c.b16 %v1161, %v1157
    %v1210 = vpack.c.b16 %v1166, %v1162
    %v1211 = vpack.c.b16 %v1167, %v1163
    %v1212 = vpack.c.b16 %v1168, %v1164
    %v1213 = vpack.c.b16 %v1169, %v1165
    %v1214 = vpack.c.b16 %v1174, %v1170
    %v1215 = vpack.c.b16 %v1175, %v1171
    %v1216 = vpack.c.b16 %v1176, %v1172
    %v1217 = vpack.c.b16 %v1177, %v1173
    %v1218 = vpack.c.b16 %v1182, %v1178
    %v1219 = vpack.c.b16 %v1183, %v1179
    %v1220 = vpack.c.b16 %v1184, %v1180
    %v1221 = vpack.c.b16 %v1185, %v1181
    %v1222 = vpack.c.b16 %v1190, %v1186
    %v1223 = vpack.c.b16 %v1191, %v1187
    %v1224 = vpack.c.b16 %v1192, %v1188
    %v1225 = vpack.c.b16 %v1193, %v1189
    %1258 = vmatpush.bf16.msra.mxu0 %v1222
    %1259 = vmatpush.bf16.msra.mxu0 %v1218
    %1260 = vmatpush.bf16.msra.mxu0 %v1214
    %1261 = vmatpush.bf16.msra.mxu0 %v1210
    %1262 = vmatpush.bf16.msra.mxu0 %v1206
    %1263 = vmatpush.bf16.msra.mxu0 %v1202
    %1264 = vmatpush.bf16.msra.mxu0 %v1198
    %1265 = vmatpush.bf16.msra.mxu0 %v1194
    %1266 = vmatmul.bf16.gmra.mxu0 %v819
    %v1267 = vpop.f32.mrf.mxu0
    %v1268 = vadd.f32 %v1056, %v1267
    %v1269 = vpop.f32.mrf.mxu0
    %1270 = vdwg.mxu0
    %1271 = vmatpush.bf16.msra.mxu0 %v1223
    %1272 = vmatpush.bf16.msra.mxu0 %v1219
    %1273 = vmatpush.bf16.msra.mxu0 %v1215
    %1274 = vmatpush.bf16.msra.mxu0 %v1211
    %1275 = vmatpush.bf16.msra.mxu0 %v1207
    %1276 = vmatpush.bf16.msra.mxu0 %v1203
    %1277 = vmatpush.bf16.msra.mxu0 %v1199
    %1278 = vmatpush.bf16.msra.mxu0 %v1195
    %1279 = vmatmul.bf16.gmra.mxu0 %v819
    %v1280 = vpop.f32.mrf.mxu0
    %v1281 = vadd.f32 %v1069, %v1280
    %v1282 = vpop.f32.mrf.mxu0
    %1283 = vdwg.mxu0
    %1284 = vmatpush.bf16.msra.mxu0 %v1224
    %1285 = vmatpush.bf16.msra.mxu0 %v1220
    %1286 = vmatpush.bf16.msra.mxu0 %v1216
    %1287 = vmatpush.bf16.msra.mxu0 %v1212
    %1288 = vmatpush.bf16.msra.mxu0 %v1208
    %1289 = vmatpush.bf16.msra.mxu0 %v1204
    %1290 = vmatpush.bf16.msra.mxu0 %v1200
    %1291 = vmatpush.bf16.msra.mxu0 %v1196
    %1292 = vmatmul.bf16.gmra.mxu0 %v819
    %v1293 = vpop.f32.mrf.mxu0
    %v1294 = vadd.f32 %v1082, %v1293
    %v1295 = vpop.f32.mrf.mxu0
    %1296 = vdwg.mxu0
    %1297 = vmatpush.bf16.msra.mxu0 %v1225
    %1298 = vmatpush.bf16.msra.mxu0 %v1221
    %1299 = vmatpush.bf16.msra.mxu0 %v1217
    %1300 = vmatpush.bf16.msra.mxu0 %v1213
    %1301 = vmatpush.bf16.msra.mxu0 %v1209
    %1302 = vmatpush.bf16.msra.mxu0 %v1205
    %1303 = vmatpush.bf16.msra.mxu0 %v1201
    %1304 = vmatpush.bf16.msra.mxu0 %v1197
    %1305 = vmatmul.bf16.gmra.mxu0 %v819
    %v1306 = vpop.f32.mrf.mxu0
    %v1307 = vadd.f32 %v1095, %v1306
    %v1308 = vpop.f32.mrf.mxu0
    %1309 = vdwg.mxu0
    %v1310 = vld [vmem:[%s7] sm:$0xf]
    %v1312 = vperm.slane %v1310, 0
    %v1313 = vperm.slane %v1310, 1
    %v1314 = vperm.slane %v1310, 2
    %v1315 = vperm.slane %v1310, 3
    %v1320 = vadd.f32 %v1268, %v1312
    %v1321 = vadd.f32 %v1281, %v1313
    %v1322 = vadd.f32 %v1294, %v1314
    %v1323 = vadd.f32 %v1307, %v1315
    %v1324 = vpack.c.bf16 %v1321, %v1320
    %v1325 = vpack.c.bf16 %v1323, %v1322
    %s1326 = scalar_lea.vmem [#allocation2], 32
    %1327 = vst [vmem:[%s1326] sm:$0xff] %v1324
    %1328 = vst [vmem:[%s1326 + $0x8] sm:$0xff] %v1325
    %s1329 = scalar_lea.vmem %s0, 12
    %v1330 = vld [vmem:[%s1329] sm:$0xf]
    %v1331 = vld [vmem:[%s4] sm:$0xff]
    %v1332 = vld [vmem:[%s4 + $0x8] sm:$0xff]
    %v1333 = vld [vmem:[%s4 + $0x10] sm:$0xff]
    %v1334 = vld [vmem:[%s4 + $0x18] sm:$0xff]
    %v1335 = vld [vmem:[%s4 + $0x20] sm:$0xff]
    %v1336 = vld [vmem:[%s4 + $0x28] sm:$0xff]
    %v1337 = vld [vmem:[%s4 + $0x30] sm:$0xff]
    %v1338 = vld [vmem:[%s4 + $0x38] sm:$0xff]
    %v1339 = vld [vmem:[%s4 + $0x40] sm:$0xff]
    %v1340 = vld [vmem:[%s4 + $0x48] sm:$0xff]
    %v1341 = vld [vmem:[%s4 + $0x50] sm:$0xff]
    %v1342 = vld [vmem:[%s4 + $0x58] sm:$0xff]
    %v1343 = vld [vmem:[%s4 + $0x60] sm:$0xff]
    %v1344 = vld [vmem:[%s4 + $0x68] sm:$0xff]
    %v1345 = vld [vmem:[%s4 + $0x70] sm:$0xff]
    %v1346 = vld [vmem:[%s4 + $0x78] sm:$0xff]
    %v1347 = vld [vmem:[%s4 + $0x80] sm:$0xff]
    %v1348 = vld [vmem:[%s4 + $0x88] sm:$0xff]
    %v1349 = vld [vmem:[%s4 + $0x90] sm:$0xff]
    %v1350 = vld [vmem:[%s4 + $0x98] sm:$0xff]
    %v1351 = vld [vmem:[%s4 + $0xa0] sm:$0xff]
    %v1352 = vld [vmem:[%s4 + $0xa8] sm:$0xff]
    %v1353 = vld [vmem:[%s4 + $0xb0] sm:$0xff]
    %v1354 = vld [vmem:[%s4 + $0xb8] sm:$0xff]
    %v1355 = vld [vmem:[%s4 + $0xc0] sm:$0xff]
    %v1356 = vld [vmem:[%s4 + $0xc8] sm:$0xff]
    %v1357 = vld [vmem:[%s4 + $0xd0] sm:$0xff]
    %v1358 = vld [vmem:[%s4 + $0xd8] sm:$0xff]
    %v1359 = vld [vmem:[%s4 + $0xe0] sm:$0xff]
    %v1360 = vld [vmem:[%s4 + $0xe8] sm:$0xff]
    %v1361 = vld [vmem:[%s4 + $0xf0] sm:$0xff]
    %v1362 = vld [vmem:[%s4 + $0xf8] sm:$0xff]
    %s1363 = scalar_lea.vmem %s1, 8
    %v1364 = vld [vmem:[%s1363] sm:$0xf]
    %v1365 = vld [vmem:[%s5] sm:$0xff]
    %v1366 = vld [vmem:[%s5 + $0x8] sm:$0xff]
    %v1367 = vld [vmem:[%s5 + $0x10] sm:$0xff]
    %v1368 = vld [vmem:[%s5 + $0x18] sm:$0xff]
    %v1369 = vld [vmem:[%s5 + $0x20] sm:$0xff]
    %v1370 = vld [vmem:[%s5 + $0x28] sm:$0xff]
    %v1371 = vld [vmem:[%s5 + $0x30] sm:$0xff]
    %v1372 = vld [vmem:[%s5 + $0x38] sm:$0xff]
    %v1373 = vld [vmem:[%s5 + $0x40] sm:$0xff]
    %v1374 = vld [vmem:[%s5 + $0x48] sm:$0xff]
    %v1375 = vld [vmem:[%s5 + $0x50] sm:$0xff]
    %v1376 = vld [vmem:[%s5 + $0x58] sm:$0xff]
    %v1377 = vld [vmem:[%s5 + $0x60] sm:$0xff]
    %v1378 = vld [vmem:[%s5 + $0x68] sm:$0xff]
    %v1379 = vld [vmem:[%s5 + $0x70] sm:$0xff]
    %v1380 = vld [vmem:[%s5 + $0x78] sm:$0xff]
    %v1381 = vld [vmem:[%s5 + $0x80] sm:$0xff]
    %v1382 = vld [vmem:[%s5 + $0x88] sm:$0xff]
    %v1383 = vld [vmem:[%s5 + $0x90] sm:$0xff]
    %v1384 = vld [vmem:[%s5 + $0x98] sm:$0xff]
    %v1385 = vld [vmem:[%s5 + $0xa0] sm:$0xff]
    %v1386 = vld [vmem:[%s5 + $0xa8] sm:$0xff]
    %v1387 = vld [vmem:[%s5 + $0xb0] sm:$0xff]
    %v1388 = vld [vmem:[%s5 + $0xb8] sm:$0xff]
    %v1389 = vld [vmem:[%s5 + $0xc0] sm:$0xff]
    %v1390 = vld [vmem:[%s5 + $0xc8] sm:$0xff]
    %v1391 = vld [vmem:[%s5 + $0xd0] sm:$0xff]
    %v1392 = vld [vmem:[%s5 + $0xd8] sm:$0xff]
    %v1393 = vld [vmem:[%s5 + $0xe0] sm:$0xff]
    %v1394 = vld [vmem:[%s5 + $0xe8] sm:$0xff]
    %v1395 = vld [vmem:[%s5 + $0xf0] sm:$0xff]
    %v1396 = vld [vmem:[%s5 + $0xf8] sm:$0xff]
    %v1429 = vunpack.c.l.b16 %v1365
    %v1430 = vunpack.c.h.b16 %v1365
    %v1431 = vunpack.c.l.b16 %v1366
    %v1432 = vunpack.c.h.b16 %v1366
    %v1433 = vunpack.c.l.b16 %v1367
    %v1434 = vunpack.c.h.b16 %v1367
    %v1435 = vunpack.c.l.b16 %v1368
    %v1436 = vunpack.c.h.b16 %v1368
    %v1437 = vunpack.c.l.b16 %v1369
    %v1438 = vunpack.c.h.b16 %v1369
    %v1439 = vunpack.c.l.b16 %v1370
    %v1440 = vunpack.c.h.b16 %v1370
    %v1441 = vunpack.c.l.b16 %v1371
    %v1442 = vunpack.c.h.b16 %v1371
    %v1443 = vunpack.c.l.b16 %v1372
    %v1444 = vunpack.c.h.b16 %v1372
    %v1445 = vunpack.c.l.b16 %v1373
    %v1446 = vunpack.c.h.b16 %v1373
    %v1447 = vunpack.c.l.b16 %v1374
    %v1448 = vunpack.c.h.b16 %v1374
    %v1449 = vunpack.c.l.b16 %v1375
    %v1450 = vunpack.c.h.b16 %v1375
    %v1451 = vunpack.c.l.b16 %v1376
    %v1452 = vunpack.c.h.b16 %v1376
    %v1453 = vunpack.c.l.b16 %v1377
    %v1454 = vunpack.c.h.b16 %v1377
    %v1455 = vunpack.c.l.b16 %v1378
    %v1456 = vunpack.c.h.b16 %v1378
    %v1457 = vunpack.c.l.b16 %v1379
    %v1458 = vunpack.c.h.b16 %v1379
    %v1459 = vunpack.c.l.b16 %v1380
    %v1460 = vunpack.c.h.b16 %v1380
    %v1461 = vunpack.c.l.b16 %v1381
    %v1462 = vunpack.c.h.b16 %v1381
    %v1463 = vunpack.c.l.b16 %v1382
    %v1464 = vunpack.c.h.b16 %v1382
    %v1465 = vunpack.c.l.b16 %v1383
    %v1466 = vunpack.c.h.b16 %v1383
    %v1467 = vunpack.c.l.b16 %v1384
    %v1468 = vunpack.c.h.b16 %v1384
    %v1469 = vunpack.c.l.b16 %v1385
    %v1470 = vunpack.c.h.b16 %v1385
    %v1471 = vunpack.c.l.b16 %v1386
    %v1472 = vunpack.c.h.b16 %v1386
    %v1473 = vunpack.c.l.b16 %v1387
    %v1474 = vunpack.c.h.b16 %v1387
    %v1475 = vunpack.c.l.b16 %v1388
    %v1476 = vunpack.c.h.b16 %v1388
    %v1477 = vunpack.c.l.b16 %v1389
    %v1478 = vunpack.c.h.b16 %v1389
    %v1479 = vunpack.c.l.b16 %v1390
    %v1480 = vunpack.c.h.b16 %v1390
    %v1481 = vunpack.c.l.b16 %v1391
    %v1482 = vunpack.c.h.b16 %v1391
    %v1483 = vunpack.c.l.b16 %v1392
    %v1484 = vunpack.c.h.b16 %v1392
    %v1485 = vunpack.c.l.b16 %v1393
    %v1486 = vunpack.c.h.b16 %v1393
    %v1487 = vunpack.c.l.b16 %v1394
    %v1488 = vunpack.c.h.b16 %v1394
    %v1489 = vunpack.c.l.b16 %v1395
    %v1490 = vunpack.c.h.b16 %v1395
    %v1491 = vunpack.c.l.b16 %v1396
    %v1492 = vunpack.c.h.b16 %v1396
    %v1493 = vpack.c.b16 %v1433, %v1429
    %v1494 = vpack.c.b16 %v1434, %v1430
    %v1495 = vpack.c.b16 %v1435, %v1431
    %v1496 = vpack.c.b16 %v1436, %v1432
    %v1497 = vpack.c.b16 %v1441, %v1437
    %v1498 = vpack.c.b16 %v1442, %v1438
    %v1499 = vpack.c.b16 %v1443, %v1439
    %v1500 = vpack.c.b16 %v1444, %v1440
    %v1501 = vpack.c.b16 %v1449, %v1445
    %v1502 = vpack.c.b16 %v1450, %v1446
    %v1503 = vpack.c.b16 %v1451, %v1447
    %v1504 = vpack.c.b16 %v1452, %v1448
    %v1505 = vpack.c.b16 %v1457, %v1453
    %v1506 = vpack.c.b16 %v1458, %v1454
    %v1507 = vpack.c.b16 %v1459, %v1455
    %v1508 = vpack.c.b16 %v1460, %v1456
    %v1509 = vpack.c.b16 %v1465, %v1461
    %v1510 = vpack.c.b16 %v1466, %v1462
    %v1511 = vpack.c.b16 %v1467, %v1463
    %v1512 = vpack.c.b16 %v1468, %v1464
    %v1513 = vpack.c.b16 %v1473, %v1469
    %v1514 = vpack.c.b16 %v1474, %v1470
    %v1515 = vpack.c.b16 %v1475, %v1471
    %v1516 = vpack.c.b16 %v1476, %v1472
    %v1517 = vpack.c.b16 %v1481, %v1477
    %v1518 = vpack.c.b16 %v1482, %v1478
    %v1519 = vpack.c.b16 %v1483, %v1479
    %v1520 = vpack.c.b16 %v1484, %v1480
    %v1521 = vpack.c.b16 %v1489, %v1485
    %v1522 = vpack.c.b16 %v1490, %v1486
    %v1523 = vpack.c.b16 %v1491, %v1487
    %v1524 = vpack.c.b16 %v1492, %v1488
    %1557 = vmatpush.bf16.msra.mxu0 %v1521
    %1558 = vmatpush.bf16.msra.mxu0 %v1517
    %1559 = vmatpush.bf16.msra.mxu0 %v1513
    %1560 = vmatpush.bf16.msra.mxu0 %v1509
    %1561 = vmatpush.bf16.msra.mxu0 %v1505
    %1562 = vmatpush.bf16.msra.mxu0 %v1501
    %1563 = vmatpush.bf16.msra.mxu0 %v1497
    %1564 = vmatpush.bf16.msra.mxu0 %v1493
    %1565 = vmatmul.bf16.gmra.mxu0 %v1364
    %v1566 = vpop.f32.mrf.mxu0
    %v1567 = vadd.f32 0.0, %v1566
    %v1568 = vpop.f32.mrf.mxu0
    %1569 = vdwg.mxu0
    %1570 = vmatpush.bf16.msra.mxu0 %v1522
    %1571 = vmatpush.bf16.msra.mxu0 %v1518
    %1572 = vmatpush.bf16.msra.mxu0 %v1514
    %1573 = vmatpush.bf16.msra.mxu0 %v1510
    %1574 = vmatpush.bf16.msra.mxu0 %v1506
    %1575 = vmatpush.bf16.msra.mxu0 %v1502
    %1576 = vmatpush.bf16.msra.mxu0 %v1498
    %1577 = vmatpush.bf16.msra.mxu0 %v1494
    %1578 = vmatmul.bf16.gmra.mxu0 %v1364
    %v1579 = vpop.f32.mrf.mxu0
    %v1580 = vadd.f32 0.0, %v1579
    %v1581 = vpop.f32.mrf.mxu0
    %1582 = vdwg.mxu0
    %1583 = vmatpush.bf16.msra.mxu0 %v1523
    %1584 = vmatpush.bf16.msra.mxu0 %v1519
    %1585 = vmatpush.bf16.msra.mxu0 %v1515
    %1586 = vmatpush.bf16.msra.mxu0 %v1511
    %1587 = vmatpush.bf16.msra.mxu0 %v1507
    %1588 = vmatpush.bf16.msra.mxu0 %v1503
    %1589 = vmatpush.bf16.msra.mxu0 %v1499
    %1590 = vmatpush.bf16.msra.mxu0 %v1495
    %1591 = vmatmul.bf16.gmra.mxu0 %v1364
    %v1592 = vpop.f32.mrf.mxu0
    %v1593 = vadd.f32 0.0, %v1592
    %v1594 = vpop.f32.mrf.mxu0
    %1595 = vdwg.mxu0
    %1596 = vmatpush.bf16.msra.mxu0 %v1524
    %1597 = vmatpush.bf16.msra.mxu0 %v1520
    %1598 = vmatpush.bf16.msra.mxu0 %v1516
    %1599 = vmatpush.bf16.msra.mxu0 %v1512
    %1600 = vmatpush.bf16.msra.mxu0 %v1508
    %1601 = vmatpush.bf16.msra.mxu0 %v1504
    %1602 = vmatpush.bf16.msra.mxu0 %v1500
    %1603 = vmatpush.bf16.msra.mxu0 %v1496
    %1604 = vmatmul.bf16.gmra.mxu0 %v1364
    %v1605 = vpop.f32.mrf.mxu0
    %v1606 = vadd.f32 0.0, %v1605
    %v1607 = vpop.f32.mrf.mxu0
    %1608 = vdwg.mxu0
    %v1641 = vunpack.c.l.b16 %v1331
    %v1642 = vunpack.c.h.b16 %v1331
    %v1643 = vunpack.c.l.b16 %v1332
    %v1644 = vunpack.c.h.b16 %v1332
    %v1645 = vunpack.c.l.b16 %v1333
    %v1646 = vunpack.c.h.b16 %v1333
    %v1647 = vunpack.c.l.b16 %v1334
    %v1648 = vunpack.c.h.b16 %v1334
    %v1649 = vunpack.c.l.b16 %v1335
    %v1650 = vunpack.c.h.b16 %v1335
    %v1651 = vunpack.c.l.b16 %v1336
    %v1652 = vunpack.c.h.b16 %v1336
    %v1653 = vunpack.c.l.b16 %v1337
    %v1654 = vunpack.c.h.b16 %v1337
    %v1655 = vunpack.c.l.b16 %v1338
    %v1656 = vunpack.c.h.b16 %v1338
    %v1657 = vunpack.c.l.b16 %v1339
    %v1658 = vunpack.c.h.b16 %v1339
    %v1659 = vunpack.c.l.b16 %v1340
    %v1660 = vunpack.c.h.b16 %v1340
    %v1661 = vunpack.c.l.b16 %v1341
    %v1662 = vunpack.c.h.b16 %v1341
    %v1663 = vunpack.c.l.b16 %v1342
    %v1664 = vunpack.c.h.b16 %v1342
    %v1665 = vunpack.c.l.b16 %v1343
    %v1666 = vunpack.c.h.b16 %v1343
    %v1667 = vunpack.c.l.b16 %v1344
    %v1668 = vunpack.c.h.b16 %v1344
    %v1669 = vunpack.c.l.b16 %v1345
    %v1670 = vunpack.c.h.b16 %v1345
    %v1671 = vunpack.c.l.b16 %v1346
    %v1672 = vunpack.c.h.b16 %v1346
    %v1673 = vunpack.c.l.b16 %v1347
    %v1674 = vunpack.c.h.b16 %v1347
    %v1675 = vunpack.c.l.b16 %v1348
    %v1676 = vunpack.c.h.b16 %v1348
    %v1677 = vunpack.c.l.b16 %v1349
    %v1678 = vunpack.c.h.b16 %v1349
    %v1679 = vunpack.c.l.b16 %v1350
    %v1680 = vunpack.c.h.b16 %v1350
    %v1681 = vunpack.c.l.b16 %v1351
    %v1682 = vunpack.c.h.b16 %v1351
    %v1683 = vunpack.c.l.b16 %v1352
    %v1684 = vunpack.c.h.b16 %v1352
    %v1685 = vunpack.c.l.b16 %v1353
    %v1686 = vunpack.c.h.b16 %v1353
    %v1687 = vunpack.c.l.b16 %v1354
    %v1688 = vunpack.c.h.b16 %v1354
    %v1689 = vunpack.c.l.b16 %v1355
    %v1690 = vunpack.c.h.b16 %v1355
    %v1691 = vunpack.c.l.b16 %v1356
    %v1692 = vunpack.c.h.b16 %v1356
    %v1693 = vunpack.c.l.b16 %v1357
    %v1694 = vunpack.c.h.b16 %v1357
    %v1695 = vunpack.c.l.b16 %v1358
    %v1696 = vunpack.c.h.b16 %v1358
    %v1697 = vunpack.c.l.b16 %v1359
    %v1698 = vunpack.c.h.b16 %v1359
    %v1699 = vunpack.c.l.b16 %v1360
    %v1700 = vunpack.c.h.b16 %v1360
    %v1701 = vunpack.c.l.b16 %v1361
    %v1702 = vunpack.c.h.b16 %v1361
    %v1703 = vunpack.c.l.b16 %v1362
    %v1704 = vunpack.c.h.b16 %v1362
    %v1705 = vpack.c.b16 %v1645, %v1641
    %v1706 = vpack.c.b16 %v1646, %v1642
    %v1707 = vpack.c.b16 %v1647, %v1643
    %v1708 = vpack.c.b16 %v1648, %v1644
    %v1709 = vpack.c.b16 %v1653, %v1649
    %v1710 = vpack.c.b16 %v1654, %v1650
    %v1711 = vpack.c.b16 %v1655, %v1651
    %v1712 = vpack.c.b16 %v1656, %v1652
    %v1713 = vpack.c.b16 %v1661, %v1657
    %v1714 = vpack.c.b16 %v1662, %v1658
    %v1715 = vpack.c.b16 %v1663, %v1659
    %v1716 = vpack.c.b16 %v1664, %v1660
    %v1717 = vpack.c.b16 %v1669, %v1665
    %v1718 = vpack.c.b16 %v1670, %v1666
    %v1719 = vpack.c.b16 %v1671, %v1667
    %v1720 = vpack.c.b16 %v1672, %v1668
    %v1721 = vpack.c.b16 %v1677, %v1673
    %v1722 = vpack.c.b16 %v1678, %v1674
    %v1723 = vpack.c.b16 %v1679, %v1675
    %v1724 = vpack.c.b16 %v1680, %v1676
    %v1725 = vpack.c.b16 %v1685, %v1681
    %v1726 = vpack.c.b16 %v1686, %v1682
    %v1727 = vpack.c.b16 %v1687, %v1683
    %v1728 = vpack.c.b16 %v1688, %v1684
    %v1729 = vpack.c.b16 %v1693, %v1689
    %v1730 = vpack.c.b16 %v1694, %v1690
    %v1731 = vpack.c.b16 %v1695, %v1691
    %v1732 = vpack.c.b16 %v1696, %v1692
    %v1733 = vpack.c.b16 %v1701, %v1697
    %v1734 = vpack.c.b16 %v1702, %v1698
    %v1735 = vpack.c.b16 %v1703, %v1699
    %v1736 = vpack.c.b16 %v1704, %v1700
    %1769 = vmatpush.bf16.msra.mxu0 %v1733
    %1770 = vmatpush.bf16.msra.mxu0 %v1729
    %1771 = vmatpush.bf16.msra.mxu0 %v1725
    %1772 = vmatpush.bf16.msra.mxu0 %v1721
    %1773 = vmatpush.bf16.msra.mxu0 %v1717
    %1774 = vmatpush.bf16.msra.mxu0 %v1713
    %1775 = vmatpush.bf16.msra.mxu0 %v1709
    %1776 = vmatpush.bf16.msra.mxu0 %v1705
    %1777 = vmatmul.bf16.gmra.mxu0 %v1330
    %v1778 = vpop.f32.mrf.mxu0
    %v1779 = vadd.f32 %v1567, %v1778
    %v1780 = vpop.f32.mrf.mxu0
    %1781 = vdwg.mxu0
    %1782 = vmatpush.bf16.msra.mxu0 %v1734
    %1783 = vmatpush.bf16.msra.mxu0 %v1730
    %1784 = vmatpush.bf16.msra.mxu0 %v1726
    %1785 = vmatpush.bf16.msra.mxu0 %v1722
    %1786 = vmatpush.bf16.msra.mxu0 %v1718
    %1787 = vmatpush.bf16.msra.mxu0 %v1714
    %1788 = vmatpush.bf16.msra.mxu0 %v1710
    %1789 = vmatpush.bf16.msra.mxu0 %v1706
    %1790 = vmatmul.bf16.gmra.mxu0 %v1330
    %v1791 = vpop.f32.mrf.mxu0
    %v1792 = vadd.f32 %v1580, %v1791
    %v1793 = vpop.f32.mrf.mxu0
    %1794 = vdwg.mxu0
    %1795 = vmatpush.bf16.msra.mxu0 %v1735
    %1796 = vmatpush.bf16.msra.mxu0 %v1731
    %1797 = vmatpush.bf16.msra.mxu0 %v1727
    %1798 = vmatpush.bf16.msra.mxu0 %v1723
    %1799 = vmatpush.bf16.msra.mxu0 %v1719
    %1800 = vmatpush.bf16.msra.mxu0 %v1715
    %1801 = vmatpush.bf16.msra.mxu0 %v1711
    %1802 = vmatpush.bf16.msra.mxu0 %v1707
    %1803 = vmatmul.bf16.gmra.mxu0 %v1330
    %v1804 = vpop.f32.mrf.mxu0
    %v1805 = vadd.f32 %v1593, %v1804
    %v1806 = vpop.f32.mrf.mxu0
    %1807 = vdwg.mxu0
    %1808 = vmatpush.bf16.msra.mxu0 %v1736
    %1809 = vmatpush.bf16.msra.mxu0 %v1732
    %1810 = vmatpush.bf16.msra.mxu0 %v1728
    %1811 = vmatpush.bf16.msra.mxu0 %v1724
    %1812 = vmatpush.bf16.msra.mxu0 %v1720
    %1813 = vmatpush.bf16.msra.mxu0 %v1716
    %1814 = vmatpush.bf16.msra.mxu0 %v1712
    %1815 = vmatpush.bf16.msra.mxu0 %v1708
    %1816 = vmatmul.bf16.gmra.mxu0 %v1330
    %v1817 = vpop.f32.mrf.mxu0
    %v1818 = vadd.f32 %v1606, %v1817
    %v1819 = vpop.f32.mrf.mxu0
    %1820 = vdwg.mxu0
    %v1821 = vld [vmem:[%s7] sm:$0xf]
    %v1823 = vperm.slane %v1821, 0
    %v1824 = vperm.slane %v1821, 1
    %v1825 = vperm.slane %v1821, 2
    %v1826 = vperm.slane %v1821, 3
    %v1831 = vadd.f32 %v1779, %v1823
    %v1832 = vadd.f32 %v1792, %v1824
    %v1833 = vadd.f32 %v1805, %v1825
    %v1834 = vadd.f32 %v1818, %v1826
    %v1835 = vpack.c.bf16 %v1832, %v1831
    %v1836 = vpack.c.bf16 %v1834, %v1833
    %s1837 = scalar_lea.vmem [#allocation2], 48
    %1838 = vst [vmem:[%s1837] sm:$0xff] %v1835
    %1839 = vst [vmem:[%s1837 + $0x8] sm:$0xff] %v1836
    %s1840 = scalar_lea.vmem %s0, 16
    %v1841 = vld [vmem:[%s1840] sm:$0xf]
    %v1842 = vld [vmem:[%s4] sm:$0xff]
    %v1843 = vld [vmem:[%s4 + $0x8] sm:$0xff]
    %v1844 = vld [vmem:[%s4 + $0x10] sm:$0xff]
    %v1845 = vld [vmem:[%s4 + $0x18] sm:$0xff]
    %v1846 = vld [vmem:[%s4 + $0x20] sm:$0xff]
    %v1847 = vld [vmem:[%s4 + $0x28] sm:$0xff]
    %v1848 = vld [vmem:[%s4 + $0x30] sm:$0xff]
    %v1849 = vld [vmem:[%s4 + $0x38] sm:$0xff]
    %v1850 = vld [vmem:[%s4 + $0x40] sm:$0xff]
    %v1851 = vld [vmem:[%s4 + $0x48] sm:$0xff]
    %v1852 = vld [vmem:[%s4 + $0x50] sm:$0xff]
    %v1853 = vld [vmem:[%s4 + $0x58] sm:$0xff]
    %v1854 = vld [vmem:[%s4 + $0x60] sm:$0xff]
    %v1855 = vld [vmem:[%s4 + $0x68] sm:$0xff]
    %v1856 = vld [vmem:[%s4 + $0x70] sm:$0xff]
    %v1857 = vld [vmem:[%s4 + $0x78] sm:$0xff]
    %v1858 = vld [vmem:[%s4 + $0x80] sm:$0xff]
    %v1859 = vld [vmem:[%s4 + $0x88] sm:$0xff]
    %v1860 = vld [vmem:[%s4 + $0x90] sm:$0xff]
    %v1861 = vld [vmem:[%s4 + $0x98] sm:$0xff]
    %v1862 = vld [vmem:[%s4 + $0xa0] sm:$0xff]
    %v1863 = vld [vmem:[%s4 + $0xa8] sm:$0xff]
    %v1864 = vld [vmem:[%s4 + $0xb0] sm:$0xff]
    %v1865 = vld [vmem:[%s4 + $0xb8] sm:$0xff]
    %v1866 = vld [vmem:[%s4 + $0xc0] sm:$0xff]
    %v1867 = vld [vmem:[%s4 + $0xc8] sm:$0xff]
    %v1868 = vld [vmem:[%s4 + $0xd0] sm:$0xff]
    %v1869 = vld [vmem:[%s4 + $0xd8] sm:$0xff]
    %v1870 = vld [vmem:[%s4 + $0xe0] sm:$0xff]
    %v1871 = vld [vmem:[%s4 + $0xe8] sm:$0xff]
    %v1872 = vld [vmem:[%s4 + $0xf0] sm:$0xff]
    %v1873 = vld [vmem:[%s4 + $0xf8] sm:$0xff]
    %s1874 = scalar_lea.vmem %s1, 12
    %v1875 = vld [vmem:[%s1874] sm:$0xf]
    %v1876 = vld [vmem:[%s5] sm:$0xff]
    %v1877 = vld [vmem:[%s5 + $0x8] sm:$0xff]
    %v1878 = vld [vmem:[%s5 + $0x10] sm:$0xff]
    %v1879 = vld [vmem:[%s5 + $0x18] sm:$0xff]
    %v1880 = vld [vmem:[%s5 + $0x20] sm:$0xff]
    %v1881 = vld [vmem:[%s5 + $0x28] sm:$0xff]
    %v1882 = vld [vmem:[%s5 + $0x30] sm:$0xff]
    %v1883 = vld [vmem:[%s5 + $0x38] sm:$0xff]
    %v1884 = vld [vmem:[%s5 + $0x40] sm:$0xff]
    %v1885 = vld [vmem:[%s5 + $0x48] sm:$0xff]
    %v1886 = vld [vmem:[%s5 + $0x50] sm:$0xff]
    %v1887 = vld [vmem:[%s5 + $0x58] sm:$0xff]
    %v1888 = vld [vmem:[%s5 + $0x60] sm:$0xff]
    %v1889 = vld [vmem:[%s5 + $0x68] sm:$0xff]
    %v1890 = vld [vmem:[%s5 + $0x70] sm:$0xff]
    %v1891 = vld [vmem:[%s5 + $0x78] sm:$0xff]
    %v1892 = vld [vmem:[%s5 + $0x80] sm:$0xff]
    %v1893 = vld [vmem:[%s5 + $0x88] sm:$0xff]
    %v1894 = vld [vmem:[%s5 + $0x90] sm:$0xff]
    %v1895 = vld [vmem:[%s5 + $0x98] sm:$0xff]
    %v1896 = vld [vmem:[%s5 + $0xa0] sm:$0xff]
    %v1897 = vld [vmem:[%s5 + $0xa8] sm:$0xff]
    %v1898 = vld [vmem:[%s5 + $0xb0] sm:$0xff]
    %v1899 = vld [vmem:[%s5 + $0xb8] sm:$0xff]
    %v1900 = vld [vmem:[%s5 + $0xc0] sm:$0xff]
    %v1901 = vld [vmem:[%s5 + $0xc8] sm:$0xff]
    %v1902 = vld [vmem:[%s5 + $0xd0] sm:$0xff]
    %v1903 = vld [vmem:[%s5 + $0xd8] sm:$0xff]
    %v1904 = vld [vmem:[%s5 + $0xe0] sm:$0xff]
    %v1905 = vld [vmem:[%s5 + $0xe8] sm:$0xff]
    %v1906 = vld [vmem:[%s5 + $0xf0] sm:$0xff]
    %v1907 = vld [vmem:[%s5 + $0xf8] sm:$0xff]
    %v1940 = vunpack.c.l.b16 %v1876
    %v1941 = vunpack.c.h.b16 %v1876
    %v1942 = vunpack.c.l.b16 %v1877
    %v1943 = vunpack.c.h.b16 %v1877
    %v1944 = vunpack.c.l.b16 %v1878
    %v1945 = vunpack.c.h.b16 %v1878
    %v1946 = vunpack.c.l.b16 %v1879
    %v1947 = vunpack.c.h.b16 %v1879
    %v1948 = vunpack.c.l.b16 %v1880
    %v1949 = vunpack.c.h.b16 %v1880
    %v1950 = vunpack.c.l.b16 %v1881
    %v1951 = vunpack.c.h.b16 %v1881
    %v1952 = vunpack.c.l.b16 %v1882
    %v1953 = vunpack.c.h.b16 %v1882
    %v1954 = vunpack.c.l.b16 %v1883
    %v1955 = vunpack.c.h.b16 %v1883
    %v1956 = vunpack.c.l.b16 %v1884
    %v1957 = vunpack.c.h.b16 %v1884
    %v1958 = vunpack.c.l.b16 %v1885
    %v1959 = vunpack.c.h.b16 %v1885
    %v1960 = vunpack.c.l.b16 %v1886
    %v1961 = vunpack.c.h.b16 %v1886
    %v1962 = vunpack.c.l.b16 %v1887
    %v1963 = vunpack.c.h.b16 %v1887
    %v1964 = vunpack.c.l.b16 %v1888
    %v1965 = vunpack.c.h.b16 %v1888
    %v1966 = vunpack.c.l.b16 %v1889
    %v1967 = vunpack.c.h.b16 %v1889
    %v1968 = vunpack.c.l.b16 %v1890
    %v1969 = vunpack.c.h.b16 %v1890
    %v1970 = vunpack.c.l.b16 %v1891
    %v1971 = vunpack.c.h.b16 %v1891
    %v1972 = vunpack.c.l.b16 %v1892
    %v1973 = vunpack.c.h.b16 %v1892
    %v1974 = vunpack.c.l.b16 %v1893
    %v1975 = vunpack.c.h.b16 %v1893
    %v1976 = vunpack.c.l.b16 %v1894
    %v1977 = vunpack.c.h.b16 %v1894
    %v1978 = vunpack.c.l.b16 %v1895
    %v1979 = vunpack.c.h.b16 %v1895
    %v1980 = vunpack.c.l.b16 %v1896
    %v1981 = vunpack.c.h.b16 %v1896
    %v1982 = vunpack.c.l.b16 %v1897
    %v1983 = vunpack.c.h.b16 %v1897
    %v1984 = vunpack.c.l.b16 %v1898
    %v1985 = vunpack.c.h.b16 %v1898
    %v1986 = vunpack.c.l.b16 %v1899
    %v1987 = vunpack.c.h.b16 %v1899
    %v1988 = vunpack.c.l.b16 %v1900
    %v1989 = vunpack.c.h.b16 %v1900
    %v1990 = vunpack.c.l.b16 %v1901
    %v1991 = vunpack.c.h.b16 %v1901
    %v1992 = vunpack.c.l.b16 %v1902
    %v1993 = vunpack.c.h.b16 %v1902
    %v1994 = vunpack.c.l.b16 %v1903
    %v1995 = vunpack.c.h.b16 %v1903
    %v1996 = vunpack.c.l.b16 %v1904
    %v1997 = vunpack.c.h.b16 %v1904
    %v1998 = vunpack.c.l.b16 %v1905
    %v1999 = vunpack.c.h.b16 %v1905
    %v2000 = vunpack.c.l.b16 %v1906
    %v2001 = vunpack.c.h.b16 %v1906
    %v2002 = vunpack.c.l.b16 %v1907
    %v2003 = vunpack.c.h.b16 %v1907
    %v2004 = vpack.c.b16 %v1944, %v1940
    %v2005 = vpack.c.b16 %v1945, %v1941
    %v2006 = vpack.c.b16 %v1946, %v1942
    %v2007 = vpack.c.b16 %v1947, %v1943
    %v2008 = vpack.c.b16 %v1952, %v1948
    %v2009 = vpack.c.b16 %v1953, %v1949
    %v2010 = vpack.c.b16 %v1954, %v1950
    %v2011 = vpack.c.b16 %v1955, %v1951
    %v2012 = vpack.c.b16 %v1960, %v1956
    %v2013 = vpack.c.b16 %v1961, %v1957
    %v2014 = vpack.c.b16 %v1962, %v1958
    %v2015 = vpack.c.b16 %v1963, %v1959
    %v2016 = vpack.c.b16 %v1968, %v1964
    %v2017 = vpack.c.b16 %v1969, %v1965
    %v2018 = vpack.c.b16 %v1970, %v1966
    %v2019 = vpack.c.b16 %v1971, %v1967
    %v2020 = vpack.c.b16 %v1976, %v1972
    %v2021 = vpack.c.b16 %v1977, %v1973
    %v2022 = vpack.c.b16 %v1978, %v1974
    %v2023 = vpack.c.b16 %v1979, %v1975
    %v2024 = vpack.c.b16 %v1984, %v1980
    %v2025 = vpack.c.b16 %v1985, %v1981
    %v2026 = vpack.c.b16 %v1986, %v1982
    %v2027 = vpack.c.b16 %v1987, %v1983
    %v2028 = vpack.c.b16 %v1992, %v1988
    %v2029 = vpack.c.b16 %v1993, %v1989
    %v2030 = vpack.c.b16 %v1994, %v1990
    %v2031 = vpack.c.b16 %v1995, %v1991
    %v2032 = vpack.c.b16 %v2000, %v1996
    %v2033 = vpack.c.b16 %v2001, %v1997
    %v2034 = vpack.c.b16 %v2002, %v1998
    %v2035 = vpack.c.b16 %v2003, %v1999
    %2068 = vmatpush.bf16.msra.mxu0 %v2032
    %2069 = vmatpush.bf16.msra.mxu0 %v2028
    %2070 = vmatpush.bf16.msra.mxu0 %v2024
    %2071 = vmatpush.bf16.msra.mxu0 %v2020
    %2072 = vmatpush.bf16.msra.mxu0 %v2016
    %2073 = vmatpush.bf16.msra.mxu0 %v2012
    %2074 = vmatpush.bf16.msra.mxu0 %v2008
    %2075 = vmatpush.bf16.msra.mxu0 %v2004
    %2076 = vmatmul.bf16.gmra.mxu0 %v1875
    %v2077 = vpop.f32.mrf.mxu0
    %v2078 = vadd.f32 0.0, %v2077
    %v2079 = vpop.f32.mrf.mxu0
    %2080 = vdwg.mxu0
    %2081 = vmatpush.bf16.msra.mxu0 %v2033
    %2082 = vmatpush.bf16.msra.mxu0 %v2029
    %2083 = vmatpush.bf16.msra.mxu0 %v2025
    %2084 = vmatpush.bf16.msra.mxu0 %v2021
    %2085 = vmatpush.bf16.msra.mxu0 %v2017
    %2086 = vmatpush.bf16.msra.mxu0 %v2013
    %2087 = vmatpush.bf16.msra.mxu0 %v2009
    %2088 = vmatpush.bf16.msra.mxu0 %v2005
    %2089 = vmatmul.bf16.gmra.mxu0 %v1875
    %v2090 = vpop.f32.mrf.mxu0
    %v2091 = vadd.f32 0.0, %v2090
    %v2092 = vpop.f32.mrf.mxu0
    %2093 = vdwg.mxu0
    %2094 = vmatpush.bf16.msra.mxu0 %v2034
    %2095 = vmatpush.bf16.msra.mxu0 %v2030
    %2096 = vmatpush.bf16.msra.mxu0 %v2026
    %2097 = vmatpush.bf16.msra.mxu0 %v2022
    %2098 = vmatpush.bf16.msra.mxu0 %v2018
    %2099 = vmatpush.bf16.msra.mxu0 %v2014
    %2100 = vmatpush.bf16.msra.mxu0 %v2010
    %2101 = vmatpush.bf16.msra.mxu0 %v2006
    %2102 = vmatmul.bf16.gmra.mxu0 %v1875
    %v2103 = vpop.f32.mrf.mxu0
    %v2104 = vadd.f32 0.0, %v2103
    %v2105 = vpop.f32.mrf.mxu0
    %2106 = vdwg.mxu0
    %2107 = vmatpush.bf16.msra.mxu0 %v2035
    %2108 = vmatpush.bf16.msra.mxu0 %v2031
    %2109 = vmatpush.bf16.msra.mxu0 %v2027
    %2110 = vmatpush.bf16.msra.mxu0 %v2023
    %2111 = vmatpush.bf16.msra.mxu0 %v2019
    %2112 = vmatpush.bf16.msra.mxu0 %v2015
    %2113 = vmatpush.bf16.msra.mxu0 %v2011
    %2114 = vmatpush.bf16.msra.mxu0 %v2007
    %2115 = vmatmul.bf16.gmra.mxu0 %v1875
    %v2116 = vpop.f32.mrf.mxu0
    %v2117 = vadd.f32 0.0, %v2116
    %v2118 = vpop.f32.mrf.mxu0
    %2119 = vdwg.mxu0
    %v2152 = vunpack.c.l.b16 %v1842
    %v2153 = vunpack.c.h.b16 %v1842
    %v2154 = vunpack.c.l.b16 %v1843
    %v2155 = vunpack.c.h.b16 %v1843
    %v2156 = vunpack.c.l.b16 %v1844
    %v2157 = vunpack.c.h.b16 %v1844
    %v2158 = vunpack.c.l.b16 %v1845
    %v2159 = vunpack.c.h.b16 %v1845
    %v2160 = vunpack.c.l.b16 %v1846
    %v2161 = vunpack.c.h.b16 %v1846
    %v2162 = vunpack.c.l.b16 %v1847
    %v2163 = vunpack.c.h.b16 %v1847
    %v2164 = vunpack.c.l.b16 %v1848
    %v2165 = vunpack.c.h.b16 %v1848
    %v2166 = vunpack.c.l.b16 %v1849
    %v2167 = vunpack.c.h.b16 %v1849
    %v2168 = vunpack.c.l.b16 %v1850
    %v2169 = vunpack.c.h.b16 %v1850
    %v2170 = vunpack.c.l.b16 %v1851
    %v2171 = vunpack.c.h.b16 %v1851
    %v2172 = vunpack.c.l.b16 %v1852
    %v2173 = vunpack.c.h.b16 %v1852
    %v2174 = vunpack.c.l.b16 %v1853
    %v2175 = vunpack.c.h.b16 %v1853
    %v2176 = vunpack.c.l.b16 %v1854
    %v2177 = vunpack.c.h.b16 %v1854
    %v2178 = vunpack.c.l.b16 %v1855
    %v2179 = vunpack.c.h.b16 %v1855
    %v2180 = vunpack.c.l.b16 %v1856
    %v2181 = vunpack.c.h.b16 %v1856
    %v2182 = vunpack.c.l.b16 %v1857
    %v2183 = vunpack.c.h.b16 %v1857
    %v2184 = vunpack.c.l.b16 %v1858
    %v2185 = vunpack.c.h.b16 %v1858
    %v2186 = vunpack.c.l.b16 %v1859
    %v2187 = vunpack.c.h.b16 %v1859
    %v2188 = vunpack.c.l.b16 %v1860
    %v2189 = vunpack.c.h.b16 %v1860
    %v2190 = vunpack.c.l.b16 %v1861
    %v2191 = vunpack.c.h.b16 %v1861
    %v2192 = vunpack.c.l.b16 %v1862
    %v2193 = vunpack.c.h.b16 %v1862
    %v2194 = vunpack.c.l.b16 %v1863
    %v2195 = vunpack.c.h.b16 %v1863
    %v2196 = vunpack.c.l.b16 %v1864
    %v2197 = vunpack.c.h.b16 %v1864
    %v2198 = vunpack.c.l.b16 %v1865
    %v2199 = vunpack.c.h.b16 %v1865
    %v2200 = vunpack.c.l.b16 %v1866
    %v2201 = vunpack.c.h.b16 %v1866
    %v2202 = vunpack.c.l.b16 %v1867
    %v2203 = vunpack.c.h.b16 %v1867
    %v2204 = vunpack.c.l.b16 %v1868
    %v2205 = vunpack.c.h.b16 %v1868
    %v2206 = vunpack.c.l.b16 %v1869
    %v2207 = vunpack.c.h.b16 %v1869
    %v2208 = vunpack.c.l.b16 %v1870
    %v2209 = vunpack.c.h.b16 %v1870
    %v2210 = vunpack.c.l.b16 %v1871
    %v2211 = vunpack.c.h.b16 %v1871
    %v2212 = vunpack.c.l.b16 %v1872
    %v2213 = vunpack.c.h.b16 %v1872
    %v2214 = vunpack.c.l.b16 %v1873
    %v2215 = vunpack.c.h.b16 %v1873
    %v2216 = vpack.c.b16 %v2156, %v2152
    %v2217 = vpack.c.b16 %v2157, %v2153
    %v2218 = vpack.c.b16 %v2158, %v2154
    %v2219 = vpack.c.b16 %v2159, %v2155
    %v2220 = vpack.c.b16 %v2164, %v2160
    %v2221 = vpack.c.b16 %v2165, %v2161
    %v2222 = vpack.c.b16 %v2166, %v2162
    %v2223 = vpack.c.b16 %v2167, %v2163
    %v2224 = vpack.c.b16 %v2172, %v2168
    %v2225 = vpack.c.b16 %v2173, %v2169
    %v2226 = vpack.c.b16 %v2174, %v2170
    %v2227 = vpack.c.b16 %v2175, %v2171
    %v2228 = vpack.c.b16 %v2180, %v2176
    %v2229 = vpack.c.b16 %v2181, %v2177
    %v2230 = vpack.c.b16 %v2182, %v2178
    %v2231 = vpack.c.b16 %v2183, %v2179
    %v2232 = vpack.c.b16 %v2188, %v2184
    %v2233 = vpack.c.b16 %v2189, %v2185
    %v2234 = vpack.c.b16 %v2190, %v2186
    %v2235 = vpack.c.b16 %v2191, %v2187
    %v2236 = vpack.c.b16 %v2196, %v2192
    %v2237 = vpack.c.b16 %v2197, %v2193
    %v2238 = vpack.c.b16 %v2198, %v2194
    %v2239 = vpack.c.b16 %v2199, %v2195
    %v2240 = vpack.c.b16 %v2204, %v2200
    %v2241 = vpack.c.b16 %v2205, %v2201
    %v2242 = vpack.c.b16 %v2206, %v2202
    %v2243 = vpack.c.b16 %v2207, %v2203
    %v2244 = vpack.c.b16 %v2212, %v2208
    %v2245 = vpack.c.b16 %v2213, %v2209
    %v2246 = vpack.c.b16 %v2214, %v2210
    %v2247 = vpack.c.b16 %v2215, %v2211
    %2280 = vmatpush.bf16.msra.mxu0 %v2244
    %2281 = vmatpush.bf16.msra.mxu0 %v2240
    %2282 = vmatpush.bf16.msra.mxu0 %v2236
    %2283 = vmatpush.bf16.msra.mxu0 %v2232
    %2284 = vmatpush.bf16.msra.mxu0 %v2228
    %2285 = vmatpush.bf16.msra.mxu0 %v2224
    %2286 = vmatpush.bf16.msra.mxu0 %v2220
    %2287 = vmatpush.bf16.msra.mxu0 %v2216
    %2288 = vmatmul.bf16.gmra.mxu0 %v1841
    %v2289 = vpop.f32.mrf.mxu0
    %v2290 = vadd.f32 %v2078, %v2289
    %v2291 = vpop.f32.mrf.mxu0
    %2292 = vdwg.mxu0
    %2293 = vmatpush.bf16.msra.mxu0 %v2245
    %2294 = vmatpush.bf16.msra.mxu0 %v2241
    %2295 = vmatpush.bf16.msra.mxu0 %v2237
    %2296 = vmatpush.bf16.msra.mxu0 %v2233
    %2297 = vmatpush.bf16.msra.mxu0 %v2229
    %2298 = vmatpush.bf16.msra.mxu0 %v2225
    %2299 = vmatpush.bf16.msra.mxu0 %v2221
    %2300 = vmatpush.bf16.msra.mxu0 %v2217
    %2301 = vmatmul.bf16.gmra.mxu0 %v1841
    %v2302 = vpop.f32.mrf.mxu0
    %v2303 = vadd.f32 %v2091, %v2302
    %v2304 = vpop.f32.mrf.mxu0
    %2305 = vdwg.mxu0
    %2306 = vmatpush.bf16.msra.mxu0 %v2246
    %2307 = vmatpush.bf16.msra.mxu0 %v2242
    %2308 = vmatpush.bf16.msra.mxu0 %v2238
    %2309 = vmatpush.bf16.msra.mxu0 %v2234
    %2310 = vmatpush.bf16.msra.mxu0 %v2230
    %2311 = vmatpush.bf16.msra.mxu0 %v2226
    %2312 = vmatpush.bf16.msra.mxu0 %v2222
    %2313 = vmatpush.bf16.msra.mxu0 %v2218
    %2314 = vmatmul.bf16.gmra.mxu0 %v1841
    %v2315 = vpop.f32.mrf.mxu0
    %v2316 = vadd.f32 %v2104, %v2315
    %v2317 = vpop.f32.mrf.mxu0
    %2318 = vdwg.mxu0
    %2319 = vmatpush.bf16.msra.mxu0 %v2247
    %2320 = vmatpush.bf16.msra.mxu0 %v2243
    %2321 = vmatpush.bf16.msra.mxu0 %v2239
    %2322 = vmatpush.bf16.msra.mxu0 %v2235
    %2323 = vmatpush.bf16.msra.mxu0 %v2231
    %2324 = vmatpush.bf16.msra.mxu0 %v2227
    %2325 = vmatpush.bf16.msra.mxu0 %v2223
    %2326 = vmatpush.bf16.msra.mxu0 %v2219
    %2327 = vmatmul.bf16.gmra.mxu0 %v1841
    %v2328 = vpop.f32.mrf.mxu0
    %v2329 = vadd.f32 %v2117, %v2328
    %v2330 = vpop.f32.mrf.mxu0
    %2331 = vdwg.mxu0
    %v2332 = vld [vmem:[%s7] sm:$0xf]
    %v2334 = vperm.slane %v2332, 0
    %v2335 = vperm.slane %v2332, 1
    %v2336 = vperm.slane %v2332, 2
    %v2337 = vperm.slane %v2332, 3
    %v2342 = vadd.f32 %v2290, %v2334
    %v2343 = vadd.f32 %v2303, %v2335
    %v2344 = vadd.f32 %v2316, %v2336
    %v2345 = vadd.f32 %v2329, %v2337
    %v2346 = vpack.c.bf16 %v2343, %v2342
    %v2347 = vpack.c.bf16 %v2345, %v2344
    %s2348 = scalar_lea.vmem [#allocation2], 64
    %2349 = vst [vmem:[%s2348] sm:$0xff] %v2346
    %2350 = vst [vmem:[%s2348 + $0x8] sm:$0xff] %v2347
    %2351 = vst [vmem:[#allocation3] sm:$0xf] 0
    %2352 = vst [vmem:[#allocation4] sm:$0xff] 0.0
    %v2353 = vld [vmem:[#allocation2] sm:$0xff]
    %v2354 = vld [vmem:[#allocation2 + $0x8] sm:$0xff]
    %v2355 = vunpack.c.l.bf16 %v2353
    %v2356 = vunpack.c.h.bf16 %v2353
    %v2357 = vunpack.c.l.bf16 %v2354
    %v2358 = vunpack.c.h.bf16 %v2354
    %v2359 = vld [vmem:[#allocation3] sm:$0xf]
    %v2360 = vld [vmem:[%s6] sm:$0xff]
    %v2361 = vld [vmem:[%s6 + $0x8] sm:$0xff]
    %v2362 = vld [vmem:[%s6 + $0x10] sm:$0xff]
    %v2363 = vld [vmem:[%s6 + $0x18] sm:$0xff]
    %v2364 = vld [vmem:[%s6 + $0x20] sm:$0xff]
    %v2365 = vld [vmem:[%s6 + $0x28] sm:$0xff]
    %v2366 = vld [vmem:[%s6 + $0x30] sm:$0xff]
    %v2367 = vld [vmem:[%s6 + $0x38] sm:$0xff]
    %v2368 = vld [vmem:[%s6 + $0x40] sm:$0xff]
    %v2369 = vld [vmem:[%s6 + $0x48] sm:$0xff]
    %v2370 = vld [vmem:[%s6 + $0x50] sm:$0xff]
    %v2371 = vld [vmem:[%s6 + $0x58] sm:$0xff]
    %v2372 = vld [vmem:[%s6 + $0x60] sm:$0xff]
    %v2373 = vld [vmem:[%s6 + $0x68] sm:$0xff]
    %v2374 = vld [vmem:[%s6 + $0x70] sm:$0xff]
    %v2375 = vld [vmem:[%s6 + $0x78] sm:$0xff]
    %v2376 = vld [vmem:[%s6 + $0x80] sm:$0xff]
    %v2377 = vld [vmem:[%s6 + $0x88] sm:$0xff]
    %v2378 = vld [vmem:[%s6 + $0x90] sm:$0xff]
    %v2379 = vld [vmem:[%s6 + $0x98] sm:$0xff]
    %v2380 = vld [vmem:[%s6 + $0xa0] sm:$0xff]
    %v2381 = vld [vmem:[%s6 + $0xa8] sm:$0xff]
    %v2382 = vld [vmem:[%s6 + $0xb0] sm:$0xff]
    %v2383 = vld [vmem:[%s6 + $0xb8] sm:$0xff]
    %v2384 = vld [vmem:[%s6 + $0xc0] sm:$0xff]
    %v2385 = vld [vmem:[%s6 + $0xc8] sm:$0xff]
    %v2386 = vld [vmem:[%s6 + $0xd0] sm:$0xff]
    %v2387 = vld [vmem:[%s6 + $0xd8] sm:$0xff]
    %v2388 = vld [vmem:[%s6 + $0xe0] sm:$0xff]
    %v2389 = vld [vmem:[%s6 + $0xe8] sm:$0xff]
    %v2390 = vld [vmem:[%s6 + $0xf0] sm:$0xff]
    %v2391 = vld [vmem:[%s6 + $0xf8] sm:$0xff]
    %v2424 = vunpack.c.l.b16 %v2360
    %v2425 = vunpack.c.h.b16 %v2360
    %v2426 = vunpack.c.l.b16 %v2361
    %v2427 = vunpack.c.h.b16 %v2361
    %v2428 = vunpack.c.l.b16 %v2362
    %v2429 = vunpack.c.h.b16 %v2362
    %v2430 = vunpack.c.l.b16 %v2363
    %v2431 = vunpack.c.h.b16 %v2363
    %v2432 = vunpack.c.l.b16 %v2364
    %v2433 = vunpack.c.h.b16 %v2364
    %v2434 = vunpack.c.l.b16 %v2365
    %v2435 = vunpack.c.h.b16 %v2365
    %v2436 = vunpack.c.l.b16 %v2366
    %v2437 = vunpack.c.h.b16 %v2366
    %v2438 = vunpack.c.l.b16 %v2367
    %v2439 = vunpack.c.h.b16 %v2367
    %v2440 = vunpack.c.l.b16 %v2368
    %v2441 = vunpack.c.h.b16 %v2368
    %v2442 = vunpack.c.l.b16 %v2369
    %v2443 = vunpack.c.h.b16 %v2369
    %v2444 = vunpack.c.l.b16 %v2370
    %v2445 = vunpack.c.h.b16 %v2370
    %v2446 = vunpack.c.l.b16 %v2371
    %v2447 = vunpack.c.h.b16 %v2371
    %v2448 = vunpack.c.l.b16 %v2372
    %v2449 = vunpack.c.h.b16 %v2372
    %v2450 = vunpack.c.l.b16 %v2373
    %v2451 = vunpack.c.h.b16 %v2373
    %v2452 = vunpack.c.l.b16 %v2374
    %v2453 = vunpack.c.h.b16 %v2374
    %v2454 = vunpack.c.l.b16 %v2375
    %v2455 = vunpack.c.h.b16 %v2375
    %v2456 = vunpack.c.l.b16 %v2376
    %v2457 = vunpack.c.h.b16 %v2376
    %v2458 = vunpack.c.l.b16 %v2377
    %v2459 = vunpack.c.h.b16 %v2377
    %v2460 = vunpack.c.l.b16 %v2378
    %v2461 = vunpack.c.h.b16 %v2378
    %v2462 = vunpack.c.l.b16 %v2379
    %v2463 = vunpack.c.h.b16 %v2379
    %v2464 = vunpack.c.l.b16 %v2380
    %v2465 = vunpack.c.h.b16 %v2380
    %v2466 = vunpack.c.l.b16 %v2381
    %v2467 = vunpack.c.h.b16 %v2381
    %v2468 = vunpack.c.l.b16 %v2382
    %v2469 = vunpack.c.h.b16 %v2382
    %v2470 = vunpack.c.l.b16 %v2383
    %v2471 = vunpack.c.h.b16 %v2383
    %v2472 = vunpack.c.l.b16 %v2384
    %v2473 = vunpack.c.h.b16 %v2384
    %v2474 = vunpack.c.l.b16 %v2385
    %v2475 = vunpack.c.h.b16 %v2385
    %v2476 = vunpack.c.l.b16 %v2386
    %v2477 = vunpack.c.h.b16 %v2386
    %v2478 = vunpack.c.l.b16 %v2387
    %v2479 = vunpack.c.h.b16 %v2387
    %v2480 = vunpack.c.l.b16 %v2388
    %v2481 = vunpack.c.h.b16 %v2388
    %v2482 = vunpack.c.l.b16 %v2389
    %v2483 = vunpack.c.h.b16 %v2389
    %v2484 = vunpack.c.l.b16 %v2390
    %v2485 = vunpack.c.h.b16 %v2390
    %v2486 = vunpack.c.l.b16 %v2391
    %v2487 = vunpack.c.h.b16 %v2391
    %v2488 = vpack.c.b16 %v2428, %v2424
    %v2489 = vpack.c.b16 %v2429, %v2425
    %v2490 = vpack.c.b16 %v2430, %v2426
    %v2491 = vpack.c.b16 %v2431, %v2427
    %v2492 = vpack.c.b16 %v2436, %v2432
    %v2493 = vpack.c.b16 %v2437, %v2433
    %v2494 = vpack.c.b16 %v2438, %v2434
    %v2495 = vpack.c.b16 %v2439, %v2435
    %v2496 = vpack.c.b16 %v2444, %v2440
    %v2497 = vpack.c.b16 %v2445, %v2441
    %v2498 = vpack.c.b16 %v2446, %v2442
    %v2499 = vpack.c.b16 %v2447, %v2443
    %v2500 = vpack.c.b16 %v2452, %v2448
    %v2501 = vpack.c.b16 %v2453, %v2449
    %v2502 = vpack.c.b16 %v2454, %v2450
    %v2503 = vpack.c.b16 %v2455, %v2451
    %v2504 = vpack.c.b16 %v2460, %v2456
    %v2505 = vpack.c.b16 %v2461, %v2457
    %v2506 = vpack.c.b16 %v2462, %v2458
    %v2507 = vpack.c.b16 %v2463, %v2459
    %v2508 = vpack.c.b16 %v2468, %v2464
    %v2509 = vpack.c.b16 %v2469, %v2465
    %v2510 = vpack.c.b16 %v2470, %v2466
    %v2511 = vpack.c.b16 %v2471, %v2467
    %v2512 = vpack.c.b16 %v2476, %v2472
    %v2513 = vpack.c.b16 %v2477, %v2473
    %v2514 = vpack.c.b16 %v2478, %v2474
    %v2515 = vpack.c.b16 %v2479, %v2475
    %v2516 = vpack.c.b16 %v2484, %v2480
    %v2517 = vpack.c.b16 %v2485, %v2481
    %v2518 = vpack.c.b16 %v2486, %v2482
    %v2519 = vpack.c.b16 %v2487, %v2483
    %2552 = vmatpush.bf16.msra.mxu0 %v2516
    %2553 = vmatpush.bf16.msra.mxu0 %v2512
    %2554 = vmatpush.bf16.msra.mxu0 %v2508
    %2555 = vmatpush.bf16.msra.mxu0 %v2504
    %2556 = vmatpush.bf16.msra.mxu0 %v2500
    %2557 = vmatpush.bf16.msra.mxu0 %v2496
    %2558 = vmatpush.bf16.msra.mxu0 %v2492
    %2559 = vmatpush.bf16.msra.mxu0 %v2488
    %2560 = vmatmul.bf16.gmra.mxu0 %v2359
    %v2561 = vpop.f32.mrf.mxu0
    %v2562 = vadd.f32 0.0, %v2561
    %v2563 = vpop.f32.mrf.mxu0
    %2564 = vdwg.mxu0
    %2565 = vmatpush.bf16.msra.mxu0 %v2517
    %2566 = vmatpush.bf16.msra.mxu0 %v2513
    %2567 = vmatpush.bf16.msra.mxu0 %v2509
    %2568 = vmatpush.bf16.msra.mxu0 %v2505
    %2569 = vmatpush.bf16.msra.mxu0 %v2501
    %2570 = vmatpush.bf16.msra.mxu0 %v2497
    %2571 = vmatpush.bf16.msra.mxu0 %v2493
    %2572 = vmatpush.bf16.msra.mxu0 %v2489
    %2573 = vmatmul.bf16.gmra.mxu0 %v2359
    %v2574 = vpop.f32.mrf.mxu0
    %v2575 = vadd.f32 0.0, %v2574
    %v2576 = vpop.f32.mrf.mxu0
    %2577 = vdwg.mxu0
    %2578 = vmatpush.bf16.msra.mxu0 %v2518
    %2579 = vmatpush.bf16.msra.mxu0 %v2514
    %2580 = vmatpush.bf16.msra.mxu0 %v2510
    %2581 = vmatpush.bf16.msra.mxu0 %v2506
    %2582 = vmatpush.bf16.msra.mxu0 %v2502
    %2583 = vmatpush.bf16.msra.mxu0 %v2498
    %2584 = vmatpush.bf16.msra.mxu0 %v2494
    %2585 = vmatpush.bf16.msra.mxu0 %v2490
    %2586 = vmatmul.bf16.gmra.mxu0 %v2359
    %v2587 = vpop.f32.mrf.mxu0
    %v2588 = vadd.f32 0.0, %v2587
    %v2589 = vpop.f32.mrf.mxu0
    %2590 = vdwg.mxu0
    %2591 = vmatpush.bf16.msra.mxu0 %v2519
    %2592 = vmatpush.bf16.msra.mxu0 %v2515
    %2593 = vmatpush.bf16.msra.mxu0 %v2511
    %2594 = vmatpush.bf16.msra.mxu0 %v2507
    %2595 = vmatpush.bf16.msra.mxu0 %v2503
    %2596 = vmatpush.bf16.msra.mxu0 %v2499
    %2597 = vmatpush.bf16.msra.mxu0 %v2495
    %2598 = vmatpush.bf16.msra.mxu0 %v2491
    %2599 = vmatmul.bf16.gmra.mxu0 %v2359
    %v2600 = vpop.f32.mrf.mxu0
    %v2601 = vadd.f32 0.0, %v2600
    %v2602 = vpop.f32.mrf.mxu0
    %2603 = vdwg.mxu0
    %v2604 = vadd.f32 %v2355, %v2562
    %v2605 = vadd.f32 %v2356, %v2575
    %v2606 = vadd.f32 %v2357, %v2588
    %v2607 = vadd.f32 %v2358, %v2601
    %v2608 = vxor.u32 %v2604, 2147483648
    %v2609 = vmul.f32 %v2608, 1.442695
    %v2610 = vpow.pop %v2609
    %v2611 = vadd.f32 %v2610, 1.0
    %v2612 = vrcp.pop %v2611
    %v2613 = vmul.f32 %v2611, %v2612
    %v2614 = vsub.f32 1.0, %v2613
    %v2615 = vmul.f32 %v2612, %v2614
    %v2616 = vadd.f32 %v2612, %v2615
    %vm2617 = vweird.f32 %v2611
    %vm2618 = vweird.f32 %v2612
    %vm2619 = vmor %vm2617, %vm2618
    %v2620 = vsel %vm2619, %v2612, %v2616
    %v2621 = vand.u32 2147483647, %v2611
    %vm2622 = vcmp.eq.f32.partialorder %v2621, 8.507059e+37
    %v2623 = vand.u32 %v2611, 2147483648
    %v2624 = vor.u32 1.1754944e-38, %v2623
    %v2625 = vsel %vm2622, %v2624, %v2620
    %v2626 = vmul.f32 1.0, %v2625
    %v2627 = vxor.u32 %v2605, 2147483648
    %v2628 = vmul.f32 %v2627, 1.442695
    %v2629 = vpow.pop %v2628
    %v2630 = vadd.f32 %v2629, 1.0
    %v2631 = vrcp.pop %v2630
    %v2632 = vmul.f32 %v2630, %v2631
    %v2633 = vsub.f32 1.0, %v2632
    %v2634 = vmul.f32 %v2631, %v2633
    %v2635 = vadd.f32 %v2631, %v2634
    %vm2636 = vweird.f32 %v2630
    %vm2637 = vweird.f32 %v2631
    %vm2638 = vmor %vm2636, %vm2637
    %v2639 = vsel %vm2638, %v2631, %v2635
    %v2640 = vand.u32 2147483647, %v2630
    %vm2641 = vcmp.eq.f32.partialorder %v2640, 8.507059e+37
    %v2642 = vand.u32 %v2630, 2147483648
    %v2643 = vor.u32 1.1754944e-38, %v2642
    %v2644 = vsel %vm2641, %v2643, %v2639
    %v2645 = vmul.f32 1.0, %v2644
    %v2646 = vtanh.pop %v2606
    %v2647 = vxor.u32 %v2607, 2147483648
    %v2648 = vmul.f32 %v2647, 1.442695
    %v2649 = vpow.pop %v2648
    %v2650 = vadd.f32 %v2649, 1.0
    %v2651 = vrcp.pop %v2650
    %v2652 = vmul.f32 %v2650, %v2651
    %v2653 = vsub.f32 1.0, %v2652
    %v2654 = vmul.f32 %v2651, %v2653
    %v2655 = vadd.f32 %v2651, %v2654
    %vm2656 = vweird.f32 %v2650
    %vm2657 = vweird.f32 %v2651
    %vm2658 = vmor %vm2656, %vm2657
    %v2659 = vsel %vm2658, %v2651, %v2655
    %v2660 = vand.u32 2147483647, %v2650
    %vm2661 = vcmp.eq.f32.partialorder %v2660, 8.507059e+37
    %v2662 = vand.u32 %v2650, 2147483648
    %v2663 = vor.u32 1.1754944e-38, %v2662
    %v2664 = vsel %vm2661, %v2663, %v2659
    %v2665 = vmul.f32 1.0, %v2664
    %v2666 = vld [vmem:[#allocation4] sm:$0xff]
    %v2667 = vmul.f32 %v2645, %v2666
    %v2668 = vmul.f32 %v2626, %v2646
    %v2669 = vadd.f32 %v2667, %v2668
    %2670 = vst [vmem:[#allocation4] sm:$0xff] %v2669
    %v2671 = vtanh.pop %v2669
    %v2672 = vmul.f32 %v2665, %v2671
    %v2673 = vpack.c.bf16 %v2672, %v2672
    %2674 = vst [vmem:[#allocation3] sm:$0xf] %v2673
    %v2675 = vld [vmem:[%s815] sm:$0xff]
    %v2676 = vld [vmem:[%s815 + $0x8] sm:$0xff]
    %v2677 = vunpack.c.l.bf16 %v2675
    %v2678 = vunpack.c.h.bf16 %v2675
    %v2679 = vunpack.c.l.bf16 %v2676
    %v2680 = vunpack.c.h.bf16 %v2676
    %v2681 = vld [vmem:[#allocation3] sm:$0xf]
    %v2682 = vld [vmem:[%s6] sm:$0xff]
    %v2683 = vld [vmem:[%s6 + $0x8] sm:$0xff]
    %v2684 = vld [vmem:[%s6 + $0x10] sm:$0xff]
    %v2685 = vld [vmem:[%s6 + $0x18] sm:$0xff]
    %v2686 = vld [vmem:[%s6 + $0x20] sm:$0xff]
    %v2687 = vld [vmem:[%s6 + $0x28] sm:$0xff]
    %v2688 = vld [vmem:[%s6 + $0x30] sm:$0xff]
    %v2689 = vld [vmem:[%s6 + $0x38] sm:$0xff]
    %v2690 = vld [vmem:[%s6 + $0x40] sm:$0xff]
    %v2691 = vld [vmem:[%s6 + $0x48] sm:$0xff]
    %v2692 = vld [vmem:[%s6 + $0x50] sm:$0xff]
    %v2693 = vld [vmem:[%s6 + $0x58] sm:$0xff]
    %v2694 = vld [vmem:[%s6 + $0x60] sm:$0xff]
    %v2695 = vld [vmem:[%s6 + $0x68] sm:$0xff]
    %v2696 = vld [vmem:[%s6 + $0x70] sm:$0xff]
    %v2697 = vld [vmem:[%s6 + $0x78] sm:$0xff]
    %v2698 = vld [vmem:[%s6 + $0x80] sm:$0xff]
    %v2699 = vld [vmem:[%s6 + $0x88] sm:$0xff]
    %v2700 = vld [vmem:[%s6 + $0x90] sm:$0xff]
    %v2701 = vld [vmem:[%s6 + $0x98] sm:$0xff]
    %v2702 = vld [vmem:[%s6 + $0xa0] sm:$0xff]
    %v2703 = vld [vmem:[%s6 + $0xa8] sm:$0xff]
    %v2704 = vld [vmem:[%s6 + $0xb0] sm:$0xff]
    %v2705 = vld [vmem:[%s6 + $0xb8] sm:$0xff]
    %v2706 = vld [vmem:[%s6 + $0xc0] sm:$0xff]
    %v2707 = vld [vmem:[%s6 + $0xc8] sm:$0xff]
    %v2708 = vld [vmem:[%s6 + $0xd0] sm:$0xff]
    %v2709 = vld [vmem:[%s6 + $0xd8] sm:$0xff]
    %v2710 = vld [vmem:[%s6 + $0xe0] sm:$0xff]
    %v2711 = vld [vmem:[%s6 + $0xe8] sm:$0xff]
    %v2712 = vld [vmem:[%s6 + $0xf0] sm:$0xff]
    %v2713 = vld [vmem:[%s6 + $0xf8] sm:$0xff]
    %v2746 = vunpack.c.l.b16 %v2682
    %v2747 = vunpack.c.h.b16 %v2682
    %v2748 = vunpack.c.l.b16 %v2683
    %v2749 = vunpack.c.h.b16 %v2683
    %v2750 = vunpack.c.l.b16 %v2684
    %v2751 = vunpack.c.h.b16 %v2684
    %v2752 = vunpack.c.l.b16 %v2685
    %v2753 = vunpack.c.h.b16 %v2685
    %v2754 = vunpack.c.l.b16 %v2686
    %v2755 = vunpack.c.h.b16 %v2686
    %v2756 = vunpack.c.l.b16 %v2687
    %v2757 = vunpack.c.h.b16 %v2687
    %v2758 = vunpack.c.l.b16 %v2688
    %v2759 = vunpack.c.h.b16 %v2688
    %v2760 = vunpack.c.l.b16 %v2689
    %v2761 = vunpack.c.h.b16 %v2689
    %v2762 = vunpack.c.l.b16 %v2690
    %v2763 = vunpack.c.h.b16 %v2690
    %v2764 = vunpack.c.l.b16 %v2691
    %v2765 = vunpack.c.h.b16 %v2691
    %v2766 = vunpack.c.l.b16 %v2692
    %v2767 = vunpack.c.h.b16 %v2692
    %v2768 = vunpack.c.l.b16 %v2693
    %v2769 = vunpack.c.h.b16 %v2693
    %v2770 = vunpack.c.l.b16 %v2694
    %v2771 = vunpack.c.h.b16 %v2694
    %v2772 = vunpack.c.l.b16 %v2695
    %v2773 = vunpack.c.h.b16 %v2695
    %v2774 = vunpack.c.l.b16 %v2696
    %v2775 = vunpack.c.h.b16 %v2696
    %v2776 = vunpack.c.l.b16 %v2697
    %v2777 = vunpack.c.h.b16 %v2697
    %v2778 = vunpack.c.l.b16 %v2698
    %v2779 = vunpack.c.h.b16 %v2698
    %v2780 = vunpack.c.l.b16 %v2699
    %v2781 = vunpack.c.h.b16 %v2699
    %v2782 = vunpack.c.l.b16 %v2700
    %v2783 = vunpack.c.h.b16 %v2700
    %v2784 = vunpack.c.l.b16 %v2701
    %v2785 = vunpack.c.h.b16 %v2701
    %v2786 = vunpack.c.l.b16 %v2702
    %v2787 = vunpack.c.h.b16 %v2702
    %v2788 = vunpack.c.l.b16 %v2703
    %v2789 = vunpack.c.h.b16 %v2703
    %v2790 = vunpack.c.l.b16 %v2704
    %v2791 = vunpack.c.h.b16 %v2704
    %v2792 = vunpack.c.l.b16 %v2705
    %v2793 = vunpack.c.h.b16 %v2705
    %v2794 = vunpack.c.l.b16 %v2706
    %v2795 = vunpack.c.h.b16 %v2706
    %v2796 = vunpack.c.l.b16 %v2707
    %v2797 = vunpack.c.h.b16 %v2707
    %v2798 = vunpack.c.l.b16 %v2708
    %v2799 = vunpack.c.h.b16 %v2708
    %v2800 = vunpack.c.l.b16 %v2709
    %v2801 = vunpack.c.h.b16 %v2709
    %v2802 = vunpack.c.l.b16 %v2710
    %v2803 = vunpack.c.h.b16 %v2710
    %v2804 = vunpack.c.l.b16 %v2711
    %v2805 = vunpack.c.h.b16 %v2711
    %v2806 = vunpack.c.l.b16 %v2712
    %v2807 = vunpack.c.h.b16 %v2712
    %v2808 = vunpack.c.l.b16 %v2713
    %v2809 = vunpack.c.h.b16 %v2713
    %v2810 = vpack.c.b16 %v2750, %v2746
    %v2811 = vpack.c.b16 %v2751, %v2747
    %v2812 = vpack.c.b16 %v2752, %v2748
    %v2813 = vpack.c.b16 %v2753, %v2749
    %v2814 = vpack.c.b16 %v2758, %v2754
    %v2815 = vpack.c.b16 %v2759, %v2755
    %v2816 = vpack.c.b16 %v2760, %v2756
    %v2817 = vpack.c.b16 %v2761, %v2757
    %v2818 = vpack.c.b16 %v2766, %v2762
    %v2819 = vpack.c.b16 %v2767, %v2763
    %v2820 = vpack.c.b16 %v2768, %v2764
    %v2821 = vpack.c.b16 %v2769, %v2765
    %v2822 = vpack.c.b16 %v2774, %v2770
    %v2823 = vpack.c.b16 %v2775, %v2771
    %v2824 = vpack.c.b16 %v2776, %v2772
    %v2825 = vpack.c.b16 %v2777, %v2773
    %v2826 = vpack.c.b16 %v2782, %v2778
    %v2827 = vpack.c.b16 %v2783, %v2779
    %v2828 = vpack.c.b16 %v2784, %v2780
    %v2829 = vpack.c.b16 %v2785, %v2781
    %v2830 = vpack.c.b16 %v2790, %v2786
    %v2831 = vpack.c.b16 %v2791, %v2787
    %v2832 = vpack.c.b16 %v2792, %v2788
    %v2833 = vpack.c.b16 %v2793, %v2789
    %v2834 = vpack.c.b16 %v2798, %v2794
    %v2835 = vpack.c.b16 %v2799, %v2795
    %v2836 = vpack.c.b16 %v2800, %v2796
    %v2837 = vpack.c.b16 %v2801, %v2797
    %v2838 = vpack.c.b16 %v2806, %v2802
    %v2839 = vpack.c.b16 %v2807, %v2803
    %v2840 = vpack.c.b16 %v2808, %v2804
    %v2841 = vpack.c.b16 %v2809, %v2805
    %2874 = vmatpush.bf16.msra.mxu0 %v2838
    %2875 = vmatpush.bf16.msra.mxu0 %v2834
    %2876 = vmatpush.bf16.msra.mxu0 %v2830
    %2877 = vmatpush.bf16.msra.mxu0 %v2826
    %2878 = vmatpush.bf16.msra.mxu0 %v2822
    %2879 = vmatpush.bf16.msra.mxu0 %v2818
    %2880 = vmatpush.bf16.msra.mxu0 %v2814
    %2881 = vmatpush.bf16.msra.mxu0 %v2810
    %2882 = vmatmul.bf16.gmra.mxu0 %v2681
    %v2883 = vpop.f32.mrf.mxu0
    %v2884 = vadd.f32 0.0, %v2883
    %v2885 = vpop.f32.mrf.mxu0
    %2886 = vdwg.mxu0
    %2887 = vmatpush.bf16.msra.mxu0 %v2839
    %2888 = vmatpush.bf16.msra.mxu0 %v2835
    %2889 = vmatpush.bf16.msra.mxu0 %v2831
    %2890 = vmatpush.bf16.msra.mxu0 %v2827
    %2891 = vmatpush.bf16.msra.mxu0 %v2823
    %2892 = vmatpush.bf16.msra.mxu0 %v2819
    %2893 = vmatpush.bf16.msra.mxu0 %v2815
    %2894 = vmatpush.bf16.msra.mxu0 %v2811
    %2895 = vmatmul.bf16.gmra.mxu0 %v2681
    %v2896 = vpop.f32.mrf.mxu0
    %v2897 = vadd.f32 0.0, %v2896
    %v2898 = vpop.f32.mrf.mxu0
    %2899 = vdwg.mxu0
    %2900 = vmatpush.bf16.msra.mxu0 %v2840
    %2901 = vmatpush.bf16.msra.mxu0 %v2836
    %2902 = vmatpush.bf16.msra.mxu0 %v2832
    %2903 = vmatpush.bf16.msra.mxu0 %v2828
    %2904 = vmatpush.bf16.msra.mxu0 %v2824
    %2905 = vmatpush.bf16.msra.mxu0 %v2820
    %2906 = vmatpush.bf16.msra.mxu0 %v2816
    %2907 = vmatpush.bf16.msra.mxu0 %v2812
    %2908 = vmatmul.bf16.gmra.mxu0 %v2681
    %v2909 = vpop.f32.mrf.mxu0
    %v2910 = vadd.f32 0.0, %v2909
    %v2911 = vpop.f32.mrf.mxu0
    %2912 = vdwg.mxu0
    %2913 = vmatpush.bf16.msra.mxu0 %v2841
    %2914 = vmatpush.bf16.msra.mxu0 %v2837
    %2915 = vmatpush.bf16.msra.mxu0 %v2833
    %2916 = vmatpush.bf16.msra.mxu0 %v2829
    %2917 = vmatpush.bf16.msra.mxu0 %v2825
    %2918 = vmatpush.bf16.msra.mxu0 %v2821
    %2919 = vmatpush.bf16.msra.mxu0 %v2817
    %2920 = vmatpush.bf16.msra.mxu0 %v2813
    %2921 = vmatmul.bf16.gmra.mxu0 %v2681
    %v2922 = vpop.f32.mrf.mxu0
    %v2923 = vadd.f32 0.0, %v2922
    %v2924 = vpop.f32.mrf.mxu0
    %2925 = vdwg.mxu0
    %v2926 = vadd.f32 %v2677, %v2884
    %v2927 = vadd.f32 %v2678, %v2897
    %v2928 = vadd.f32 %v2679, %v2910
    %v2929 = vadd.f32 %v2680, %v2923
    %v2930 = vxor.u32 %v2926, 2147483648
    %v2931 = vmul.f32 %v2930, 1.442695
    %v2932 = vpow.pop %v2931
    %v2933 = vadd.f32 %v2932, 1.0
    %v2934 = vrcp.pop %v2933
    %v2935 = vmul.f32 %v2933, %v2934
    %v2936 = vsub.f32 1.0, %v2935
    %v2937 = vmul.f32 %v2934, %v2936
    %v2938 = vadd.f32 %v2934, %v2937
    %vm2939 = vweird.f32 %v2933
    %vm2940 = vweird.f32 %v2934
    %vm2941 = vmor %vm2939, %vm2940
    %v2942 = vsel %vm2941, %v2934, %v2938
    %v2943 = vand.u32 2147483647, %v2933
    %vm2944 = vcmp.eq.f32.partialorder %v2943, 8.507059e+37
    %v2945 = vand.u32 %v2933, 2147483648
    %v2946 = vor.u32 1.1754944e-38, %v2945
    %v2947 = vsel %vm2944, %v2946, %v2942
    %v2948 = vmul.f32 1.0, %v2947
    %v2949 = vxor.u32 %v2927, 2147483648
    %v2950 = vmul.f32 %v2949, 1.442695
    %v2951 = vpow.pop %v2950
    %v2952 = vadd.f32 %v2951, 1.0
    %v2953 = vrcp.pop %v2952
    %v2954 = vmul.f32 %v2952, %v2953
    %v2955 = vsub.f32 1.0, %v2954
    %v2956 = vmul.f32 %v2953, %v2955
    %v2957 = vadd.f32 %v2953, %v2956
    %vm2958 = vweird.f32 %v2952
    %vm2959 = vweird.f32 %v2953
    %vm2960 = vmor %vm2958, %vm2959
    %v2961 = vsel %vm2960, %v2953, %v2957
    %v2962 = vand.u32 2147483647, %v2952
    %vm2963 = vcmp.eq.f32.partialorder %v2962, 8.507059e+37
    %v2964 = vand.u32 %v2952, 2147483648
    %v2965 = vor.u32 1.1754944e-38, %v2964
    %v2966 = vsel %vm2963, %v2965, %v2961
    %v2967 = vmul.f32 1.0, %v2966
    %v2968 = vtanh.pop %v2928
    %v2969 = vxor.u32 %v2929, 2147483648
    %v2970 = vmul.f32 %v2969, 1.442695
    %v2971 = vpow.pop %v2970
    %v2972 = vadd.f32 %v2971, 1.0
    %v2973 = vrcp.pop %v2972
    %v2974 = vmul.f32 %v2972, %v2973
    %v2975 = vsub.f32 1.0, %v2974
    %v2976 = vmul.f32 %v2973, %v2975
    %v2977 = vadd.f32 %v2973, %v2976
    %vm2978 = vweird.f32 %v2972
    %vm2979 = vweird.f32 %v2973
    %vm2980 = vmor %vm2978, %vm2979
    %v2981 = vsel %vm2980, %v2973, %v2977
    %v2982 = vand.u32 2147483647, %v2972
    %vm2983 = vcmp.eq.f32.partialorder %v2982, 8.507059e+37
    %v2984 = vand.u32 %v2972, 2147483648
    %v2985 = vor.u32 1.1754944e-38, %v2984
    %v2986 = vsel %vm2983, %v2985, %v2981
    %v2987 = vmul.f32 1.0, %v2986
    %v2988 = vld [vmem:[#allocation4] sm:$0xff]
    %v2989 = vmul.f32 %v2967, %v2988
    %v2990 = vmul.f32 %v2948, %v2968
    %v2991 = vadd.f32 %v2989, %v2990
    %2992 = vst [vmem:[#allocation4] sm:$0xff] %v2991
    %v2993 = vtanh.pop %v2991
    %v2994 = vmul.f32 %v2987, %v2993
    %v2995 = vpack.c.bf16 %v2994, %v2994
    %2996 = vst [vmem:[#allocation3] sm:$0xf] %v2995
    %v2997 = vld [vmem:[%s1326] sm:$0xff]
    %v2998 = vld [vmem:[%s1326 + $0x8] sm:$0xff]
    %v2999 = vunpack.c.l.bf16 %v2997
    %v3000 = vunpack.c.h.bf16 %v2997
    %v3001 = vunpack.c.l.bf16 %v2998
    %v3002 = vunpack.c.h.bf16 %v2998
    %v3003 = vld [vmem:[#allocation3] sm:$0xf]
    %v3004 = vld [vmem:[%s6] sm:$0xff]
    %v3005 = vld [vmem:[%s6 + $0x8] sm:$0xff]
    %v3006 = vld [vmem:[%s6 + $0x10] sm:$0xff]
    %v3007 = vld [vmem:[%s6 + $0x18] sm:$0xff]
    %v3008 = vld [vmem:[%s6 + $0x20] sm:$0xff]
    %v3009 = vld [vmem:[%s6 + $0x28] sm:$0xff]
    %v3010 = vld [vmem:[%s6 + $0x30] sm:$0xff]
    %v3011 = vld [vmem:[%s6 + $0x38] sm:$0xff]
    %v3012 = vld [vmem:[%s6 + $0x40] sm:$0xff]
    %v3013 = vld [vmem:[%s6 + $0x48] sm:$0xff]
    %v3014 = vld [vmem:[%s6 + $0x50] sm:$0xff]
    %v3015 = vld [vmem:[%s6 + $0x58] sm:$0xff]
    %v3016 = vld [vmem:[%s6 + $0x60] sm:$0xff]
    %v3017 = vld [vmem:[%s6 + $0x68] sm:$0xff]
    %v3018 = vld [vmem:[%s6 + $0x70] sm:$0xff]
    %v3019 = vld [vmem:[%s6 + $0x78] sm:$0xff]
    %v3020 = vld [vmem:[%s6 + $0x80] sm:$0xff]
    %v3021 = vld [vmem:[%s6 + $0x88] sm:$0xff]
    %v3022 = vld [vmem:[%s6 + $0x90] sm:$0xff]
    %v3023 = vld [vmem:[%s6 + $0x98] sm:$0xff]
    %v3024 = vld [vmem:[%s6 + $0xa0] sm:$0xff]
    %v3025 = vld [vmem:[%s6 + $0xa8] sm:$0xff]
    %v3026 = vld [vmem:[%s6 + $0xb0] sm:$0xff]
    %v3027 = vld [vmem:[%s6 + $0xb8] sm:$0xff]
    %v3028 = vld [vmem:[%s6 + $0xc0] sm:$0xff]
    %v3029 = vld [vmem:[%s6 + $0xc8] sm:$0xff]
    %v3030 = vld [vmem:[%s6 + $0xd0] sm:$0xff]
    %v3031 = vld [vmem:[%s6 + $0xd8] sm:$0xff]
    %v3032 = vld [vmem:[%s6 + $0xe0] sm:$0xff]
    %v3033 = vld [vmem:[%s6 + $0xe8] sm:$0xff]
    %v3034 = vld [vmem:[%s6 + $0xf0] sm:$0xff]
    %v3035 = vld [vmem:[%s6 + $0xf8] sm:$0xff]
    %v3068 = vunpack.c.l.b16 %v3004
    %v3069 = vunpack.c.h.b16 %v3004
    %v3070 = vunpack.c.l.b16 %v3005
    %v3071 = vunpack.c.h.b16 %v3005
    %v3072 = vunpack.c.l.b16 %v3006
    %v3073 = vunpack.c.h.b16 %v3006
    %v3074 = vunpack.c.l.b16 %v3007
    %v3075 = vunpack.c.h.b16 %v3007
    %v3076 = vunpack.c.l.b16 %v3008
    %v3077 = vunpack.c.h.b16 %v3008
    %v3078 = vunpack.c.l.b16 %v3009
    %v3079 = vunpack.c.h.b16 %v3009
    %v3080 = vunpack.c.l.b16 %v3010
    %v3081 = vunpack.c.h.b16 %v3010
    %v3082 = vunpack.c.l.b16 %v3011
    %v3083 = vunpack.c.h.b16 %v3011
    %v3084 = vunpack.c.l.b16 %v3012
    %v3085 = vunpack.c.h.b16 %v3012
    %v3086 = vunpack.c.l.b16 %v3013
    %v3087 = vunpack.c.h.b16 %v3013
    %v3088 = vunpack.c.l.b16 %v3014
    %v3089 = vunpack.c.h.b16 %v3014
    %v3090 = vunpack.c.l.b16 %v3015
    %v3091 = vunpack.c.h.b16 %v3015
    %v3092 = vunpack.c.l.b16 %v3016
    %v3093 = vunpack.c.h.b16 %v3016
    %v3094 = vunpack.c.l.b16 %v3017
    %v3095 = vunpack.c.h.b16 %v3017
    %v3096 = vunpack.c.l.b16 %v3018
    %v3097 = vunpack.c.h.b16 %v3018
    %v3098 = vunpack.c.l.b16 %v3019
    %v3099 = vunpack.c.h.b16 %v3019
    %v3100 = vunpack.c.l.b16 %v3020
    %v3101 = vunpack.c.h.b16 %v3020
    %v3102 = vunpack.c.l.b16 %v3021
    %v3103 = vunpack.c.h.b16 %v3021
    %v3104 = vunpack.c.l.b16 %v3022
    %v3105 = vunpack.c.h.b16 %v3022
    %v3106 = vunpack.c.l.b16 %v3023
    %v3107 = vunpack.c.h.b16 %v3023
    %v3108 = vunpack.c.l.b16 %v3024
    %v3109 = vunpack.c.h.b16 %v3024
    %v3110 = vunpack.c.l.b16 %v3025
    %v3111 = vunpack.c.h.b16 %v3025
    %v3112 = vunpack.c.l.b16 %v3026
    %v3113 = vunpack.c.h.b16 %v3026
    %v3114 = vunpack.c.l.b16 %v3027
    %v3115 = vunpack.c.h.b16 %v3027
    %v3116 = vunpack.c.l.b16 %v3028
    %v3117 = vunpack.c.h.b16 %v3028
    %v3118 = vunpack.c.l.b16 %v3029
    %v3119 = vunpack.c.h.b16 %v3029
    %v3120 = vunpack.c.l.b16 %v3030
    %v3121 = vunpack.c.h.b16 %v3030
    %v3122 = vunpack.c.l.b16 %v3031
    %v3123 = vunpack.c.h.b16 %v3031
    %v3124 = vunpack.c.l.b16 %v3032
    %v3125 = vunpack.c.h.b16 %v3032
    %v3126 = vunpack.c.l.b16 %v3033
    %v3127 = vunpack.c.h.b16 %v3033
    %v3128 = vunpack.c.l.b16 %v3034
    %v3129 = vunpack.c.h.b16 %v3034
    %v3130 = vunpack.c.l.b16 %v3035
    %v3131 = vunpack.c.h.b16 %v3035
    %v3132 = vpack.c.b16 %v3072, %v3068
    %v3133 = vpack.c.b16 %v3073, %v3069
    %v3134 = vpack.c.b16 %v3074, %v3070
    %v3135 = vpack.c.b16 %v3075, %v3071
    %v3136 = vpack.c.b16 %v3080, %v3076
    %v3137 = vpack.c.b16 %v3081, %v3077
    %v3138 = vpack.c.b16 %v3082, %v3078
    %v3139 = vpack.c.b16 %v3083, %v3079
    %v3140 = vpack.c.b16 %v3088, %v3084
    %v3141 = vpack.c.b16 %v3089, %v3085
    %v3142 = vpack.c.b16 %v3090, %v3086
    %v3143 = vpack.c.b16 %v3091, %v3087
    %v3144 = vpack.c.b16 %v3096, %v3092
    %v3145 = vpack.c.b16 %v3097, %v3093
    %v3146 = vpack.c.b16 %v3098, %v3094
    %v3147 = vpack.c.b16 %v3099, %v3095
    %v3148 = vpack.c.b16 %v3104, %v3100
    %v3149 = vpack.c.b16 %v3105, %v3101
    %v3150 = vpack.c.b16 %v3106, %v3102
    %v3151 = vpack.c.b16 %v3107, %v3103
    %v3152 = vpack.c.b16 %v3112, %v3108
    %v3153 = vpack.c.b16 %v3113, %v3109
    %v3154 = vpack.c.b16 %v3114, %v3110
    %v3155 = vpack.c.b16 %v3115, %v3111
    %v3156 = vpack.c.b16 %v3120, %v3116
    %v3157 = vpack.c.b16 %v3121, %v3117
    %v3158 = vpack.c.b16 %v3122, %v3118
    %v3159 = vpack.c.b16 %v3123, %v3119
    %v3160 = vpack.c.b16 %v3128, %v3124
    %v3161 = vpack.c.b16 %v3129, %v3125
    %v3162 = vpack.c.b16 %v3130, %v3126
    %v3163 = vpack.c.b16 %v3131, %v3127
    %3196 = vmatpush.bf16.msra.mxu0 %v3160
    %3197 = vmatpush.bf16.msra.mxu0 %v3156
    %3198 = vmatpush.bf16.msra.mxu0 %v3152
    %3199 = vmatpush.bf16.msra.mxu0 %v3148
    %3200 = vmatpush.bf16.msra.mxu0 %v3144
    %3201 = vmatpush.bf16.msra.mxu0 %v3140
    %3202 = vmatpush.bf16.msra.mxu0 %v3136
    %3203 = vmatpush.bf16.msra.mxu0 %v3132
    %3204 = vmatmul.bf16.gmra.mxu0 %v3003
    %v3205 = vpop.f32.mrf.mxu0
    %v3206 = vadd.f32 0.0, %v3205
    %v3207 = vpop.f32.mrf.mxu0
    %3208 = vdwg.mxu0
    %3209 = vmatpush.bf16.msra.mxu0 %v3161
    %3210 = vmatpush.bf16.msra.mxu0 %v3157
    %3211 = vmatpush.bf16.msra.mxu0 %v3153
    %3212 = vmatpush.bf16.msra.mxu0 %v3149
    %3213 = vmatpush.bf16.msra.mxu0 %v3145
    %3214 = vmatpush.bf16.msra.mxu0 %v3141
    %3215 = vmatpush.bf16.msra.mxu0 %v3137
    %3216 = vmatpush.bf16.msra.mxu0 %v3133
    %3217 = vmatmul.bf16.gmra.mxu0 %v3003
    %v3218 = vpop.f32.mrf.mxu0
    %v3219 = vadd.f32 0.0, %v3218
    %v3220 = vpop.f32.mrf.mxu0
    %3221 = vdwg.mxu0
    %3222 = vmatpush.bf16.msra.mxu0 %v3162
    %3223 = vmatpush.bf16.msra.mxu0 %v3158
    %3224 = vmatpush.bf16.msra.mxu0 %v3154
    %3225 = vmatpush.bf16.msra.mxu0 %v3150
    %3226 = vmatpush.bf16.msra.mxu0 %v3146
    %3227 = vmatpush.bf16.msra.mxu0 %v3142
    %3228 = vmatpush.bf16.msra.mxu0 %v3138
    %3229 = vmatpush.bf16.msra.mxu0 %v3134
    %3230 = vmatmul.bf16.gmra.mxu0 %v3003
    %v3231 = vpop.f32.mrf.mxu0
    %v3232 = vadd.f32 0.0, %v3231
    %v3233 = vpop.f32.mrf.mxu0
    %3234 = vdwg.mxu0
    %3235 = vmatpush.bf16.msra.mxu0 %v3163
    %3236 = vmatpush.bf16.msra.mxu0 %v3159
    %3237 = vmatpush.bf16.msra.mxu0 %v3155
    %3238 = vmatpush.bf16.msra.mxu0 %v3151
    %3239 = vmatpush.bf16.msra.mxu0 %v3147
    %3240 = vmatpush.bf16.msra.mxu0 %v3143
    %3241 = vmatpush.bf16.msra.mxu0 %v3139
    %3242 = vmatpush.bf16.msra.mxu0 %v3135
    %3243 = vmatmul.bf16.gmra.mxu0 %v3003
    %v3244 = vpop.f32.mrf.mxu0
    %v3245 = vadd.f32 0.0, %v3244
    %v3246 = vpop.f32.mrf.mxu0
    %3247 = vdwg.mxu0
    %v3248 = vadd.f32 %v2999, %v3206
    %v3249 = vadd.f32 %v3000, %v3219
    %v3250 = vadd.f32 %v3001, %v3232
    %v3251 = vadd.f32 %v3002, %v3245
    %v3252 = vxor.u32 %v3248, 2147483648
    %v3253 = vmul.f32 %v3252, 1.442695
    %v3254 = vpow.pop %v3253
    %v3255 = vadd.f32 %v3254, 1.0
    %v3256 = vrcp.pop %v3255
    %v3257 = vmul.f32 %v3255, %v3256
    %v3258 = vsub.f32 1.0, %v3257
    %v3259 = vmul.f32 %v3256, %v3258
    %v3260 = vadd.f32 %v3256, %v3259
    %vm3261 = vweird.f32 %v3255
    %vm3262 = vweird.f32 %v3256
    %vm3263 = vmor %vm3261, %vm3262
    %v3264 = vsel %vm3263, %v3256, %v3260
    %v3265 = vand.u32 2147483647, %v3255
    %vm3266 = vcmp.eq.f32.partialorder %v3265, 8.507059e+37
    %v3267 = vand.u32 %v3255, 2147483648
    %v3268 = vor.u32 1.1754944e-38, %v3267
    %v3269 = vsel %vm3266, %v3268, %v3264
    %v3270 = vmul.f32 1.0, %v3269
    %v3271 = vxor.u32 %v3249, 2147483648
    %v3272 = vmul.f32 %v3271, 1.442695
    %v3273 = vpow.pop %v3272
    %v3274 = vadd.f32 %v3273, 1.0
    %v3275 = vrcp.pop %v3274
    %v3276 = vmul.f32 %v3274, %v3275
    %v3277 = vsub.f32 1.0, %v3276
    %v3278 = vmul.f32 %v3275, %v3277
    %v3279 = vadd.f32 %v3275, %v3278
    %vm3280 = vweird.f32 %v3274
    %vm3281 = vweird.f32 %v3275
    %vm3282 = vmor %vm3280, %vm3281
    %v3283 = vsel %vm3282, %v3275, %v3279
    %v3284 = vand.u32 2147483647, %v3274
    %vm3285 = vcmp.eq.f32.partialorder %v3284, 8.507059e+37
    %v3286 = vand.u32 %v3274, 2147483648
    %v3287 = vor.u32 1.1754944e-38, %v3286
    %v3288 = vsel %vm3285, %v3287, %v3283
    %v3289 = vmul.f32 1.0, %v3288
    %v3290 = vtanh.pop %v3250
    %v3291 = vxor.u32 %v3251, 2147483648
    %v3292 = vmul.f32 %v3291, 1.442695
    %v3293 = vpow.pop %v3292
    %v3294 = vadd.f32 %v3293, 1.0
    %v3295 = vrcp.pop %v3294
    %v3296 = vmul.f32 %v3294, %v3295
    %v3297 = vsub.f32 1.0, %v3296
    %v3298 = vmul.f32 %v3295, %v3297
    %v3299 = vadd.f32 %v3295, %v3298
    %vm3300 = vweird.f32 %v3294
    %vm3301 = vweird.f32 %v3295
    %vm3302 = vmor %vm3300, %vm3301
    %v3303 = vsel %vm3302, %v3295, %v3299
    %v3304 = vand.u32 2147483647, %v3294
    %vm3305 = vcmp.eq.f32.partialorder %v3304, 8.507059e+37
    %v3306 = vand.u32 %v3294, 2147483648
    %v3307 = vor.u32 1.1754944e-38, %v3306
    %v3308 = vsel %vm3305, %v3307, %v3303
    %v3309 = vmul.f32 1.0, %v3308
    %v3310 = vld [vmem:[#allocation4] sm:$0xff]
    %v3311 = vmul.f32 %v3289, %v3310
    %v3312 = vmul.f32 %v3270, %v3290
    %v3313 = vadd.f32 %v3311, %v3312
    %3314 = vst [vmem:[#allocation4] sm:$0xff] %v3313
    %v3315 = vtanh.pop %v3313
    %v3316 = vmul.f32 %v3309, %v3315
    %v3317 = vpack.c.bf16 %v3316, %v3316
    %3318 = vst [vmem:[#allocation3] sm:$0xf] %v3317
    %v3319 = vld [vmem:[%s1837] sm:$0xff]
    %v3320 = vld [vmem:[%s1837 + $0x8] sm:$0xff]
    %v3321 = vunpack.c.l.bf16 %v3319
    %v3322 = vunpack.c.h.bf16 %v3319
    %v3323 = vunpack.c.l.bf16 %v3320
    %v3324 = vunpack.c.h.bf16 %v3320
    %v3325 = vld [vmem:[#allocation3] sm:$0xf]
    %v3326 = vld [vmem:[%s6] sm:$0xff]
    %v3327 = vld [vmem:[%s6 + $0x8] sm:$0xff]
    %v3328 = vld [vmem:[%s6 + $0x10] sm:$0xff]
    %v3329 = vld [vmem:[%s6 + $0x18] sm:$0xff]
    %v3330 = vld [vmem:[%s6 + $0x20] sm:$0xff]
    %v3331 = vld [vmem:[%s6 + $0x28] sm:$0xff]
    %v3332 = vld [vmem:[%s6 + $0x30] sm:$0xff]
    %v3333 = vld [vmem:[%s6 + $0x38] sm:$0xff]
    %v3334 = vld [vmem:[%s6 + $0x40] sm:$0xff]
    %v3335 = vld [vmem:[%s6 + $0x48] sm:$0xff]
    %v3336 = vld [vmem:[%s6 + $0x50] sm:$0xff]
    %v3337 = vld [vmem:[%s6 + $0x58] sm:$0xff]
    %v3338 = vld [vmem:[%s6 + $0x60] sm:$0xff]
    %v3339 = vld [vmem:[%s6 + $0x68] sm:$0xff]
    %v3340 = vld [vmem:[%s6 + $0x70] sm:$0xff]
    %v3341 = vld [vmem:[%s6 + $0x78] sm:$0xff]
    %v3342 = vld [vmem:[%s6 + $0x80] sm:$0xff]
    %v3343 = vld [vmem:[%s6 + $0x88] sm:$0xff]
    %v3344 = vld [vmem:[%s6 + $0x90] sm:$0xff]
    %v3345 = vld [vmem:[%s6 + $0x98] sm:$0xff]
    %v3346 = vld [vmem:[%s6 + $0xa0] sm:$0xff]
    %v3347 = vld [vmem:[%s6 + $0xa8] sm:$0xff]
    %v3348 = vld [vmem:[%s6 + $0xb0] sm:$0xff]
    %v3349 = vld [vmem:[%s6 + $0xb8] sm:$0xff]
    %v3350 = vld [vmem:[%s6 + $0xc0] sm:$0xff]
    %v3351 = vld [vmem:[%s6 + $0xc8] sm:$0xff]
    %v3352 = vld [vmem:[%s6 + $0xd0] sm:$0xff]
    %v3353 = vld [vmem:[%s6 + $0xd8] sm:$0xff]
    %v3354 = vld [vmem:[%s6 + $0xe0] sm:$0xff]
    %v3355 = vld [vmem:[%s6 + $0xe8] sm:$0xff]
    %v3356 = vld [vmem:[%s6 + $0xf0] sm:$0xff]
    %v3357 = vld [vmem:[%s6 + $0xf8] sm:$0xff]
    %v3390 = vunpack.c.l.b16 %v3326
    %v3391 = vunpack.c.h.b16 %v3326
    %v3392 = vunpack.c.l.b16 %v3327
    %v3393 = vunpack.c.h.b16 %v3327
    %v3394 = vunpack.c.l.b16 %v3328
    %v3395 = vunpack.c.h.b16 %v3328
    %v3396 = vunpack.c.l.b16 %v3329
    %v3397 = vunpack.c.h.b16 %v3329
    %v3398 = vunpack.c.l.b16 %v3330
    %v3399 = vunpack.c.h.b16 %v3330
    %v3400 = vunpack.c.l.b16 %v3331
    %v3401 = vunpack.c.h.b16 %v3331
    %v3402 = vunpack.c.l.b16 %v3332
    %v3403 = vunpack.c.h.b16 %v3332
    %v3404 = vunpack.c.l.b16 %v3333
    %v3405 = vunpack.c.h.b16 %v3333
    %v3406 = vunpack.c.l.b16 %v3334
    %v3407 = vunpack.c.h.b16 %v3334
    %v3408 = vunpack.c.l.b16 %v3335
    %v3409 = vunpack.c.h.b16 %v3335
    %v3410 = vunpack.c.l.b16 %v3336
    %v3411 = vunpack.c.h.b16 %v3336
    %v3412 = vunpack.c.l.b16 %v3337
    %v3413 = vunpack.c.h.b16 %v3337
    %v3414 = vunpack.c.l.b16 %v3338
    %v3415 = vunpack.c.h.b16 %v3338
    %v3416 = vunpack.c.l.b16 %v3339
    %v3417 = vunpack.c.h.b16 %v3339
    %v3418 = vunpack.c.l.b16 %v3340
    %v3419 = vunpack.c.h.b16 %v3340
    %v3420 = vunpack.c.l.b16 %v3341
    %v3421 = vunpack.c.h.b16 %v3341
    %v3422 = vunpack.c.l.b16 %v3342
    %v3423 = vunpack.c.h.b16 %v3342
    %v3424 = vunpack.c.l.b16 %v3343
    %v3425 = vunpack.c.h.b16 %v3343
    %v3426 = vunpack.c.l.b16 %v3344
    %v3427 = vunpack.c.h.b16 %v3344
    %v3428 = vunpack.c.l.b16 %v3345
    %v3429 = vunpack.c.h.b16 %v3345
    %v3430 = vunpack.c.l.b16 %v3346
    %v3431 = vunpack.c.h.b16 %v3346
    %v3432 = vunpack.c.l.b16 %v3347
    %v3433 = vunpack.c.h.b16 %v3347
    %v3434 = vunpack.c.l.b16 %v3348
    %v3435 = vunpack.c.h.b16 %v3348
    %v3436 = vunpack.c.l.b16 %v3349
    %v3437 = vunpack.c.h.b16 %v3349
    %v3438 = vunpack.c.l.b16 %v3350
    %v3439 = vunpack.c.h.b16 %v3350
    %v3440 = vunpack.c.l.b16 %v3351
    %v3441 = vunpack.c.h.b16 %v3351
    %v3442 = vunpack.c.l.b16 %v3352
    %v3443 = vunpack.c.h.b16 %v3352
    %v3444 = vunpack.c.l.b16 %v3353
    %v3445 = vunpack.c.h.b16 %v3353
    %v3446 = vunpack.c.l.b16 %v3354
    %v3447 = vunpack.c.h.b16 %v3354
    %v3448 = vunpack.c.l.b16 %v3355
    %v3449 = vunpack.c.h.b16 %v3355
    %v3450 = vunpack.c.l.b16 %v3356
    %v3451 = vunpack.c.h.b16 %v3356
    %v3452 = vunpack.c.l.b16 %v3357
    %v3453 = vunpack.c.h.b16 %v3357
    %v3454 = vpack.c.b16 %v3394, %v3390
    %v3455 = vpack.c.b16 %v3395, %v3391
    %v3456 = vpack.c.b16 %v3396, %v3392
    %v3457 = vpack.c.b16 %v3397, %v3393
    %v3458 = vpack.c.b16 %v3402, %v3398
    %v3459 = vpack.c.b16 %v3403, %v3399
    %v3460 = vpack.c.b16 %v3404, %v3400
    %v3461 = vpack.c.b16 %v3405, %v3401
    %v3462 = vpack.c.b16 %v3410, %v3406
    %v3463 = vpack.c.b16 %v3411, %v3407
    %v3464 = vpack.c.b16 %v3412, %v3408
    %v3465 = vpack.c.b16 %v3413, %v3409
    %v3466 = vpack.c.b16 %v3418, %v3414
    %v3467 = vpack.c.b16 %v3419, %v3415
    %v3468 = vpack.c.b16 %v3420, %v3416
    %v3469 = vpack.c.b16 %v3421, %v3417
    %v3470 = vpack.c.b16 %v3426, %v3422
    %v3471 = vpack.c.b16 %v3427, %v3423
    %v3472 = vpack.c.b16 %v3428, %v3424
    %v3473 = vpack.c.b16 %v3429, %v3425
    %v3474 = vpack.c.b16 %v3434, %v3430
    %v3475 = vpack.c.b16 %v3435, %v3431
    %v3476 = vpack.c.b16 %v3436, %v3432
    %v3477 = vpack.c.b16 %v3437, %v3433
    %v3478 = vpack.c.b16 %v3442, %v3438
    %v3479 = vpack.c.b16 %v3443, %v3439
    %v3480 = vpack.c.b16 %v3444, %v3440
    %v3481 = vpack.c.b16 %v3445, %v3441
    %v3482 = vpack.c.b16 %v3450, %v3446
    %v3483 = vpack.c.b16 %v3451, %v3447
    %v3484 = vpack.c.b16 %v3452, %v3448
    %v3485 = vpack.c.b16 %v3453, %v3449
    %3518 = vmatpush.bf16.msra.mxu0 %v3482
    %3519 = vmatpush.bf16.msra.mxu0 %v3478
    %3520 = vmatpush.bf16.msra.mxu0 %v3474
    %3521 = vmatpush.bf16.msra.mxu0 %v3470
    %3522 = vmatpush.bf16.msra.mxu0 %v3466
    %3523 = vmatpush.bf16.msra.mxu0 %v3462
    %3524 = vmatpush.bf16.msra.mxu0 %v3458
    %3525 = vmatpush.bf16.msra.mxu0 %v3454
    %3526 = vmatmul.bf16.gmra.mxu0 %v3325
    %v3527 = vpop.f32.mrf.mxu0
    %v3528 = vadd.f32 0.0, %v3527
    %v3529 = vpop.f32.mrf.mxu0
    %3530 = vdwg.mxu0
    %3531 = vmatpush.bf16.msra.mxu0 %v3483
    %3532 = vmatpush.bf16.msra.mxu0 %v3479
    %3533 = vmatpush.bf16.msra.mxu0 %v3475
    %3534 = vmatpush.bf16.msra.mxu0 %v3471
    %3535 = vmatpush.bf16.msra.mxu0 %v3467
    %3536 = vmatpush.bf16.msra.mxu0 %v3463
    %3537 = vmatpush.bf16.msra.mxu0 %v3459
    %3538 = vmatpush.bf16.msra.mxu0 %v3455
    %3539 = vmatmul.bf16.gmra.mxu0 %v3325
    %v3540 = vpop.f32.mrf.mxu0
    %v3541 = vadd.f32 0.0, %v3540
    %v3542 = vpop.f32.mrf.mxu0
    %3543 = vdwg.mxu0
    %3544 = vmatpush.bf16.msra.mxu0 %v3484
    %3545 = vmatpush.bf16.msra.mxu0 %v3480
    %3546 = vmatpush.bf16.msra.mxu0 %v3476
    %3547 = vmatpush.bf16.msra.mxu0 %v3472
    %3548 = vmatpush.bf16.msra.mxu0 %v3468
    %3549 = vmatpush.bf16.msra.mxu0 %v3464
    %3550 = vmatpush.bf16.msra.mxu0 %v3460
    %3551 = vmatpush.bf16.msra.mxu0 %v3456
    %3552 = vmatmul.bf16.gmra.mxu0 %v3325
    %v3553 = vpop.f32.mrf.mxu0
    %v3554 = vadd.f32 0.0, %v3553
    %v3555 = vpop.f32.mrf.mxu0
    %3556 = vdwg.mxu0
    %3557 = vmatpush.bf16.msra.mxu0 %v3485
    %3558 = vmatpush.bf16.msra.mxu0 %v3481
    %3559 = vmatpush.bf16.msra.mxu0 %v3477
    %3560 = vmatpush.bf16.msra.mxu0 %v3473
    %3561 = vmatpush.bf16.msra.mxu0 %v3469
    %3562 = vmatpush.bf16.msra.mxu0 %v3465
    %3563 = vmatpush.bf16.msra.mxu0 %v3461
    %3564 = vmatpush.bf16.msra.mxu0 %v3457
    %3565 = vmatmul.bf16.gmra.mxu0 %v3325
    %v3566 = vpop.f32.mrf.mxu0
    %v3567 = vadd.f32 0.0, %v3566
    %v3568 = vpop.f32.mrf.mxu0
    %3569 = vdwg.mxu0
    %v3570 = vadd.f32 %v3321, %v3528
    %v3571 = vadd.f32 %v3322, %v3541
    %v3572 = vadd.f32 %v3323, %v3554
    %v3573 = vadd.f32 %v3324, %v3567
    %v3574 = vxor.u32 %v3570, 2147483648
    %v3575 = vmul.f32 %v3574, 1.442695
    %v3576 = vpow.pop %v3575
    %v3577 = vadd.f32 %v3576, 1.0
    %v3578 = vrcp.pop %v3577
    %v3579 = vmul.f32 %v3577, %v3578
    %v3580 = vsub.f32 1.0, %v3579
    %v3581 = vmul.f32 %v3578, %v3580
    %v3582 = vadd.f32 %v3578, %v3581
    %vm3583 = vweird.f32 %v3577
    %vm3584 = vweird.f32 %v3578
    %vm3585 = vmor %vm3583, %vm3584
    %v3586 = vsel %vm3585, %v3578, %v3582
    %v3587 = vand.u32 2147483647, %v3577
    %vm3588 = vcmp.eq.f32.partialorder %v3587, 8.507059e+37
    %v3589 = vand.u32 %v3577, 2147483648
    %v3590 = vor.u32 1.1754944e-38, %v3589
    %v3591 = vsel %vm3588, %v3590, %v3586
    %v3592 = vmul.f32 1.0, %v3591
    %v3593 = vxor.u32 %v3571, 2147483648
    %v3594 = vmul.f32 %v3593, 1.442695
    %v3595 = vpow.pop %v3594
    %v3596 = vadd.f32 %v3595, 1.0
    %v3597 = vrcp.pop %v3596
    %v3598 = vmul.f32 %v3596, %v3597
    %v3599 = vsub.f32 1.0, %v3598
    %v3600 = vmul.f32 %v3597, %v3599
    %v3601 = vadd.f32 %v3597, %v3600
    %vm3602 = vweird.f32 %v3596
    %vm3603 = vweird.f32 %v3597
    %vm3604 = vmor %vm3602, %vm3603
    %v3605 = vsel %vm3604, %v3597, %v3601
    %v3606 = vand.u32 2147483647, %v3596
    %vm3607 = vcmp.eq.f32.partialorder %v3606, 8.507059e+37
    %v3608 = vand.u32 %v3596, 2147483648
    %v3609 = vor.u32 1.1754944e-38, %v3608
    %v3610 = vsel %vm3607, %v3609, %v3605
    %v3611 = vmul.f32 1.0, %v3610
    %v3612 = vtanh.pop %v3572
    %v3613 = vxor.u32 %v3573, 2147483648
    %v3614 = vmul.f32 %v3613, 1.442695
    %v3615 = vpow.pop %v3614
    %v3616 = vadd.f32 %v3615, 1.0
    %v3617 = vrcp.pop %v3616
    %v3618 = vmul.f32 %v3616, %v3617
    %v3619 = vsub.f32 1.0, %v3618
    %v3620 = vmul.f32 %v3617, %v3619
    %v3621 = vadd.f32 %v3617, %v3620
    %vm3622 = vweird.f32 %v3616
    %vm3623 = vweird.f32 %v3617
    %vm3624 = vmor %vm3622, %vm3623
    %v3625 = vsel %vm3624, %v3617, %v3621
    %v3626 = vand.u32 2147483647, %v3616
    %vm3627 = vcmp.eq.f32.partialorder %v3626, 8.507059e+37
    %v3628 = vand.u32 %v3616, 2147483648
    %v3629 = vor.u32 1.1754944e-38, %v3628
    %v3630 = vsel %vm3627, %v3629, %v3625
    %v3631 = vmul.f32 1.0, %v3630
    %v3632 = vld [vmem:[#allocation4] sm:$0xff]
    %v3633 = vmul.f32 %v3611, %v3632
    %v3634 = vmul.f32 %v3592, %v3612
    %v3635 = vadd.f32 %v3633, %v3634
    %3636 = vst [vmem:[#allocation4] sm:$0xff] %v3635
    %v3637 = vtanh.pop %v3635
    %v3638 = vmul.f32 %v3631, %v3637
    %v3639 = vpack.c.bf16 %v3638, %v3638
    %3640 = vst [vmem:[#allocation3] sm:$0xf] %v3639
    %v3641 = vld [vmem:[%s2348] sm:$0xff]
    %v3642 = vld [vmem:[%s2348 + $0x8] sm:$0xff]
    %v3643 = vunpack.c.l.bf16 %v3641
    %v3644 = vunpack.c.h.bf16 %v3641
    %v3645 = vunpack.c.l.bf16 %v3642
    %v3646 = vunpack.c.h.bf16 %v3642
    %v3647 = vld [vmem:[#allocation3] sm:$0xf]
    %v3648 = vld [vmem:[%s6] sm:$0xff]
    %v3649 = vld [vmem:[%s6 + $0x8] sm:$0xff]
    %v3650 = vld [vmem:[%s6 + $0x10] sm:$0xff]
    %v3651 = vld [vmem:[%s6 + $0x18] sm:$0xff]
    %v3652 = vld [vmem:[%s6 + $0x20] sm:$0xff]
    %v3653 = vld [vmem:[%s6 + $0x28] sm:$0xff]
    %v3654 = vld [vmem:[%s6 + $0x30] sm:$0xff]
    %v3655 = vld [vmem:[%s6 + $0x38] sm:$0xff]
    %v3656 = vld [vmem:[%s6 + $0x40] sm:$0xff]
    %v3657 = vld [vmem:[%s6 + $0x48] sm:$0xff]
    %v3658 = vld [vmem:[%s6 + $0x50] sm:$0xff]
    %v3659 = vld [vmem:[%s6 + $0x58] sm:$0xff]
    %v3660 = vld [vmem:[%s6 + $0x60] sm:$0xff]
    %v3661 = vld [vmem:[%s6 + $0x68] sm:$0xff]
    %v3662 = vld [vmem:[%s6 + $0x70] sm:$0xff]
    %v3663 = vld [vmem:[%s6 + $0x78] sm:$0xff]
    %v3664 = vld [vmem:[%s6 + $0x80] sm:$0xff]
    %v3665 = vld [vmem:[%s6 + $0x88] sm:$0xff]
    %v3666 = vld [vmem:[%s6 + $0x90] sm:$0xff]
    %v3667 = vld [vmem:[%s6 + $0x98] sm:$0xff]
    %v3668 = vld [vmem:[%s6 + $0xa0] sm:$0xff]
    %v3669 = vld [vmem:[%s6 + $0xa8] sm:$0xff]
    %v3670 = vld [vmem:[%s6 + $0xb0] sm:$0xff]
    %v3671 = vld [vmem:[%s6 + $0xb8] sm:$0xff]
    %v3672 = vld [vmem:[%s6 + $0xc0] sm:$0xff]
    %v3673 = vld [vmem:[%s6 + $0xc8] sm:$0xff]
    %v3674 = vld [vmem:[%s6 + $0xd0] sm:$0xff]
    %v3675 = vld [vmem:[%s6 + $0xd8] sm:$0xff]
    %v3676 = vld [vmem:[%s6 + $0xe0] sm:$0xff]
    %v3677 = vld [vmem:[%s6 + $0xe8] sm:$0xff]
    %v3678 = vld [vmem:[%s6 + $0xf0] sm:$0xff]
    %v3679 = vld [vmem:[%s6 + $0xf8] sm:$0xff]
    %v3712 = vunpack.c.l.b16 %v3648
    %v3713 = vunpack.c.h.b16 %v3648
    %v3714 = vunpack.c.l.b16 %v3649
    %v3715 = vunpack.c.h.b16 %v3649
    %v3716 = vunpack.c.l.b16 %v3650
    %v3717 = vunpack.c.h.b16 %v3650
    %v3718 = vunpack.c.l.b16 %v3651
    %v3719 = vunpack.c.h.b16 %v3651
    %v3720 = vunpack.c.l.b16 %v3652
    %v3721 = vunpack.c.h.b16 %v3652
    %v3722 = vunpack.c.l.b16 %v3653
    %v3723 = vunpack.c.h.b16 %v3653
    %v3724 = vunpack.c.l.b16 %v3654
    %v3725 = vunpack.c.h.b16 %v3654
    %v3726 = vunpack.c.l.b16 %v3655
    %v3727 = vunpack.c.h.b16 %v3655
    %v3728 = vunpack.c.l.b16 %v3656
    %v3729 = vunpack.c.h.b16 %v3656
    %v3730 = vunpack.c.l.b16 %v3657
    %v3731 = vunpack.c.h.b16 %v3657
    %v3732 = vunpack.c.l.b16 %v3658
    %v3733 = vunpack.c.h.b16 %v3658
    %v3734 = vunpack.c.l.b16 %v3659
    %v3735 = vunpack.c.h.b16 %v3659
    %v3736 = vunpack.c.l.b16 %v3660
    %v3737 = vunpack.c.h.b16 %v3660
    %v3738 = vunpack.c.l.b16 %v3661
    %v3739 = vunpack.c.h.b16 %v3661
    %v3740 = vunpack.c.l.b16 %v3662
    %v3741 = vunpack.c.h.b16 %v3662
    %v3742 = vunpack.c.l.b16 %v3663
    %v3743 = vunpack.c.h.b16 %v3663
    %v3744 = vunpack.c.l.b16 %v3664
    %v3745 = vunpack.c.h.b16 %v3664
    %v3746 = vunpack.c.l.b16 %v3665
    %v3747 = vunpack.c.h.b16 %v3665
    %v3748 = vunpack.c.l.b16 %v3666
    %v3749 = vunpack.c.h.b16 %v3666
    %v3750 = vunpack.c.l.b16 %v3667
    %v3751 = vunpack.c.h.b16 %v3667
    %v3752 = vunpack.c.l.b16 %v3668
    %v3753 = vunpack.c.h.b16 %v3668
    %v3754 = vunpack.c.l.b16 %v3669
    %v3755 = vunpack.c.h.b16 %v3669
    %v3756 = vunpack.c.l.b16 %v3670
    %v3757 = vunpack.c.h.b16 %v3670
    %v3758 = vunpack.c.l.b16 %v3671
    %v3759 = vunpack.c.h.b16 %v3671
    %v3760 = vunpack.c.l.b16 %v3672
    %v3761 = vunpack.c.h.b16 %v3672
    %v3762 = vunpack.c.l.b16 %v3673
    %v3763 = vunpack.c.h.b16 %v3673
    %v3764 = vunpack.c.l.b16 %v3674
    %v3765 = vunpack.c.h.b16 %v3674
    %v3766 = vunpack.c.l.b16 %v3675
    %v3767 = vunpack.c.h.b16 %v3675
    %v3768 = vunpack.c.l.b16 %v3676
    %v3769 = vunpack.c.h.b16 %v3676
    %v3770 = vunpack.c.l.b16 %v3677
    %v3771 = vunpack.c.h.b16 %v3677
    %v3772 = vunpack.c.l.b16 %v3678
    %v3773 = vunpack.c.h.b16 %v3678
    %v3774 = vunpack.c.l.b16 %v3679
    %v3775 = vunpack.c.h.b16 %v3679
    %v3776 = vpack.c.b16 %v3716, %v3712
    %v3777 = vpack.c.b16 %v3717, %v3713
    %v3778 = vpack.c.b16 %v3718, %v3714
    %v3779 = vpack.c.b16 %v3719, %v3715
    %v3780 = vpack.c.b16 %v3724, %v3720
    %v3781 = vpack.c.b16 %v3725, %v3721
    %v3782 = vpack.c.b16 %v3726, %v3722
    %v3783 = vpack.c.b16 %v3727, %v3723
    %v3784 = vpack.c.b16 %v3732, %v3728
    %v3785 = vpack.c.b16 %v3733, %v3729
    %v3786 = vpack.c.b16 %v3734, %v3730
    %v3787 = vpack.c.b16 %v3735, %v3731
    %v3788 = vpack.c.b16 %v3740, %v3736
    %v3789 = vpack.c.b16 %v3741, %v3737
    %v3790 = vpack.c.b16 %v3742, %v3738
    %v3791 = vpack.c.b16 %v3743, %v3739
    %v3792 = vpack.c.b16 %v3748, %v3744
    %v3793 = vpack.c.b16 %v3749, %v3745
    %v3794 = vpack.c.b16 %v3750, %v3746
    %v3795 = vpack.c.b16 %v3751, %v3747
    %v3796 = vpack.c.b16 %v3756, %v3752
    %v3797 = vpack.c.b16 %v3757, %v3753
    %v3798 = vpack.c.b16 %v3758, %v3754
    %v3799 = vpack.c.b16 %v3759, %v3755
    %v3800 = vpack.c.b16 %v3764, %v3760
    %v3801 = vpack.c.b16 %v3765, %v3761
    %v3802 = vpack.c.b16 %v3766, %v3762
    %v3803 = vpack.c.b16 %v3767, %v3763
    %v3804 = vpack.c.b16 %v3772, %v3768
    %v3805 = vpack.c.b16 %v3773, %v3769
    %v3806 = vpack.c.b16 %v3774, %v3770
    %v3807 = vpack.c.b16 %v3775, %v3771
    %3840 = vmatpush.bf16.msra.mxu0 %v3804
    %3841 = vmatpush.bf16.msra.mxu0 %v3800
    %3842 = vmatpush.bf16.msra.mxu0 %v3796
    %3843 = vmatpush.bf16.msra.mxu0 %v3792
    %3844 = vmatpush.bf16.msra.mxu0 %v3788
    %3845 = vmatpush.bf16.msra.mxu0 %v3784
    %3846 = vmatpush.bf16.msra.mxu0 %v3780
    %3847 = vmatpush.bf16.msra.mxu0 %v3776
    %3848 = vmatmul.bf16.gmra.mxu0 %v3647
    %v3849 = vpop.f32.mrf.mxu0
    %v3850 = vadd.f32 0.0, %v3849
    %v3851 = vpop.f32.mrf.mxu0
    %3852 = vdwg.mxu0
    %3853 = vmatpush.bf16.msra.mxu0 %v3805
    %3854 = vmatpush.bf16.msra.mxu0 %v3801
    %3855 = vmatpush.bf16.msra.mxu0 %v3797
    %3856 = vmatpush.bf16.msra.mxu0 %v3793
    %3857 = vmatpush.bf16.msra.mxu0 %v3789
    %3858 = vmatpush.bf16.msra.mxu0 %v3785
    %3859 = vmatpush.bf16.msra.mxu0 %v3781
    %3860 = vmatpush.bf16.msra.mxu0 %v3777
    %3861 = vmatmul.bf16.gmra.mxu0 %v3647
    %v3862 = vpop.f32.mrf.mxu0
    %v3863 = vadd.f32 0.0, %v3862
    %v3864 = vpop.f32.mrf.mxu0
    %3865 = vdwg.mxu0
    %3866 = vmatpush.bf16.msra.mxu0 %v3806
    %3867 = vmatpush.bf16.msra.mxu0 %v3802
    %3868 = vmatpush.bf16.msra.mxu0 %v3798
    %3869 = vmatpush.bf16.msra.mxu0 %v3794
    %3870 = vmatpush.bf16.msra.mxu0 %v3790
    %3871 = vmatpush.bf16.msra.mxu0 %v3786
    %3872 = vmatpush.bf16.msra.mxu0 %v3782
    %3873 = vmatpush.bf16.msra.mxu0 %v3778
    %3874 = vmatmul.bf16.gmra.mxu0 %v3647
    %v3875 = vpop.f32.mrf.mxu0
    %v3876 = vadd.f32 0.0, %v3875
    %v3877 = vpop.f32.mrf.mxu0
    %3878 = vdwg.mxu0
    %3879 = vmatpush.bf16.msra.mxu0 %v3807
    %3880 = vmatpush.bf16.msra.mxu0 %v3803
    %3881 = vmatpush.bf16.msra.mxu0 %v3799
    %3882 = vmatpush.bf16.msra.mxu0 %v3795
    %3883 = vmatpush.bf16.msra.mxu0 %v3791
    %3884 = vmatpush.bf16.msra.mxu0 %v3787
    %3885 = vmatpush.bf16.msra.mxu0 %v3783
    %3886 = vmatpush.bf16.msra.mxu0 %v3779
    %3887 = vmatmul.bf16.gmra.mxu0 %v3647
    %v3888 = vpop.f32.mrf.mxu0
    %v3889 = vadd.f32 0.0, %v3888
    %v3890 = vpop.f32.mrf.mxu0
    %3891 = vdwg.mxu0
    %v3892 = vadd.f32 %v3643, %v3850
    %v3893 = vadd.f32 %v3644, %v3863
    %v3894 = vadd.f32 %v3645, %v3876
    %v3895 = vadd.f32 %v3646, %v3889
    %v3896 = vxor.u32 %v3892, 2147483648
    %v3897 = vmul.f32 %v3896, 1.442695
    %v3898 = vpow.pop %v3897
    %v3899 = vadd.f32 %v3898, 1.0
    %v3900 = vrcp.pop %v3899
    %v3901 = vmul.f32 %v3899, %v3900
    %v3902 = vsub.f32 1.0, %v3901
    %v3903 = vmul.f32 %v3900, %v3902
    %v3904 = vadd.f32 %v3900, %v3903
    %vm3905 = vweird.f32 %v3899
    %vm3906 = vweird.f32 %v3900
    %vm3907 = vmor %vm3905, %vm3906
    %v3908 = vsel %vm3907, %v3900, %v3904
    %v3909 = vand.u32 2147483647, %v3899
    %vm3910 = vcmp.eq.f32.partialorder %v3909, 8.507059e+37
    %v3911 = vand.u32 %v3899, 2147483648
    %v3912 = vor.u32 1.1754944e-38, %v3911
    %v3913 = vsel %vm3910, %v3912, %v3908
    %v3914 = vmul.f32 1.0, %v3913
    %v3915 = vxor.u32 %v3893, 2147483648
    %v3916 = vmul.f32 %v3915, 1.442695
    %v3917 = vpow.pop %v3916
    %v3918 = vadd.f32 %v3917, 1.0
    %v3919 = vrcp.pop %v3918
    %v3920 = vmul.f32 %v3918, %v3919
    %v3921 = vsub.f32 1.0, %v3920
    %v3922 = vmul.f32 %v3919, %v3921
    %v3923 = vadd.f32 %v3919, %v3922
    %vm3924 = vweird.f32 %v3918
    %vm3925 = vweird.f32 %v3919
    %vm3926 = vmor %vm3924, %vm3925
    %v3927 = vsel %vm3926, %v3919, %v3923
    %v3928 = vand.u32 2147483647, %v3918
    %vm3929 = vcmp.eq.f32.partialorder %v3928, 8.507059e+37
    %v3930 = vand.u32 %v3918, 2147483648
    %v3931 = vor.u32 1.1754944e-38, %v3930
    %v3932 = vsel %vm3929, %v3931, %v3927
    %v3933 = vmul.f32 1.0, %v3932
    %v3934 = vtanh.pop %v3894
    %v3935 = vxor.u32 %v3895, 2147483648
    %v3936 = vmul.f32 %v3935, 1.442695
    %v3937 = vpow.pop %v3936
    %v3938 = vadd.f32 %v3937, 1.0
    %v3939 = vrcp.pop %v3938
    %v3940 = vmul.f32 %v3938, %v3939
    %v3941 = vsub.f32 1.0, %v3940
    %v3942 = vmul.f32 %v3939, %v3941
    %v3943 = vadd.f32 %v3939, %v3942
    %vm3944 = vweird.f32 %v3938
    %vm3945 = vweird.f32 %v3939
    %vm3946 = vmor %vm3944, %vm3945
    %v3947 = vsel %vm3946, %v3939, %v3943
    %v3948 = vand.u32 2147483647, %v3938
    %vm3949 = vcmp.eq.f32.partialorder %v3948, 8.507059e+37
    %v3950 = vand.u32 %v3938, 2147483648
    %v3951 = vor.u32 1.1754944e-38, %v3950
    %v3952 = vsel %vm3949, %v3951, %v3947
    %v3953 = vmul.f32 1.0, %v3952
    %v3954 = vld [vmem:[#allocation4] sm:$0xff]
    %v3955 = vmul.f32 %v3933, %v3954
    %v3956 = vmul.f32 %v3914, %v3934
    %v3957 = vadd.f32 %v3955, %v3956
    %3958 = vst [vmem:[#allocation4] sm:$0xff] %v3957
    %v3959 = vtanh.pop %v3957
    %v3960 = vmul.f32 %v3953, %v3959
    %v3961 = vpack.c.bf16 %v3960, %v3960
    %3962 = vst [vmem:[#allocation3] sm:$0xf] %v3961
    %v3963 = vld [vmem:[#allocation3] sm:$0xf]
    %v3964 = vld [vmem:[%s2] sm:$0x1]
    %v3965 = vlaneseq
    %v3966 = vshrl.u32 %v3965, 7
    %v3967 = vadd.s32 %v3966, 8
    %v3968 = vstv 0
    %v3969 = vadd.s32 %v3966, %v3968
    %v3970 = vadd.s32 %v3967, %v3968
    %v3971 = vperm.slane %v3964, 0
    %vm3972 = vcmp.eq.s32.totalorder %v3969, %v3971
    %vm3973 = vcmp.eq.s32.totalorder %v3970, %v3971
    %v3974 = vsel %vm3972, 1, 0
    %v3975 = vsel %vm3973, 1, 0
    %v3976 = vcvt.s32.f32 %v3974
    %v3977 = vcvt.s32.f32 %v3975
    %v3978 = vpack.c.bf16 %v3977, %v3976
    %v3979 = vld [vmem:[#allocation5] sm:$0xff]
    %v3980 = vld [vmem:[#allocation5 + $0x8] sm:$0xff]
    %vm3981 = vcmask 64512
    %v3983 = vsel %vm3981, %v3978, 0
    %vm3985 = vcmask 1043456
    %v3987 = vsel %vm3985, %v3963, 0
    %3989 = vmatpush.bf16.msra.mxu0 0
    %3990 = vmatpush.bf16.msra.mxu0 0
    %3991 = vmatpush.bf16.msra.mxu0 0
    %3992 = vmatpush.bf16.msra.mxu0 0
    %3993 = vmatpush.bf16.msra.mxu0 0
    %3994 = vmatpush.bf16.msra.mxu0 0
    %3995 = vmatpush.bf16.msra.mxu0 0
    %3996 = vmatpush.bf16.msra.mxu0 %v3987
    %3997 = vmatmul.bf16.gmra.mxu0 %v3983
    %v3998 = vpop.f32.mrf.mxu0
    %v3999 = vadd.f32 0.0, %v3998
    %v4000 = vpop.f32.mrf.mxu0
    %v4001 = vadd.f32 0.0, %v4000
    %4002 = vdwg.mxu0
    %v4003 = vadd.f32 %v3979, %v3999
    %v4004 = vadd.f32 %v3980, %v4001
    %4005 = vst [vmem:[#allocation5] sm:$0xff] %v4003
    %4006 = vst [vmem:[#allocation5 + $0x8] sm:$0xff] %v4004
    // Predicated region
    $region54: #{edge_path_conv_forward.1} parent=1 // pred_check
      %p4007 = pneg %p43
    $region55: #{edge_path_conv_forward.1} parent=1 // pred_check_branch
      %4009 = sbr.rel (%p4007) target = $region57
    $region56: #{edge_path_conv_forward.1} parent=1 // pred_region
      %v4010 = vld [vmem:[%s3] sm:$0xff]
      %v4011 = vld [vmem:[%s3 + $0x8] sm:$0xff]
      %v4012 = vld [vmem:[#allocation5] sm:$0xff]
      %v4013 = vld [vmem:[#allocation5 + $0x8] sm:$0xff]
      %v4014 = vadd.f32 %v4010, %v4012
      %v4015 = vadd.f32 %v4011, %v4013
      %v4016 = vpack.c.bf16 %v4015, %v4014
      %v4017 = vld [vmem:[%s8] sm:$0xf]
      %v4018 = vld [vmem:[%s8 + $0x4] sm:$0xf]
      %v4019 = vld [vmem:[%s8 + $0x8] sm:$0xf]
      %v4020 = vld [vmem:[%s8 + $0xc] sm:$0xf]
      %v4021 = vld [vmem:[%s8 + $0x10] sm:$0xf]
      %v4022 = vld [vmem:[%s8 + $0x14] sm:$0xf]
      %v4023 = vld [vmem:[%s8 + $0x18] sm:$0xf]
      %v4024 = vld [vmem:[%s8 + $0x1c] sm:$0xf]
      %v4025 = vld [vmem:[%s8 + $0x20] sm:$0xf]
      %v4026 = vld [vmem:[%s8 + $0x24] sm:$0xf]
      %v4027 = vld [vmem:[%s8 + $0x28] sm:$0xf]
      %v4028 = vld [vmem:[%s8 + $0x2c] sm:$0xf]
      %v4029 = vld [vmem:[%s8 + $0x30] sm:$0xf]
      %v4030 = vld [vmem:[%s8 + $0x34] sm:$0xf]
      %v4031 = vld [vmem:[%s8 + $0x38] sm:$0xf]
      %v4032 = vld [vmem:[%s8 + $0x3c] sm:$0xf]
      %v4033 = vld [vmem:[%s9] sm:$0x1]
      %v4035 = vperm.slane %v4033, 0
      %v4053 = vunpack.c.l.b16 %v4017
      %v4054 = vunpack.c.l.b16 %v4018
      %v4055 = vunpack.c.l.b16 %v4019
      %v4056 = vunpack.c.l.b16 %v4020
      %v4057 = vunpack.c.l.b16 %v4021
      %v4058 = vunpack.c.l.b16 %v4022
      %v4059 = vunpack.c.l.b16 %v4023
      %v4060 = vunpack.c.l.b16 %v4024
      %v4061 = vunpack.c.l.b16 %v4025
      %v4062 = vunpack.c.l.b16 %v4026
      %v4063 = vunpack.c.l.b16 %v4027
      %v4064 = vunpack.c.l.b16 %v4028
      %v4065 = vunpack.c.l.b16 %v4029
      %v4066 = vunpack.c.l.b16 %v4030
      %v4067 = vunpack.c.l.b16 %v4031
      %v4068 = vunpack.c.l.b16 %v4032
      %v4069 = vpack.c.b16 %v4054, %v4053
      %v4070 = vpack.c.b16 %v4056, %v4055
      %v4071 = vpack.c.b16 %v4058, %v4057
      %v4072 = vpack.c.b16 %v4060, %v4059
      %v4073 = vpack.c.b16 %v4062, %v4061
      %v4074 = vpack.c.b16 %v4064, %v4063
      %v4075 = vpack.c.b16 %v4066, %v4065
      %v4076 = vpack.c.b16 %v4068, %v4067
      %4085 = vmatpush.bf16.msra.mxu0 %v4076
      %4086 = vmatpush.bf16.msra.mxu0 %v4075
      %4087 = vmatpush.bf16.msra.mxu0 %v4074
      %4088 = vmatpush.bf16.msra.mxu0 %v4073
      %4089 = vmatpush.bf16.msra.mxu0 %v4072
      %4090 = vmatpush.bf16.msra.mxu0 %v4071
      %4091 = vmatpush.bf16.msra.mxu0 %v4070
      %4092 = vmatpush.bf16.msra.mxu0 %v4069
      %4093 = vmatmul.bf16.gmra.mxu0 %v4016
      %v4094 = vpop.f32.mrf.mxu0
      %v4095 = vadd.f32 %v4035, %v4094
      %v4096 = vpop.f32.mrf.mxu0
      %v4097 = vadd.f32 %v4035, %v4096
      %4098 = vdwg.mxu0
      %v4099 = vmax.f32 %v4095, 0.0
      %v4100 = vmax.f32 %v4097, 0.0
      %v4101 = vpack.c.bf16 %v4100, %v4099
      %v4102 = vld [vmem:[%s10] sm:$0xf]
      %v4103 = vld [vmem:[%s10 + $0x4] sm:$0xf]
      %v4104 = vld [vmem:[%s10 + $0x8] sm:$0xf]
      %v4105 = vld [vmem:[%s10 + $0xc] sm:$0xf]
      %v4106 = vld [vmem:[%s10 + $0x10] sm:$0xf]
      %v4107 = vld [vmem:[%s10 + $0x14] sm:$0xf]
      %v4108 = vld [vmem:[%s10 + $0x18] sm:$0xf]
      %v4109 = vld [vmem:[%s10 + $0x1c] sm:$0xf]
      %v4110 = vld [vmem:[%s10 + $0x20] sm:$0xf]
      %v4111 = vld [vmem:[%s10 + $0x24] sm:$0xf]
      %v4112 = vld [vmem:[%s10 + $0x28] sm:$0xf]
      %v4113 = vld [vmem:[%s10 + $0x2c] sm:$0xf]
      %v4114 = vld [vmem:[%s10 + $0x30] sm:$0xf]
      %v4115 = vld [vmem:[%s10 + $0x34] sm:$0xf]
      %v4116 = vld [vmem:[%s10 + $0x38] sm:$0xf]
      %v4117 = vld [vmem:[%s10 + $0x3c] sm:$0xf]
      %v4118 = vld [vmem:[%s11] sm:$0x1]
      %v4120 = vperm.slane %v4118, 0
      %v4138 = vunpack.c.l.b16 %v4102
      %v4139 = vunpack.c.l.b16 %v4103
      %v4140 = vunpack.c.l.b16 %v4104
      %v4141 = vunpack.c.l.b16 %v4105
      %v4142 = vunpack.c.l.b16 %v4106
      %v4143 = vunpack.c.l.b16 %v4107
      %v4144 = vunpack.c.l.b16 %v4108
      %v4145 = vunpack.c.l.b16 %v4109
      %v4146 = vunpack.c.l.b16 %v4110
      %v4147 = vunpack.c.l.b16 %v4111
      %v4148 = vunpack.c.l.b16 %v4112
      %v4149 = vunpack.c.l.b16 %v4113
      %v4150 = vunpack.c.l.b16 %v4114
      %v4151 = vunpack.c.l.b16 %v4115
      %v4152 = vunpack.c.l.b16 %v4116
      %v4153 = vunpack.c.l.b16 %v4117
      %v4154 = vpack.c.b16 %v4139, %v4138
      %v4155 = vpack.c.b16 %v4141, %v4140
      %v4156 = vpack.c.b16 %v4143, %v4142
      %v4157 = vpack.c.b16 %v4145, %v4144
      %v4158 = vpack.c.b16 %v4147, %v4146
      %v4159 = vpack.c.b16 %v4149, %v4148
      %v4160 = vpack.c.b16 %v4151, %v4150
      %v4161 = vpack.c.b16 %v4153, %v4152
      %4170 = vmatpush.bf16.msra.mxu0 %v4161
      %4171 = vmatpush.bf16.msra.mxu0 %v4160
      %4172 = vmatpush.bf16.msra.mxu0 %v4159
      %4173 = vmatpush.bf16.msra.mxu0 %v4158
      %4174 = vmatpush.bf16.msra.mxu0 %v4157
      %4175 = vmatpush.bf16.msra.mxu0 %v4156
      %4176 = vmatpush.bf16.msra.mxu0 %v4155
      %4177 = vmatpush.bf16.msra.mxu0 %v4154
      %4178 = vmatmul.bf16.gmra.mxu0 %v4101
      %v4179 = vpop.f32.mrf.mxu0
      %v4180 = vadd.f32 %v4120, %v4179
      %v4181 = vpop.f32.mrf.mxu0
      %v4182 = vadd.f32 %v4120, %v4181
      %4183 = vdwg.mxu0
      %4184 = vst [vmem:[#allocation5] sm:$0xff] %v4180
      %4185 = vst [vmem:[#allocation5 + $0x8] sm:$0xff] %v4182
    $region57: #{edge_path_conv_forward.1} parent=1 // pred_fallthru
      _
    // Predicated region
    $region58: #{edge_path_conv_forward.1} parent=1 // pred_check
      _
    $region59: #{edge_path_conv_forward.1} parent=1 // pred_check_branch
      %4187 = sbr.rel (0) target = $region61
    $region60: #{edge_path_conv_forward.1} parent=1 // pred_region
      %4189 = vsyncadd [#allocation6], 0
      %s4190 = sshll.u32 [#allocation5], 4
      %s4191 = int_to_ptr.vmem [resolvable:$true] %s4190
      %s4192 = sshll.u32 %s12, 4
      %s4193 = int_to_ptr.hbm [resolvable:$true] %s4192
      %4198 = dma.vmem_to_hbm [thread:$0]  %s4191, 256, %s4193, [#allocation6], 128, 128, 8
    $region61: #{edge_path_conv_forward.1} parent=1 // pred_fallthru
      _
    // Predicated region
    $region62: #{edge_path_conv_forward.1} parent=1 // pred_check
      _
    $region63: #{edge_path_conv_forward.1} parent=1 // pred_check_branch
      %4200 = sbr.rel (0) target = $region65
    $region64: #{edge_path_conv_forward.1} parent=1 // pred_region
      %4202 = dma.done [#allocation6], 256
    $region65: #{edge_path_conv_forward.1} parent=1 // pred_fallthru
      _
    %4203 = vsyncpa [#allocation6], 1

</llo_original>
